<compile_context>
chip_gen: v7x
topology: tpu7x:2x2x1
jax: 0.10.0
libtpu: 0.0.40
codegen_flags: <defaults>
</compile_context>

<pallas_src>
import functools
import math

import jax
import jax.numpy as jnp
from jax.experimental import pallas as pl
from jax.experimental.pallas import tpu as pltpu

_FRAC_BITS = 24
_FRAC_SCALE = float(1 << _FRAC_BITS)


def _round_up(x, m):
    return ((x + m - 1) // m) * m


def _cdiv(a, b):
    return (a + b - 1) // b


def _interp_table(in_size, out_size):
    """1-D bilinear taps matching F.interpolate(mode='bilinear', align_corners=False)."""
    scale = in_size / out_size
    src = (jnp.arange(out_size, dtype=jnp.float32) + 0.5) * scale - 0.5
    src = jnp.maximum(src, 0.0)
    lo = jnp.minimum(jnp.floor(src), in_size - 1).astype(jnp.int32)
    hi = jnp.minimum(lo + 1, in_size - 1)
    fr = src - lo.astype(jnp.float32)          # weight of `hi`
    return lo, hi, fr


def _to_rgb_kernel(row_lo_ref, row_hi_ref, row_fr_ref,      # scalar-prefetch (SMEM)
                   x_ref, m0_ref, awt_ref, wconv_ref, brgb_ref,
                   o_ref, *, mxu_dtype):
    # x_ref:    (C_in, tile_r, W)   input rows, W on lanes
    # m0_ref:   (Hs, C_in, Ws)      low-res per-pixel modulation (already *Wmod + b)
    # awt_ref:  (Ws, W)             column interpolation matrix (transposed)
    # wconv_ref:(C_out, C_in)       1x1 conv weight * scale
    # brgb_ref: (C_out, 1)          ToRGB bias (f32)
    # o_ref:    (C_out, tile_r, W)
    C_in, tile_r, W = x_ref.shape
    Hs, _, Ws = m0_ref.shape
    C_out = wconv_ref.shape[0]

    vpu_interp = Ws <= 16      # tiny contraction: unrolled VPU FMAs beat a padded MXU tile
    vpu_conv = C_in <= 16

    awt_f = awt_ref[...].astype(jnp.float32 if vpu_interp else mxu_dtype)
    wconv_f = wconv_ref[...].astype(jnp.float32 if vpu_conv else mxu_dtype)
    brgb = brgb_ref[...].astype(jnp.float32)                     # (C_out, 1)
    if vpu_conv:
        brgb_b = jnp.broadcast_to(brgb, (C_out, W))              # hoisted (no per-row bcast)

    row0 = pl.program_id(1) * tile_r

    for r in range(tile_r):                                      # statically unrolled
        g = row0 + r
        h0 = row_lo_ref[g]
        h1 = row_hi_ref[g]
        f = row_fr_ref[g].astype(jnp.float32) * (1.0 / _FRAC_SCALE)

        # --- bilinear row lerp on the low-res modulation map (2 taps, f32).
        m_lo = m0_ref[h0].astype(jnp.float32)                    # (C_in, Ws)
        m_hi = m0_ref[h1].astype(jnp.float32)
        m_row = m_lo + f * (m_hi - m_lo)

        # --- bilinear column interpolation Ws -> W.
        if vpu_interp:
            mod = m_row[:, 0:1] * awt_f[0:1, :]
            for c in range(1, Ws):
                mod = mod + m_row[:, c:c + 1] * awt_f[c:c + 1, :]
        else:
            mod = jnp.dot(m_row.astype(mxu_dtype), awt_f,
                          preferred_element_type=jnp.float32)    # (C_in, W)

        # --- modulate + 1x1 conv + bias (f32 elementwise, f32 accumulation).
        xm = x_ref[:, r, :].astype(jnp.float32) * mod            # (C_in, W)
        if vpu_conv:
            out = brgb_b
            for ci in range(C_in):
                out = out + wconv_f[:, ci:ci + 1] * xm[ci:ci + 1, :]
        else:
            out = jnp.dot(wconv_f, xm.astype(mxu_dtype),
                          preferred_element_type=jnp.float32) + brgb

        o_ref[:, r, :] = out.astype(o_ref.dtype)


def spatial_to_rgb(input_nchw, style_nchw, params, *, lr_mul=1.0,
                   mxu_dtype=jnp.float32, out_dtype=None,
                   block_target_bytes=4 << 20):
    """SpatialToRGB.forward(input, style, skip=None).

    input_nchw: (B, C_in, H, W);  style_nchw: (B, style_dim, Hs, Ws)
    mxu_dtype:  dtype of in-kernel matmul operands (use bf16 on v5e/v6e/v7x for
                speed at a looser error bound; accumulation stays f32).
    """
    B, C_in, H, W = input_nchw.shape
    assert H == W, "SpatialModulatedConv2d requires square input"
    style_dim, Hs, Ws = style_nchw.shape[1:]
    out_dtype = input_nchw.dtype if out_dtype is None else out_dtype

    w_conv = params["conv_weight"]            # (1, C_out, C_in, 1, 1)
    w_mod = params["mod_weight"]              # (C_in, style_dim)
    b_mod = params["mod_bias"]                # (C_in,)
    b_rgb = params["bias"]                    # (1, C_out, 1, 1)
    C_out = w_conv.shape[1]

    # Fold EqualLinear / 1x1-conv scales into the weights (lr_mul exposed).
    wmod = (w_mod * (lr_mul / math.sqrt(style_dim))).astype(jnp.float32)
    bmod = (b_mod * lr_mul).astype(jnp.float32)
    wconv = (w_conv[0, :, :, 0, 0] / math.sqrt(C_in)).astype(jnp.float32)   # (C_out, C_in)
    brgb = b_rgb.reshape(C_out, 1).astype(jnp.float32)

    # Modulation commutes with bilinear resize (both linear, interp weights sum
    # to 1): apply EqualLinear at the LOW style resolution (tiny einsum), then
    # the kernel resizes the modulation map in VMEM. (B, Hs, C_in, Ws)
    m0 = jnp.einsum("cs,bshw->bhcw", wmod, style_nchw.astype(jnp.float32),
                    precision=jax.lax.Precision.HIGHEST)
    m0 = m0 + bmod[None, None, :, None]

    # 1-D bilinear taps: rows -> 2-tap scalar-prefetch tables, cols -> dense (Ws, W).
    r_lo, r_hi, r_fr = _interp_table(Hs, H)
    c_lo, c_hi, c_fr = _interp_table(Ws, W)
    awt = (jax.nn.one_hot(c_lo, Ws, dtype=jnp.float32) * (1.0 - c_fr)[:, None]
           + jax.nn.one_hot(c_hi, Ws, dtype=jnp.float32) * c_fr[:, None]).T  # (Ws, W)

    # Row tiling: multiple of 8 (or full H); ~block_target_bytes of x per
    # pipeline buffer; capped at 32 rows (bounds the unrolled loop); >=2 grid
    # programs when B == 1 so v7x megacore uses both TensorCores.
    itemsize = jnp.dtype(input_nchw.dtype).itemsize
    if H <= 8:
        tile_r = H
    else:
        cap = max(8, (block_target_bytes // max(1, C_in * W * itemsize)) // 8 * 8)
        tile_r = min(_round_up(H, 8), cap, 32)
        if B == 1:
            while tile_r > 8 and _cdiv(H, tile_r) < 2:
                tile_r -= 8
        if tile_r >= H:
            tile_r = H
    num_row_tiles = _cdiv(H, tile_r)

    # Pad only the tiny row-tap tables up to the padded row count so a partial
    # tail tile never produces wild indices; x / out are NOT padded or sliced.
    h_pad = num_row_tiles * tile_r
    row_fr_i = jnp.round(r_fr * _FRAC_SCALE).astype(jnp.int32)
    if h_pad != H:
        pad = (0, h_pad - H)
        r_lo = jnp.pad(r_lo, pad)
        r_hi = jnp.pad(r_hi, pad)
        row_fr_i = jnp.pad(row_fr_i, pad)

    # VMEM budget: double-buffered x/out/m0 blocks + constants; <= 48 MiB (v7x headroom).
    x_blk = C_in * tile_r * W * itemsize
    o_blk = C_out * tile_r * W * jnp.dtype(out_dtype).itemsize
    m_blk = Hs * C_in * Ws * 4
    small = (Ws * W + C_out * C_in + C_out) * 4
    vmem_limit = int(min(48 << 20,
                         max(8 << 20, 2 * (2 * (x_blk + o_blk + m_blk) + small))))

    kernel = functools.partial(_to_rgb_kernel, mxu_dtype=mxu_dtype)
    out = pl.pallas_call(
        kernel,
        out_shape=jax.ShapeDtypeStruct((B, C_out, H, W), out_dtype),
        grid_spec=pltpu.PrefetchScalarGridSpec(
            num_scalar_prefetch=3,
            grid=(B, num_row_tiles),
            in_specs=[
                pl.BlockSpec((pl.Squeezed(), C_in, tile_r, W),
                             lambda b, t, *_: (b, 0, t, 0)),
                pl.BlockSpec((pl.Squeezed(), Hs, C_in, Ws),
                             lambda b, t, *_: (b, 0, 0, 0)),
                pl.BlockSpec((Ws, W), lambda b, t, *_: (0, 0)),
                pl.BlockSpec((C_out, C_in), lambda b, t, *_: (0, 0)),
                pl.BlockSpec((C_out, 1), lambda b, t, *_: (0, 0)),
            ],
            out_specs=pl.BlockSpec((pl.Squeezed(), C_out, tile_r, W),
                                   lambda b, t, *_: (b, 0, t, 0)),
        ),
        compiler_params=pltpu.CompilerParams(
            dimension_semantics=("parallel", "parallel"),
            vmem_limit_bytes=vmem_limit),
    )(r_lo, r_hi, row_fr_i, input_nchw, m0, awt, wconv, brgb)
    # TODO(synk): skip/Upsample (upfirdn2d blur) path not implemented; skip=None only.
    # TODO(synk): dict-valued spatial style (masks/textures) branch not implemented.
    return out


def _reference(input_nchw, style_nchw, params, lr_mul=1.0):
    """Pure-JAX reference mirroring the PyTorch forward, original op order.

    antialias=False matches F.interpolate(mode='bilinear', align_corners=False)
    for both up- and down-sampling of the spatial style.
    """
    B, C_in, H, W = input_nchw.shape
    style_dim = style_nchw.shape[1]
    style_r = jax.image.resize(style_nchw, (B, style_dim, H, W),
                               method="bilinear", antialias=False)
    wmod = params["mod_weight"] * (lr_mul / math.sqrt(style_dim))
    mod = jnp.einsum("bshw,cs->bchw", style_r, wmod,
                     precision=jax.lax.Precision.HIGHEST)
    mod = mod + (params["mod_bias"] * lr_mul)[None, :, None, None]
    wconv = params["conv_weight"][0, :, :, 0, 0] / math.sqrt(C_in)
    out = jnp.einsum("bihw,oi->bohw", input_nchw * mod, wconv,
                     precision=jax.lax.Precision.HIGHEST)
    return out + params["bias"].reshape(1, -1, 1, 1)


def _make_inputs(key, B, C_in, H, W, style_dim, C_out, Hs, Ws):
    k1, k2, k3, k4 = jax.random.split(key, 4)
    x = jax.random.normal(k1, (B, C_in, H, W), dtype=jnp.float32)
    style = jax.random.normal(k2, (B, style_dim, Hs, Ws), dtype=jnp.float32)
    params = {
        "conv_weight": jax.random.normal(k3, (1, C_out, C_in, 1, 1), jnp.float32),
        "mod_weight": jax.random.normal(k4, (C_in, style_dim), jnp.float32),
        "mod_bias": jnp.ones((C_in,), jnp.float32),
        "bias": jnp.zeros((1, C_out, 1, 1), jnp.float32),
    }
    return x, style, params


if __name__ == "__main__":
    key = jax.random.PRNGKey(0)
    ks = jax.random.split(key, 5)

    def run(k, B, C_in, H, style_dim, Hs, **kw):
        x, style, params = _make_inputs(k, B, C_in, H, H, style_dim, 3, Hs, Hs)
        out = jax.block_until_ready(spatial_to_rgb(x, style, params, **kw))
        ref = jax.block_until_ready(_reference(x, style, params))
        return out, ref

    # 1) Small config: VPU interp + VPU conv, B=2 -> grid (2, 1).
    out, ref = run(ks[0], 2, 4, 16, 8, 8)
    assert out.shape == ref.shape == (2, 3, 16, 16)
    assert jnp.allclose(out, ref, atol=1e-4, rtol=1e-4), \
        float(jnp.max(jnp.abs(out - ref)))

    # 2) Non-multiple-of-8 rows (H=12): partial tail tile, B=1 split into 2 tiles.
    out, ref = run(ks[1], 1, 4, 12, 8, 8)
    assert jnp.allclose(out, ref, atol=1e-4, rtol=1e-4), \
        float(jnp.max(jnp.abs(out - ref)))

    # 3) Larger dims: MXU column interpolation (Ws=32) + MXU 1x1 conv (C_in=64), f32.
    out, ref = run(ks[2], 1, 64, 64, 32, 32)
    assert jnp.allclose(out, ref, atol=1e-3, rtol=1e-3), \
        float(jnp.max(jnp.abs(out - ref)))

    # 4) Same config with bf16 matmul operands (v5e/v6e/v7x perf mode); f32
    #    accumulation/elementwise kept, so error bound is loose but bounded.
    out, ref = run(ks[3], 1, 64, 64, 32, 32, mxu_dtype=jnp.bfloat16)
    assert jnp.allclose(out, ref, atol=1e-1, rtol=1e-1), \
        float(jnp.max(jnp.abs(out - ref)))

    # 5) Down-sampled style (Hs=Ws=16 -> H=W=8): exercises the downsampling taps.
    out, ref = run(ks[4], 1, 4, 8, 8, 16)
    assert jnp.allclose(out, ref, atol=1e-4, rtol=1e-4), \
        float(jnp.max(jnp.abs(out - ref)))

    print("KERNEL_OK")
</pallas_src>

<mosaic_0001>
module attributes {stable_mosaic.version = 11 : i64} {
  func.func @_to_rgb_kernel(%arg0: i32, %arg1: i32, %arg2: memref<16xi32, #tpu.memory_space<smem>>, %arg3: memref<16xi32, #tpu.memory_space<smem>>, %arg4: memref<16xi32, #tpu.memory_space<smem>>, %arg5: memref<1x4x16x16xf32, #tpu.memory_space<vmem>>, %arg6: memref<1x8x4x8xf32, #tpu.memory_space<vmem>>, %arg7: memref<8x16xf32, #tpu.memory_space<vmem>>, %arg8: memref<3x4xf32, #tpu.memory_space<vmem>>, %arg9: memref<3x1xf32, #tpu.memory_space<vmem>>, %arg10: memref<1x3x16x16xf32, #tpu.memory_space<vmem>>) attributes {dimension_semantics = [#tpu.dimension_semantics<parallel>, #tpu.dimension_semantics<parallel>], iteration_bounds = array<i64: 2, 1>, scalar_prefetch = 3 : i64, scratch_operands = 0 : i64, tpu.core_type = #tpu.core_type<tc>, window_params = [{transform_indices = @transform_0, window_bounds = array<i64: 1, 4, 16, 16>}, {transform_indices = @transform_1, window_bounds = array<i64: 1, 8, 4, 8>}, {pipeline_mode = #tpu.pipeline_mode<synchronous>, transform_indices = @transform_2, window_bounds = array<i64: 8, 16>}, {pipeline_mode = #tpu.pipeline_mode<synchronous>, transform_indices = @transform_3, window_bounds = array<i64: 3, 4>}, {pipeline_mode = #tpu.pipeline_mode<synchronous>, transform_indices = @transform_4, window_bounds = array<i64: 3, 1>}, {transform_indices = @transform_5, window_bounds = array<i64: 1, 3, 16, 16>}]} {
    %c0 = arith.constant 0 : index
    %c0_0 = arith.constant 0 : index
    %0 = vector.load %arg7[%c0, %c0_0] : memref<8x16xf32, #tpu.memory_space<vmem>>, vector<8x16xf32>
    %c0_1 = arith.constant 0 : index
    %c0_2 = arith.constant 0 : index
    %1 = vector.load %arg8[%c0_1, %c0_2] : memref<3x4xf32, #tpu.memory_space<vmem>>, vector<3x4xf32>
    %c0_3 = arith.constant 0 : index
    %c0_4 = arith.constant 0 : index
    %2 = vector.load %arg9[%c0_3, %c0_4] : memref<3x1xf32, #tpu.memory_space<vmem>>, vector<3x1xf32>
    %3 = vector.shape_cast %2 : vector<3x1xf32> to vector<3x1xf32>
    %4 = vector.broadcast %3 : vector<3x1xf32> to vector<3x16xf32>
    %c16_i32 = arith.constant 16 : i32
    %5 = arith.muli %arg1, %c16_i32 : i32
    %c0_i32 = arith.constant 0 : i32
    %6 = arith.addi %5, %c0_i32 : i32
    %7 = arith.index_cast %6 : i32 to index
    %8 = memref.load %arg2[%7] : memref<16xi32, #tpu.memory_space<smem>>
    %9 = arith.index_cast %6 : i32 to index
    %10 = memref.load %arg3[%9] : memref<16xi32, #tpu.memory_space<smem>>
    %11 = arith.index_cast %6 : i32 to index
    %12 = memref.load %arg4[%11] : memref<16xi32, #tpu.memory_space<smem>>
    %13 = arith.sitofp %12 : i32 to f32
    %cst = arith.constant 5.96046448E-8 : f32
    %14 = arith.mulf %13, %cst : f32
    %c0_5 = arith.constant 0 : index
    %15 = arith.index_cast %8 : i32 to index
    %c0_6 = arith.constant 0 : index
    %c0_7 = arith.constant 0 : index
    %16 = vector.load %arg6[%c0_5, %15, %c0_6, %c0_7] : memref<1x8x4x8xf32, #tpu.memory_space<vmem>>, vector<1x1x4x8xf32>
    %17 = vector.shape_cast %16 : vector<1x1x4x8xf32> to vector<4x8xf32>
    %c0_8 = arith.constant 0 : index
    %18 = arith.index_cast %10 : i32 to index
    %c0_9 = arith.constant 0 : index
    %c0_10 = arith.constant 0 : index
    %19 = vector.load %arg6[%c0_8, %18, %c0_9, %c0_10] : memref<1x8x4x8xf32, #tpu.memory_space<vmem>>, vector<1x1x4x8xf32>
    %20 = vector.shape_cast %19 : vector<1x1x4x8xf32> to vector<4x8xf32>
    %21 = arith.subf %20, %17 : vector<4x8xf32>
    %22 = vector.broadcast %14 : f32 to vector<4x8xf32>
    %23 = arith.mulf %22, %21 : vector<4x8xf32>
    %24 = arith.addf %17, %23 : vector<4x8xf32>
    %25 = vector.extract_strided_slice %24 {offsets = [0, 0], sizes = [4, 1], strides = [1, 1]} : vector<4x8xf32> to vector<4x1xf32>
    %26 = vector.extract_strided_slice %0 {offsets = [0, 0], sizes = [1, 16], strides = [1, 1]} : vector<8x16xf32> to vector<1x16xf32>
    %27 = vector.broadcast %25 : vector<4x1xf32> to vector<4x16xf32>
    %28 = vector.broadcast %26 : vector<1x16xf32> to vector<4x16xf32>
    %29 = arith.mulf %27, %28 : vector<4x16xf32>
    %30 = vector.extract_strided_slice %24 {offsets = [0, 1], sizes = [4, 1], strides = [1, 1]} : vector<4x8xf32> to vector<4x1xf32>
    %31 = vector.extract_strided_slice %0 {offsets = [1, 0], sizes = [1, 16], strides = [1, 1]} : vector<8x16xf32> to vector<1x16xf32>
    %32 = vector.broadcast %30 : vector<4x1xf32> to vector<4x16xf32>
    %33 = vector.broadcast %31 : vector<1x16xf32> to vector<4x16xf32>
    %34 = arith.mulf %32, %33 : vector<4x16xf32>
    %35 = arith.addf %29, %34 : vector<4x16xf32>
    %36 = vector.extract_strided_slice %24 {offsets = [0, 2], sizes = [4, 1], strides = [1, 1]} : vector<4x8xf32> to vector<4x1xf32>
    %37 = vector.extract_strided_slice %0 {offsets = [2, 0], sizes = [1, 16], strides = [1, 1]} : vector<8x16xf32> to vector<1x16xf32>
    %38 = vector.broadcast %36 : vector<4x1xf32> to vector<4x16xf32>
    %39 = vector.broadcast %37 : vector<1x16xf32> to vector<4x16xf32>
    %40 = arith.mulf %38, %39 : vector<4x16xf32>
    %41 = arith.addf %35, %40 : vector<4x16xf32>
    %42 = vector.extract_strided_slice %24 {offsets = [0, 3], sizes = [4, 1], strides = [1, 1]} : vector<4x8xf32> to vector<4x1xf32>
    %43 = vector.extract_strided_slice %0 {offsets = [3, 0], sizes = [1, 16], strides = [1, 1]} : vector<8x16xf32> to vector<1x16xf32>
    %44 = vector.broadcast %42 : vector<4x1xf32> to vector<4x16xf32>
    %45 = vector.broadcast %43 : vector<1x16xf32> to vector<4x16xf32>
    %46 = arith.mulf %44, %45 : vector<4x16xf32>
    %47 = arith.addf %41, %46 : vector<4x16xf32>
    %48 = vector.extract_strided_slice %24 {offsets = [0, 4], sizes = [4, 1], strides = [1, 1]} : vector<4x8xf32> to vector<4x1xf32>
    %49 = vector.extract_strided_slice %0 {offsets = [4, 0], sizes = [1, 16], strides = [1, 1]} : vector<8x16xf32> to vector<1x16xf32>
    %50 = vector.broadcast %48 : vector<4x1xf32> to vector<4x16xf32>
    %51 = vector.broadcast %49 : vector<1x16xf32> to vector<4x16xf32>
    %52 = arith.mulf %50, %51 : vector<4x16xf32>
    %53 = arith.addf %47, %52 : vector<4x16xf32>
    %54 = vector.extract_strided_slice %24 {offsets = [0, 5], sizes = [4, 1], strides = [1, 1]} : vector<4x8xf32> to vector<4x1xf32>
    %55 = vector.extract_strided_slice %0 {offsets = [5, 0], sizes = [1, 16], strides = [1, 1]} : vector<8x16xf32> to vector<1x16xf32>
    %56 = vector.broadcast %54 : vector<4x1xf32> to vector<4x16xf32>
    %57 = vector.broadcast %55 : vector<1x16xf32> to vector<4x16xf32>
    %58 = arith.mulf %56, %57 : vector<4x16xf32>
    %59 = arith.addf %53, %58 : vector<4x16xf32>
    %60 = vector.extract_strided_slice %24 {offsets = [0, 6], sizes = [4, 1], strides = [1, 1]} : vector<4x8xf32> to vector<4x1xf32>
    %61 = vector.extract_strided_slice %0 {offsets = [6, 0], sizes = [1, 16], strides = [1, 1]} : vector<8x16xf32> to vector<1x16xf32>
    %62 = vector.broadcast %60 : vector<4x1xf32> to vector<4x16xf32>
    %63 = vector.broadcast %61 : vector<1x16xf32> to vector<4x16xf32>
    %64 = arith.mulf %62, %63 : vector<4x16xf32>
    %65 = arith.addf %59, %64 : vector<4x16xf32>
    %66 = vector.extract_strided_slice %24 {offsets = [0, 7], sizes = [4, 1], strides = [1, 1]} : vector<4x8xf32> to vector<4x1xf32>
    %67 = vector.extract_strided_slice %0 {offsets = [7, 0], sizes = [1, 16], strides = [1, 1]} : vector<8x16xf32> to vector<1x16xf32>
    %68 = vector.broadcast %66 : vector<4x1xf32> to vector<4x16xf32>
    %69 = vector.broadcast %67 : vector<1x16xf32> to vector<4x16xf32>
    %70 = arith.mulf %68, %69 : vector<4x16xf32>
    %71 = arith.addf %65, %70 : vector<4x16xf32>
    %c0_11 = arith.constant 0 : index
    %c0_12 = arith.constant 0 : index
    %c0_13 = arith.constant 0 : index
    %c0_14 = arith.constant 0 : index
    %72 = vector.load %arg5[%c0_11, %c0_12, %c0_13, %c0_14] : memref<1x4x16x16xf32, #tpu.memory_space<vmem>>, vector<1x4x1x16xf32>
    %73 = vector.shape_cast %72 : vector<1x4x1x16xf32> to vector<4x16xf32>
    %74 = arith.mulf %73, %71 : vector<4x16xf32>
    %75 = vector.extract_strided_slice %1 {offsets = [0, 0], sizes = [3, 1], strides = [1, 1]} : vector<3x4xf32> to vector<3x1xf32>
    %76 = vector.extract_strided_slice %74 {offsets = [0, 0], sizes = [1, 16], strides = [1, 1]} : vector<4x16xf32> to vector<1x16xf32>
    %77 = vector.broadcast %75 : vector<3x1xf32> to vector<3x16xf32>
    %78 = vector.broadcast %76 : vector<1x16xf32> to vector<3x16xf32>
    %79 = arith.mulf %77, %78 : vector<3x16xf32>
    %80 = arith.addf %4, %79 : vector<3x16xf32>
    %81 = vector.extract_strided_slice %1 {offsets = [0, 1], sizes = [3, 1], strides = [1, 1]} : vector<3x4xf32> to vector<3x1xf32>
    %82 = vector.extract_strided_slice %74 {offsets = [1, 0], sizes = [1, 16], strides = [1, 1]} : vector<4x16xf32> to vector<1x16xf32>
    %83 = vector.broadcast %81 : vector<3x1xf32> to vector<3x16xf32>
    %84 = vector.broadcast %82 : vector<1x16xf32> to vector<3x16xf32>
    %85 = arith.mulf %83, %84 : vector<3x16xf32>
    %86 = arith.addf %80, %85 : vector<3x16xf32>
    %87 = vector.extract_strided_slice %1 {offsets = [0, 2], sizes = [3, 1], strides = [1, 1]} : vector<3x4xf32> to vector<3x1xf32>
    %88 = vector.extract_strided_slice %74 {offsets = [2, 0], sizes = [1, 16], strides = [1, 1]} : vector<4x16xf32> to vector<1x16xf32>
    %89 = vector.broadcast %87 : vector<3x1xf32> to vector<3x16xf32>
    %90 = vector.broadcast %88 : vector<1x16xf32> to vector<3x16xf32>
    %91 = arith.mulf %89, %90 : vector<3x16xf32>
    %92 = arith.addf %86, %91 : vector<3x16xf32>
    %93 = vector.extract_strided_slice %1 {offsets = [0, 3], sizes = [3, 1], strides = [1, 1]} : vector<3x4xf32> to vector<3x1xf32>
    %94 = vector.extract_strided_slice %74 {offsets = [3, 0], sizes = [1, 16], strides = [1, 1]} : vector<4x16xf32> to vector<1x16xf32>
    %95 = vector.broadcast %93 : vector<3x1xf32> to vector<3x16xf32>
    %96 = vector.broadcast %94 : vector<1x16xf32> to vector<3x16xf32>
    %97 = arith.mulf %95, %96 : vector<3x16xf32>
    %98 = arith.addf %92, %97 : vector<3x16xf32>
    %c0_15 = arith.constant 0 : index
    %c0_16 = arith.constant 0 : index
    %c0_17 = arith.constant 0 : index
    %c0_18 = arith.constant 0 : index
    %99 = vector.load %arg10[%c0_15, %c0_16, %c0_17, %c0_18] : memref<1x3x16x16xf32, #tpu.memory_space<vmem>>, vector<1x3x1x16xf32>
    %100 = vector.shape_cast %99 : vector<1x3x1x16xf32> to vector<3x16xf32>
    %101 = vector.shape_cast %98 : vector<3x16xf32> to vector<1x3x1x16xf32>
    tpu.vector_store %arg10[%c0_15, %c0_16, %c0_17, %c0_18], %101 {strides = array<i32>} : memref<1x3x16x16xf32, #tpu.memory_space<vmem>>, vector<1x3x1x16xf32>,
    %c1_i32 = arith.constant 1 : i32
    %102 = arith.addi %5, %c1_i32 : i32
    %103 = arith.index_cast %102 : i32 to index
    %104 = memref.load %arg2[%103] : memref<16xi32, #tpu.memory_space<smem>>
    %105 = arith.index_cast %102 : i32 to index
    %106 = memref.load %arg3[%105] : memref<16xi32, #tpu.memory_space<smem>>
    %107 = arith.index_cast %102 : i32 to index
    %108 = memref.load %arg4[%107] : memref<16xi32, #tpu.memory_space<smem>>
    %109 = arith.sitofp %108 : i32 to f32
    %cst_19 = arith.constant 5.96046448E-8 : f32
    %110 = arith.mulf %109, %cst_19 : f32
    %c0_20 = arith.constant 0 : index
    %111 = arith.index_cast %104 : i32 to index
    %c0_21 = arith.constant 0 : index
    %c0_22 = arith.constant 0 : index
    %112 = vector.load %arg6[%c0_20, %111, %c0_21, %c0_22] : memref<1x8x4x8xf32, #tpu.memory_space<vmem>>, vector<1x1x4x8xf32>
    %113 = vector.shape_cast %112 : vector<1x1x4x8xf32> to vector<4x8xf32>
    %c0_23 = arith.constant 0 : index
    %114 = arith.index_cast %106 : i32 to index
    %c0_24 = arith.constant 0 : index
    %c0_25 = arith.constant 0 : index
    %115 = vector.load %arg6[%c0_23, %114, %c0_24, %c0_25] : memref<1x8x4x8xf32, #tpu.memory_space<vmem>>, vector<1x1x4x8xf32>
    %116 = vector.shape_cast %115 : vector<1x1x4x8xf32> to vector<4x8xf32>
    %117 = arith.subf %116, %113 : vector<4x8xf32>
    %118 = vector.broadcast %110 : f32 to vector<4x8xf32>
    %119 = arith.mulf %118, %117 : vector<4x8xf32>
    %120 = arith.addf %113, %119 : vector<4x8xf32>
    %121 = vector.extract_strided_slice %120 {offsets = [0, 0], sizes = [4, 1], strides = [1, 1]} : vector<4x8xf32> to vector<4x1xf32>
    %122 = vector.extract_strided_slice %0 {offsets = [0, 0], sizes = [1, 16], strides = [1, 1]} : vector<8x16xf32> to vector<1x16xf32>
    %123 = vector.broadcast %121 : vector<4x1xf32> to vector<4x16xf32>
    %124 = vector.broadcast %122 : vector<1x16xf32> to vector<4x16xf32>
    %125 = arith.mulf %123, %124 : vector<4x16xf32>
    %126 = vector.extract_strided_slice %120 {offsets = [0, 1], sizes = [4, 1], strides = [1, 1]} : vector<4x8xf32> to vector<4x1xf32>
    %127 = vector.extract_strided_slice %0 {offsets = [1, 0], sizes = [1, 16], strides = [1, 1]} : vector<8x16xf32> to vector<1x16xf32>
    %128 = vector.broadcast %126 : vector<4x1xf32> to vector<4x16xf32>
    %129 = vector.broadcast %127 : vector<1x16xf32> to vector<4x16xf32>
    %130 = arith.mulf %128, %129 : vector<4x16xf32>
    %131 = arith.addf %125, %130 : vector<4x16xf32>
    %132 = vector.extract_strided_slice %120 {offsets = [0, 2], sizes = [4, 1], strides = [1, 1]} : vector<4x8xf32> to vector<4x1xf32>
    %133 = vector.extract_strided_slice %0 {offsets = [2, 0], sizes = [1, 16], strides = [1, 1]} : vector<8x16xf32> to vector<1x16xf32>
    %134 = vector.broadcast %132 : vector<4x1xf32> to vector<4x16xf32>
    %135 = vector.broadcast %133 : vector<1x16xf32> to vector<4x16xf32>
    %136 = arith.mulf %134, %135 : vector<4x16xf32>
    %137 = arith.addf %131, %136 : vector<4x16xf32>
    %138 = vector.extract_strided_slice %120 {offsets = [0, 3], sizes = [4, 1], strides = [1, 1]} : vector<4x8xf32> to vector<4x1xf32>
    %139 = vector.extract_strided_slice %0 {offsets = [3, 0], sizes = [1, 16], strides = [1, 1]} : vector<8x16xf32> to vector<1x16xf32>
    %140 = vector.broadcast %138 : vector<4x1xf32> to vector<4x16xf32>
    %141 = vector.broadcast %139 : vector<1x16xf32> to vector<4x16xf32>
    %142 = arith.mulf %140, %141 : vector<4x16xf32>
    %143 = arith.addf %137, %142 : vector<4x16xf32>
    %144 = vector.extract_strided_slice %120 {offsets = [0, 4], sizes = [4, 1], strides = [1, 1]} : vector<4x8xf32> to vector<4x1xf32>
    %145 = vector.extract_strided_slice %0 {offsets = [4, 0], sizes = [1, 16], strides = [1, 1]} : vector<8x16xf32> to vector<1x16xf32>
    %146 = vector.broadcast %144 : vector<4x1xf32> to vector<4x16xf32>
    %147 = vector.broadcast %145 : vector<1x16xf32> to vector<4x16xf32>
    %148 = arith.mulf %146, %147 : vector<4x16xf32>
    %149 = arith.addf %143, %148 : vector<4x16xf32>
    %150 = vector.extract_strided_slice %120 {offsets = [0, 5], sizes = [4, 1], strides = [1, 1]} : vector<4x8xf32> to vector<4x1xf32>
    %151 = vector.extract_strided_slice %0 {offsets = [5, 0], sizes = [1, 16], strides = [1, 1]} : vector<8x16xf32> to vector<1x16xf32>
    %152 = vector.broadcast %150 : vector<4x1xf32> to vector<4x16xf32>
    %153 = vector.broadcast %151 : vector<1x16xf32> to vector<4x16xf32>
    %154 = arith.mulf %152, %153 : vector<4x16xf32>
    %155 = arith.addf %149, %154 : vector<4x16xf32>
    %156 = vector.extract_strided_slice %120 {offsets = [0, 6], sizes = [4, 1], strides = [1, 1]} : vector<4x8xf32> to vector<4x1xf32>
    %157 = vector.extract_strided_slice %0 {offsets = [6, 0], sizes = [1, 16], strides = [1, 1]} : vector<8x16xf32> to vector<1x16xf32>
    %158 = vector.broadcast %156 : vector<4x1xf32> to vector<4x16xf32>
    %159 = vector.broadcast %157 : vector<1x16xf32> to vector<4x16xf32>
    %160 = arith.mulf %158, %159 : vector<4x16xf32>
    %161 = arith.addf %155, %160 : vector<4x16xf32>
    %162 = vector.extract_strided_slice %120 {offsets = [0, 7], sizes = [4, 1], strides = [1, 1]} : vector<4x8xf32> to vector<4x1xf32>
    %163 = vector.extract_strided_slice %0 {offsets = [7, 0], sizes = [1, 16], strides = [1, 1]} : vector<8x16xf32> to vector<1x16xf32>
    %164 = vector.broadcast %162 : vector<4x1xf32> to vector<4x16xf32>
    %165 = vector.broadcast %163 : vector<1x16xf32> to vector<4x16xf32>
    %166 = arith.mulf %164, %165 : vector<4x16xf32>
    %167 = arith.addf %161, %166 : vector<4x16xf32>
    %c0_26 = arith.constant 0 : index
    %c0_27 = arith.constant 0 : index
    %c1 = arith.constant 1 : index
    %c0_28 = arith.constant 0 : index
    %168 = vector.load %arg5[%c0_26, %c0_27, %c1, %c0_28] : memref<1x4x16x16xf32, #tpu.memory_space<vmem>>, vector<1x4x1x16xf32>
    %169 = vector.shape_cast %168 : vector<1x4x1x16xf32> to vector<4x16xf32>
    %170 = arith.mulf %169, %167 : vector<4x16xf32>
    %171 = vector.extract_strided_slice %1 {offsets = [0, 0], sizes = [3, 1], strides = [1, 1]} : vector<3x4xf32> to vector<3x1xf32>
    %172 = vector.extract_strided_slice %170 {offsets = [0, 0], sizes = [1, 16], strides = [1, 1]} : vector<4x16xf32> to vector<1x16xf32>
    %173 = vector.broadcast %171 : vector<3x1xf32> to vector<3x16xf32>
    %174 = vector.broadcast %172 : vector<1x16xf32> to vector<3x16xf32>
    %175 = arith.mulf %173, %174 : vector<3x16xf32>
    %176 = arith.addf %4, %175 : vector<3x16xf32>
    %177 = vector.extract_strided_slice %1 {offsets = [0, 1], sizes = [3, 1], strides = [1, 1]} : vector<3x4xf32> to vector<3x1xf32>
    %178 = vector.extract_strided_slice %170 {offsets = [1, 0], sizes = [1, 16], strides = [1, 1]} : vector<4x16xf32> to vector<1x16xf32>
    %179 = vector.broadcast %177 : vector<3x1xf32> to vector<3x16xf32>
    %180 = vector.broadcast %178 : vector<1x16xf32> to vector<3x16xf32>
    %181 = arith.mulf %179, %180 : vector<3x16xf32>
    %182 = arith.addf %176, %181 : vector<3x16xf32>
    %183 = vector.extract_strided_slice %1 {offsets = [0, 2], sizes = [3, 1], strides = [1, 1]} : vector<3x4xf32> to vector<3x1xf32>
    %184 = vector.extract_strided_slice %170 {offsets = [2, 0], sizes = [1, 16], strides = [1, 1]} : vector<4x16xf32> to vector<1x16xf32>
    %185 = vector.broadcast %183 : vector<3x1xf32> to vector<3x16xf32>
    %186 = vector.broadcast %184 : vector<1x16xf32> to vector<3x16xf32>
    %187 = arith.mulf %185, %186 : vector<3x16xf32>
    %188 = arith.addf %182, %187 : vector<3x16xf32>
    %189 = vector.extract_strided_slice %1 {offsets = [0, 3], sizes = [3, 1], strides = [1, 1]} : vector<3x4xf32> to vector<3x1xf32>
    %190 = vector.extract_strided_slice %170 {offsets = [3, 0], sizes = [1, 16], strides = [1, 1]} : vector<4x16xf32> to vector<1x16xf32>
    %191 = vector.broadcast %189 : vector<3x1xf32> to vector<3x16xf32>
    %192 = vector.broadcast %190 : vector<1x16xf32> to vector<3x16xf32>
    %193 = arith.mulf %191, %192 : vector<3x16xf32>
    %194 = arith.addf %188, %193 : vector<3x16xf32>
    %c0_29 = arith.constant 0 : index
    %c0_30 = arith.constant 0 : index
    %c1_31 = arith.constant 1 : index
    %c0_32 = arith.constant 0 : index
    %195 = vector.load %arg10[%c0_29, %c0_30, %c1_31, %c0_32] : memref<1x3x16x16xf32, #tpu.memory_space<vmem>>, vector<1x3x1x16xf32>
    %196 = vector.shape_cast %195 : vector<1x3x1x16xf32> to vector<3x16xf32>
    %197 = vector.shape_cast %194 : vector<3x16xf32> to vector<1x3x1x16xf32>
    tpu.vector_store %arg10[%c0_29, %c0_30, %c1_31, %c0_32], %197 {strides = array<i32>} : memref<1x3x16x16xf32, #tpu.memory_space<vmem>>, vector<1x3x1x16xf32>,
    %c2_i32 = arith.constant 2 : i32
    %198 = arith.addi %5, %c2_i32 : i32
    %199 = arith.index_cast %198 : i32 to index
    %200 = memref.load %arg2[%199] : memref<16xi32, #tpu.memory_space<smem>>
    %201 = arith.index_cast %198 : i32 to index
    %202 = memref.load %arg3[%201] : memref<16xi32, #tpu.memory_space<smem>>
    %203 = arith.index_cast %198 : i32 to index
    %204 = memref.load %arg4[%203] : memref<16xi32, #tpu.memory_space<smem>>
    %205 = arith.sitofp %204 : i32 to f32
    %cst_33 = arith.constant 5.96046448E-8 : f32
    %206 = arith.mulf %205, %cst_33 : f32
    %c0_34 = arith.constant 0 : index
    %207 = arith.index_cast %200 : i32 to index
    %c0_35 = arith.constant 0 : index
    %c0_36 = arith.constant 0 : index
    %208 = vector.load %arg6[%c0_34, %207, %c0_35, %c0_36] : memref<1x8x4x8xf32, #tpu.memory_space<vmem>>, vector<1x1x4x8xf32>
    %209 = vector.shape_cast %208 : vector<1x1x4x8xf32> to vector<4x8xf32>
    %c0_37 = arith.constant 0 : index
    %210 = arith.index_cast %202 : i32 to index
    %c0_38 = arith.constant 0 : index
    %c0_39 = arith.constant 0 : index
    %211 = vector.load %arg6[%c0_37, %210, %c0_38, %c0_39] : memref<1x8x4x8xf32, #tpu.memory_space<vmem>>, vector<1x1x4x8xf32>
    %212 = vector.shape_cast %211 : vector<1x1x4x8xf32> to vector<4x8xf32>
    %213 = arith.subf %212, %209 : vector<4x8xf32>
    %214 = vector.broadcast %206 : f32 to vector<4x8xf32>
    %215 = arith.mulf %214, %213 : vector<4x8xf32>
    %216 = arith.addf %209, %215 : vector<4x8xf32>
    %217 = vector.extract_strided_slice %216 {offsets = [0, 0], sizes = [4, 1], strides = [1, 1]} : vector<4x8xf32> to vector<4x1xf32>
    %218 = vector.extract_strided_slice %0 {offsets = [0, 0], sizes = [1, 16], strides = [1, 1]} : vector<8x16xf32> to vector<1x16xf32>
    %219 = vector.broadcast %217 : vector<4x1xf32> to vector<4x16xf32>
    %220 = vector.broadcast %218 : vector<1x16xf32> to vector<4x16xf32>
    %221 = arith.mulf %219, %220 : vector<4x16xf32>
    %222 = vector.extract_strided_slice %216 {offsets = [0, 1], sizes = [4, 1], strides = [1, 1]} : vector<4x8xf32> to vector<4x1xf32>
    %223 = vector.extract_strided_slice %0 {offsets = [1, 0], sizes = [1, 16], strides = [1, 1]} : vector<8x16xf32> to vector<1x16xf32>
    %224 = vector.broadcast %222 : vector<4x1xf32> to vector<4x16xf32>
    %225 = vector.broadcast %223 : vector<1x16xf32> to vector<4x16xf32>
    %226 = arith.mulf %224, %225 : vector<4x16xf32>
    %227 = arith.addf %221, %226 : vector<4x16xf32>
    %228 = vector.extract_strided_slice %216 {offsets = [0, 2], sizes = [4, 1], strides = [1, 1]} : vector<4x8xf32> to vector<4x1xf32>
    %229 = vector.extract_strided_slice %0 {offsets = [2, 0], sizes = [1, 16], strides = [1, 1]} : vector<8x16xf32> to vector<1x16xf32>
    %230 = vector.broadcast %228 : vector<4x1xf32> to vector<4x16xf32>
    %231 = vector.broadcast %229 : vector<1x16xf32> to vector<4x16xf32>
    %232 = arith.mulf %230, %231 : vector<4x16xf32>
    %233 = arith.addf %227, %232 : vector<4x16xf32>
    %234 = vector.extract_strided_slice %216 {offsets = [0, 3], sizes = [4, 1], strides = [1, 1]} : vector<4x8xf32> to vector<4x1xf32>
    %235 = vector.extract_strided_slice %0 {offsets = [3, 0], sizes = [1, 16], strides = [1, 1]} : vector<8x16xf32> to vector<1x16xf32>
    %236 = vector.broadcast %234 : vector<4x1xf32> to vector<4x16xf32>
    %237 = vector.broadcast %235 : vector<1x16xf32> to vector<4x16xf32>
    %238 = arith.mulf %236, %237 : vector<4x16xf32>
    %239 = arith.addf %233, %238 : vector<4x16xf32>
    %240 = vector.extract_strided_slice %216 {offsets = [0, 4], sizes = [4, 1], strides = [1, 1]} : vector<4x8xf32> to vector<4x1xf32>
    %241 = vector.extract_strided_slice %0 {offsets = [4, 0], sizes = [1, 16], strides = [1, 1]} : vector<8x16xf32> to vector<1x16xf32>
    %242 = vector.broadcast %240 : vector<4x1xf32> to vector<4x16xf32>
    %243 = vector.broadcast %241 : vector<1x16xf32> to vector<4x16xf32>
    %244 = arith.mulf %242, %243 : vector<4x16xf32>
    %245 = arith.addf %239, %244 : vector<4x16xf32>
    %246 = vector.extract_strided_slice %216 {offsets = [0, 5], sizes = [4, 1], strides = [1, 1]} : vector<4x8xf32> to vector<4x1xf32>
    %247 = vector.extract_strided_slice %0 {offsets = [5, 0], sizes = [1, 16], strides = [1, 1]} : vector<8x16xf32> to vector<1x16xf32>
    %248 = vector.broadcast %246 : vector<4x1xf32> to vector<4x16xf32>
    %249 = vector.broadcast %247 : vector<1x16xf32> to vector<4x16xf32>
    %250 = arith.mulf %248, %249 : vector<4x16xf32>
    %251 = arith.addf %245, %250 : vector<4x16xf32>
    %252 = vector.extract_strided_slice %216 {offsets = [0, 6], sizes = [4, 1], strides = [1, 1]} : vector<4x8xf32> to vector<4x1xf32>
    %253 = vector.extract_strided_slice %0 {offsets = [6, 0], sizes = [1, 16], strides = [1, 1]} : vector<8x16xf32> to vector<1x16xf32>
    %254 = vector.broadcast %252 : vector<4x1xf32> to vector<4x16xf32>
    %255 = vector.broadcast %253 : vector<1x16xf32> to vector<4x16xf32>
    %256 = arith.mulf %254, %255 : vector<4x16xf32>
    %257 = arith.addf %251, %256 : vector<4x16xf32>
    %258 = vector.extract_strided_slice %216 {offsets = [0, 7], sizes = [4, 1], strides = [1, 1]} : vector<4x8xf32> to vector<4x1xf32>
    %259 = vector.extract_strided_slice %0 {offsets = [7, 0], sizes = [1, 16], strides = [1, 1]} : vector<8x16xf32> to vector<1x16xf32>
    %260 = vector.broadcast %258 : vector<4x1xf32> to vector<4x16xf32>
    %261 = vector.broadcast %259 : vector<1x16xf32> to vector<4x16xf32>
    %262 = arith.mulf %260, %261 : vector<4x16xf32>
    %263 = arith.addf %257, %262 : vector<4x16xf32>
    %c0_40 = arith.constant 0 : index
    %c0_41 = arith.constant 0 : index
    %c2 = arith.constant 2 : index
    %c0_42 = arith.constant 0 : index
    %264 = vector.load %arg5[%c0_40, %c0_41, %c2, %c0_42] : memref<1x4x16x16xf32, #tpu.memory_space<vmem>>, vector<1x4x1x16xf32>
    %265 = vector.shape_cast %264 : vector<1x4x1x16xf32> to vector<4x16xf32>
    %266 = arith.mulf %265, %263 : vector<4x16xf32>
    %267 = vector.extract_strided_slice %1 {offsets = [0, 0], sizes = [3, 1], strides = [1, 1]} : vector<3x4xf32> to vector<3x1xf32>
    %268 = vector.extract_strided_slice %266 {offsets = [0, 0], sizes = [1, 16], strides = [1, 1]} : vector<4x16xf32> to vector<1x16xf32>
    %269 = vector.broadcast %267 : vector<3x1xf32> to vector<3x16xf32>
    %270 = vector.broadcast %268 : vector<1x16xf32> to vector<3x16xf32>
    %271 = arith.mulf %269, %270 : vector<3x16xf32>
    %272 = arith.addf %4, %271 : vector<3x16xf32>
    %273 = vector.extract_strided_slice %1 {offsets = [0, 1], sizes = [3, 1], strides = [1, 1]} : vector<3x4xf32> to vector<3x1xf32>
    %274 = vector.extract_strided_slice %266 {offsets = [1, 0], sizes = [1, 16], strides = [1, 1]} : vector<4x16xf32> to vector<1x16xf32>
    %275 = vector.broadcast %273 : vector<3x1xf32> to vector<3x16xf32>
    %276 = vector.broadcast %274 : vector<1x16xf32> to vector<3x16xf32>
    %277 = arith.mulf %275, %276 : vector<3x16xf32>
    %278 = arith.addf %272, %277 : vector<3x16xf32>
    %279 = vector.extract_strided_slice %1 {offsets = [0, 2], sizes = [3, 1], strides = [1, 1]} : vector<3x4xf32> to vector<3x1xf32>
    %280 = vector.extract_strided_slice %266 {offsets = [2, 0], sizes = [1, 16], strides = [1, 1]} : vector<4x16xf32> to vector<1x16xf32>
    %281 = vector.broadcast %279 : vector<3x1xf32> to vector<3x16xf32>
    %282 = vector.broadcast %280 : vector<1x16xf32> to vector<3x16xf32>
    %283 = arith.mulf %281, %282 : vector<3x16xf32>
    %284 = arith.addf %278, %283 : vector<3x16xf32>
    %285 = vector.extract_strided_slice %1 {offsets = [0, 3], sizes = [3, 1], strides = [1, 1]} : vector<3x4xf32> to vector<3x1xf32>
    %286 = vector.extract_strided_slice %266 {offsets = [3, 0], sizes = [1, 16], strides = [1, 1]} : vector<4x16xf32> to vector<1x16xf32>
    %287 = vector.broadcast %285 : vector<3x1xf32> to vector<3x16xf32>
    %288 = vector.broadcast %286 : vector<1x16xf32> to vector<3x16xf32>
    %289 = arith.mulf %287, %288 : vector<3x16xf32>
    %290 = arith.addf %284, %289 : vector<3x16xf32>
    %c0_43 = arith.constant 0 : index
    %c0_44 = arith.constant 0 : index
    %c2_45 = arith.constant 2 : index
    %c0_46 = arith.constant 0 : index
    %291 = vector.load %arg10[%c0_43, %c0_44, %c2_45, %c0_46] : memref<1x3x16x16xf32, #tpu.memory_space<vmem>>, vector<1x3x1x16xf32>
    %292 = vector.shape_cast %291 : vector<1x3x1x16xf32> to vector<3x16xf32>
    %293 = vector.shape_cast %290 : vector<3x16xf32> to vector<1x3x1x16xf32>
    tpu.vector_store %arg10[%c0_43, %c0_44, %c2_45, %c0_46], %293 {strides = array<i32>} : memref<1x3x16x16xf32, #tpu.memory_space<vmem>>, vector<1x3x1x16xf32>,
    %c3_i32 = arith.constant 3 : i32
    %294 = arith.addi %5, %c3_i32 : i32
    %295 = arith.index_cast %294 : i32 to index
    %296 = memref.load %arg2[%295] : memref<16xi32, #tpu.memory_space<smem>>
    %297 = arith.index_cast %294 : i32 to index
    %298 = memref.load %arg3[%297] : memref<16xi32, #tpu.memory_space<smem>>
    %299 = arith.index_cast %294 : i32 to index
    %300 = memref.load %arg4[%299] : memref<16xi32, #tpu.memory_space<smem>>
    %301 = arith.sitofp %300 : i32 to f32
    %cst_47 = arith.constant 5.96046448E-8 : f32
    %302 = arith.mulf %301, %cst_47 : f32
    %c0_48 = arith.constant 0 : index
    %303 = arith.index_cast %296 : i32 to index
    %c0_49 = arith.constant 0 : index
    %c0_50 = arith.constant 0 : index
    %304 = vector.load %arg6[%c0_48, %303, %c0_49, %c0_50] : memref<1x8x4x8xf32, #tpu.memory_space<vmem>>, vector<1x1x4x8xf32>
    %305 = vector.shape_cast %304 : vector<1x1x4x8xf32> to vector<4x8xf32>
    %c0_51 = arith.constant 0 : index
    %306 = arith.index_cast %298 : i32 to index
    %c0_52 = arith.constant 0 : index
    %c0_53 = arith.constant 0 : index
    %307 = vector.load %arg6[%c0_51, %306, %c0_52, %c0_53] : memref<1x8x4x8xf32, #tpu.memory_space<vmem>>, vector<1x1x4x8xf32>
    %308 = vector.shape_cast %307 : vector<1x1x4x8xf32> to vector<4x8xf32>
    %309 = arith.subf %308, %305 : vector<4x8xf32>
    %310 = vector.broadcast %302 : f32 to vector<4x8xf32>
    %311 = arith.mulf %310, %309 : vector<4x8xf32>
    %312 = arith.addf %305, %311 : vector<4x8xf32>
    %313 = vector.extract_strided_slice %312 {offsets = [0, 0], sizes = [4, 1], strides = [1, 1]} : vector<4x8xf32> to vector<4x1xf32>
    %314 = vector.extract_strided_slice %0 {offsets = [0, 0], sizes = [1, 16], strides = [1, 1]} : vector<8x16xf32> to vector<1x16xf32>
    %315 = vector.broadcast %313 : vector<4x1xf32> to vector<4x16xf32>
    %316 = vector.broadcast %314 : vector<1x16xf32> to vector<4x16xf32>
    %317 = arith.mulf %315, %316 : vector<4x16xf32>
    %318 = vector.extract_strided_slice %312 {offsets = [0, 1], sizes = [4, 1], strides = [1, 1]} : vector<4x8xf32> to vector<4x1xf32>
    %319 = vector.extract_strided_slice %0 {offsets = [1, 0], sizes = [1, 16], strides = [1, 1]} : vector<8x16xf32> to vector<1x16xf32>
    %320 = vector.broadcast %318 : vector<4x1xf32> to vector<4x16xf32>
    %321 = vector.broadcast %319 : vector<1x16xf32> to vector<4x16xf32>
    %322 = arith.mulf %320, %321 : vector<4x16xf32>
    %323 = arith.addf %317, %322 : vector<4x16xf32>
    %324 = vector.extract_strided_slice %312 {offsets = [0, 2], sizes = [4, 1], strides = [1, 1]} : vector<4x8xf32> to vector<4x1xf32>
    %325 = vector.extract_strided_slice %0 {offsets = [2, 0], sizes = [1, 16], strides = [1, 1]} : vector<8x16xf32> to vector<1x16xf32>
    %326 = vector.broadcast %324 : vector<4x1xf32> to vector<4x16xf32>
    %327 = vector.broadcast %325 : vector<1x16xf32> to vector<4x16xf32>
    %328 = arith.mulf %326, %327 : vector<4x16xf32>
    %329 = arith.addf %323, %328 : vector<4x16xf32>
    %330 = vector.extract_strided_slice %312 {offsets = [0, 3], sizes = [4, 1], strides = [1, 1]} : vector<4x8xf32> to vector<4x1xf32>
    %331 = vector.extract_strided_slice %0 {offsets = [3, 0], sizes = [1, 16], strides = [1, 1]} : vector<8x16xf32> to vector<1x16xf32>
    %332 = vector.broadcast %330 : vector<4x1xf32> to vector<4x16xf32>
    %333 = vector.broadcast %331 : vector<1x16xf32> to vector<4x16xf32>
    %334 = arith.mulf %332, %333 : vector<4x16xf32>
    %335 = arith.addf %329, %334 : vector<4x16xf32>
    %336 = vector.extract_strided_slice %312 {offsets = [0, 4], sizes = [4, 1], strides = [1, 1]} : vector<4x8xf32> to vector<4x1xf32>
    %337 = vector.extract_strided_slice %0 {offsets = [4, 0], sizes = [1, 16], strides = [1, 1]} : vector<8x16xf32> to vector<1x16xf32>
    %338 = vector.broadcast %336 : vector<4x1xf32> to vector<4x16xf32>
    %339 = vector.broadcast %337 : vector<1x16xf32> to vector<4x16xf32>
    %340 = arith.mulf %338, %339 : vector<4x16xf32>
    %341 = arith.addf %335, %340 : vector<4x16xf32>
    %342 = vector.extract_strided_slice %312 {offsets = [0, 5], sizes = [4, 1], strides = [1, 1]} : vector<4x8xf32> to vector<4x1xf32>
    %343 = vector.extract_strided_slice %0 {offsets = [5, 0], sizes = [1, 16], strides = [1, 1]} : vector<8x16xf32> to vector<1x16xf32>
    %344 = vector.broadcast %342 : vector<4x1xf32> to vector<4x16xf32>
    %345 = vector.broadcast %343 : vector<1x16xf32> to vector<4x16xf32>
    %346 = arith.mulf %344, %345 : vector<4x16xf32>
    %347 = arith.addf %341, %346 : vector<4x16xf32>
    %348 = vector.extract_strided_slice %312 {offsets = [0, 6], sizes = [4, 1], strides = [1, 1]} : vector<4x8xf32> to vector<4x1xf32>
    %349 = vector.extract_strided_slice %0 {offsets = [6, 0], sizes = [1, 16], strides = [1, 1]} : vector<8x16xf32> to vector<1x16xf32>
    %350 = vector.broadcast %348 : vector<4x1xf32> to vector<4x16xf32>
    %351 = vector.broadcast %349 : vector<1x16xf32> to vector<4x16xf32>
    %352 = arith.mulf %350, %351 : vector<4x16xf32>
    %353 = arith.addf %347, %352 : vector<4x16xf32>
    %354 = vector.extract_strided_slice %312 {offsets = [0, 7], sizes = [4, 1], strides = [1, 1]} : vector<4x8xf32> to vector<4x1xf32>
    %355 = vector.extract_strided_slice %0 {offsets = [7, 0], sizes = [1, 16], strides = [1, 1]} : vector<8x16xf32> to vector<1x16xf32>
    %356 = vector.broadcast %354 : vector<4x1xf32> to vector<4x16xf32>
    %357 = vector.broadcast %355 : vector<1x16xf32> to vector<4x16xf32>
    %358 = arith.mulf %356, %357 : vector<4x16xf32>
    %359 = arith.addf %353, %358 : vector<4x16xf32>
    %c0_54 = arith.constant 0 : index
    %c0_55 = arith.constant 0 : index
    %c3 = arith.constant 3 : index
    %c0_56 = arith.constant 0 : index
    %360 = vector.load %arg5[%c0_54, %c0_55, %c3, %c0_56] : memref<1x4x16x16xf32, #tpu.memory_space<vmem>>, vector<1x4x1x16xf32>
    %361 = vector.shape_cast %360 : vector<1x4x1x16xf32> to vector<4x16xf32>
    %362 = arith.mulf %361, %359 : vector<4x16xf32>
    %363 = vector.extract_strided_slice %1 {offsets = [0, 0], sizes = [3, 1], strides = [1, 1]} : vector<3x4xf32> to vector<3x1xf32>
    %364 = vector.extract_strided_slice %362 {offsets = [0, 0], sizes = [1, 16], strides = [1, 1]} : vector<4x16xf32> to vector<1x16xf32>
    %365 = vector.broadcast %363 : vector<3x1xf32> to vector<3x16xf32>
    %366 = vector.broadcast %364 : vector<1x16xf32> to vector<3x16xf32>
    %367 = arith.mulf %365, %366 : vector<3x16xf32>
    %368 = arith.addf %4, %367 : vector<3x16xf32>
    %369 = vector.extract_strided_slice %1 {offsets = [0, 1], sizes = [3, 1], strides = [1, 1]} : vector<3x4xf32> to vector<3x1xf32>
    %370 = vector.extract_strided_slice %362 {offsets = [1, 0], sizes = [1, 16], strides = [1, 1]} : vector<4x16xf32> to vector<1x16xf32>
    %371 = vector.broadcast %369 : vector<3x1xf32> to vector<3x16xf32>
    %372 = vector.broadcast %370 : vector<1x16xf32> to vector<3x16xf32>
    %373 = arith.mulf %371, %372 : vector<3x16xf32>
    %374 = arith.addf %368, %373 : vector<3x16xf32>
    %375 = vector.extract_strided_slice %1 {offsets = [0, 2], sizes = [3, 1], strides = [1, 1]} : vector<3x4xf32> to vector<3x1xf32>
    %376 = vector.extract_strided_slice %362 {offsets = [2, 0], sizes = [1, 16], strides = [1, 1]} : vector<4x16xf32> to vector<1x16xf32>
    %377 = vector.broadcast %375 : vector<3x1xf32> to vector<3x16xf32>
    %378 = vector.broadcast %376 : vector<1x16xf32> to vector<3x16xf32>
    %379 = arith.mulf %377, %378 : vector<3x16xf32>
    %380 = arith.addf %374, %379 : vector<3x16xf32>
    %381 = vector.extract_strided_slice %1 {offsets = [0, 3], sizes = [3, 1], strides = [1, 1]} : vector<3x4xf32> to vector<3x1xf32>
    %382 = vector.extract_strided_slice %362 {offsets = [3, 0], sizes = [1, 16], strides = [1, 1]} : vector<4x16xf32> to vector<1x16xf32>
    %383 = vector.broadcast %381 : vector<3x1xf32> to vector<3x16xf32>
    %384 = vector.broadcast %382 : vector<1x16xf32> to vector<3x16xf32>
    %385 = arith.mulf %383, %384 : vector<3x16xf32>
    %386 = arith.addf %380, %385 : vector<3x16xf32>
    %c0_57 = arith.constant 0 : index
    %c0_58 = arith.constant 0 : index
    %c3_59 = arith.constant 3 : index
    %c0_60 = arith.constant 0 : index
    %387 = vector.load %arg10[%c0_57, %c0_58, %c3_59, %c0_60] : memref<1x3x16x16xf32, #tpu.memory_space<vmem>>, vector<1x3x1x16xf32>
    %388 = vector.shape_cast %387 : vector<1x3x1x16xf32> to vector<3x16xf32>
    %389 = vector.shape_cast %386 : vector<3x16xf32> to vector<1x3x1x16xf32>
    tpu.vector_store %arg10[%c0_57, %c0_58, %c3_59, %c0_60], %389 {strides = array<i32>} : memref<1x3x16x16xf32, #tpu.memory_space<vmem>>, vector<1x3x1x16xf32>,
    %c4_i32 = arith.constant 4 : i32
    %390 = arith.addi %5, %c4_i32 : i32
    %391 = arith.index_cast %390 : i32 to index
    %392 = memref.load %arg2[%391] : memref<16xi32, #tpu.memory_space<smem>>
    %393 = arith.index_cast %390 : i32 to index
    %394 = memref.load %arg3[%393] : memref<16xi32, #tpu.memory_space<smem>>
    %395 = arith.index_cast %390 : i32 to index
    %396 = memref.load %arg4[%395] : memref<16xi32, #tpu.memory_space<smem>>
    %397 = arith.sitofp %396 : i32 to f32
    %cst_61 = arith.constant 5.96046448E-8 : f32
    %398 = arith.mulf %397, %cst_61 : f32
    %c0_62 = arith.constant 0 : index
    %399 = arith.index_cast %392 : i32 to index
    %c0_63 = arith.constant 0 : index
    %c0_64 = arith.constant 0 : index
    %400 = vector.load %arg6[%c0_62, %399, %c0_63, %c0_64] : memref<1x8x4x8xf32, #tpu.memory_space<vmem>>, vector<1x1x4x8xf32>
    %401 = vector.shape_cast %400 : vector<1x1x4x8xf32> to vector<4x8xf32>
    %c0_65 = arith.constant 0 : index
    %402 = arith.index_cast %394 : i32 to index
    %c0_66 = arith.constant 0 : index
    %c0_67 = arith.constant 0 : index
    %403 = vector.load %arg6[%c0_65, %402, %c0_66, %c0_67] : memref<1x8x4x8xf32, #tpu.memory_space<vmem>>, vector<1x1x4x8xf32>
    %404 = vector.shape_cast %403 : vector<1x1x4x8xf32> to vector<4x8xf32>
    %405 = arith.subf %404, %401 : vector<4x8xf32>
    %406 = vector.broadcast %398 : f32 to vector<4x8xf32>
    %407 = arith.mulf %406, %405 : vector<4x8xf32>
    %408 = arith.addf %401, %407 : vector<4x8xf32>
    %409 = vector.extract_strided_slice %408 {offsets = [0, 0], sizes = [4, 1], strides = [1, 1]} : vector<4x8xf32> to vector<4x1xf32>
    %410 = vector.extract_strided_slice %0 {offsets = [0, 0], sizes = [1, 16], strides = [1, 1]} : vector<8x16xf32> to vector<1x16xf32>
    %411 = vector.broadcast %409 : vector<4x1xf32> to vector<4x16xf32>
    %412 = vector.broadcast %410 : vector<1x16xf32> to vector<4x16xf32>
    %413 = arith.mulf %411, %412 : vector<4x16xf32>
    %414 = vector.extract_strided_slice %408 {offsets = [0, 1], sizes = [4, 1], strides = [1, 1]} : vector<4x8xf32> to vector<4x1xf32>
    %415 = vector.extract_strided_slice %0 {offsets = [1, 0], sizes = [1, 16], strides = [1, 1]} : vector<8x16xf32> to vector<1x16xf32>
    %416 = vector.broadcast %414 : vector<4x1xf32> to vector<4x16xf32>
    %417 = vector.broadcast %415 : vector<1x16xf32> to vector<4x16xf32>
    %418 = arith.mulf %416, %417 : vector<4x16xf32>
    %419 = arith.addf %413, %418 : vector<4x16xf32>
    %420 = vector.extract_strided_slice %408 {offsets = [0, 2], sizes = [4, 1], strides = [1, 1]} : vector<4x8xf32> to vector<4x1xf32>
    %421 = vector.extract_strided_slice %0 {offsets = [2, 0], sizes = [1, 16], strides = [1, 1]} : vector<8x16xf32> to vector<1x16xf32>
    %422 = vector.broadcast %420 : vector<4x1xf32> to vector<4x16xf32>
    %423 = vector.broadcast %421 : vector<1x16xf32> to vector<4x16xf32>
    %424 = arith.mulf %422, %423 : vector<4x16xf32>
    %425 = arith.addf %419, %424 : vector<4x16xf32>
    %426 = vector.extract_strided_slice %408 {offsets = [0, 3], sizes = [4, 1], strides = [1, 1]} : vector<4x8xf32> to vector<4x1xf32>
    %427 = vector.extract_strided_slice %0 {offsets = [3, 0], sizes = [1, 16], strides = [1, 1]} : vector<8x16xf32> to vector<1x16xf32>
    %428 = vector.broadcast %426 : vector<4x1xf32> to vector<4x16xf32>
    %429 = vector.broadcast %427 : vector<1x16xf32> to vector<4x16xf32>
    %430 = arith.mulf %428, %429 : vector<4x16xf32>
    %431 = arith.addf %425, %430 : vector<4x16xf32>
    %432 = vector.extract_strided_slice %408 {offsets = [0, 4], sizes = [4, 1], strides = [1, 1]} : vector<4x8xf32> to vector<4x1xf32>
    %433 = vector.extract_strided_slice %0 {offsets = [4, 0], sizes = [1, 16], strides = [1, 1]} : vector<8x16xf32> to vector<1x16xf32>
    %434 = vector.broadcast %432 : vector<4x1xf32> to vector<4x16xf32>
    %435 = vector.broadcast %433 : vector<1x16xf32> to vector<4x16xf32>
    %436 = arith.mulf %434, %435 : vector<4x16xf32>
    %437 = arith.addf %431, %436 : vector<4x16xf32>
    %438 = vector.extract_strided_slice %408 {offsets = [0, 5], sizes = [4, 1], strides = [1, 1]} : vector<4x8xf32> to vector<4x1xf32>
    %439 = vector.extract_strided_slice %0 {offsets = [5, 0], sizes = [1, 16], strides = [1, 1]} : vector<8x16xf32> to vector<1x16xf32>
    %440 = vector.broadcast %438 : vector<4x1xf32> to vector<4x16xf32>
    %441 = vector.broadcast %439 : vector<1x16xf32> to vector<4x16xf32>
    %442 = arith.mulf %440, %441 : vector<4x16xf32>
    %443 = arith.addf %437, %442 : vector<4x16xf32>
    %444 = vector.extract_strided_slice %408 {offsets = [0, 6], sizes = [4, 1], strides = [1, 1]} : vector<4x8xf32> to vector<4x1xf32>
    %445 = vector.extract_strided_slice %0 {offsets = [6, 0], sizes = [1, 16], strides = [1, 1]} : vector<8x16xf32> to vector<1x16xf32>
    %446 = vector.broadcast %444 : vector<4x1xf32> to vector<4x16xf32>
    %447 = vector.broadcast %445 : vector<1x16xf32> to vector<4x16xf32>
    %448 = arith.mulf %446, %447 : vector<4x16xf32>
    %449 = arith.addf %443, %448 : vector<4x16xf32>
    %450 = vector.extract_strided_slice %408 {offsets = [0, 7], sizes = [4, 1], strides = [1, 1]} : vector<4x8xf32> to vector<4x1xf32>
    %451 = vector.extract_strided_slice %0 {offsets = [7, 0], sizes = [1, 16], strides = [1, 1]} : vector<8x16xf32> to vector<1x16xf32>
    %452 = vector.broadcast %450 : vector<4x1xf32> to vector<4x16xf32>
    %453 = vector.broadcast %451 : vector<1x16xf32> to vector<4x16xf32>
    %454 = arith.mulf %452, %453 : vector<4x16xf32>
    %455 = arith.addf %449, %454 : vector<4x16xf32>
    %c0_68 = arith.constant 0 : index
    %c0_69 = arith.constant 0 : index
    %c4 = arith.constant 4 : index
    %c0_70 = arith.constant 0 : index
    %456 = vector.load %arg5[%c0_68, %c0_69, %c4, %c0_70] : memref<1x4x16x16xf32, #tpu.memory_space<vmem>>, vector<1x4x1x16xf32>
    %457 = vector.shape_cast %456 : vector<1x4x1x16xf32> to vector<4x16xf32>
    %458 = arith.mulf %457, %455 : vector<4x16xf32>
    %459 = vector.extract_strided_slice %1 {offsets = [0, 0], sizes = [3, 1], strides = [1, 1]} : vector<3x4xf32> to vector<3x1xf32>
    %460 = vector.extract_strided_slice %458 {offsets = [0, 0], sizes = [1, 16], strides = [1, 1]} : vector<4x16xf32> to vector<1x16xf32>
    %461 = vector.broadcast %459 : vector<3x1xf32> to vector<3x16xf32>
    %462 = vector.broadcast %460 : vector<1x16xf32> to vector<3x16xf32>
    %463 = arith.mulf %461, %462 : vector<3x16xf32>
    %464 = arith.addf %4, %463 : vector<3x16xf32>
    %465 = vector.extract_strided_slice %1 {offsets = [0, 1], sizes = [3, 1], strides = [1, 1]} : vector<3x4xf32> to vector<3x1xf32>
    %466 = vector.extract_strided_slice %458 {offsets = [1, 0], sizes = [1, 16], strides = [1, 1]} : vector<4x16xf32> to vector<1x16xf32>
    %467 = vector.broadcast %465 : vector<3x1xf32> to vector<3x16xf32>
    %468 = vector.broadcast %466 : vector<1x16xf32> to vector<3x16xf32>
    %469 = arith.mulf %467, %468 : vector<3x16xf32>
    %470 = arith.addf %464, %469 : vector<3x16xf32>
    %471 = vector.extract_strided_slice %1 {offsets = [0, 2], sizes = [3, 1], strides = [1, 1]} : vector<3x4xf32> to vector<3x1xf32>
    %472 = vector.extract_strided_slice %458 {offsets = [2, 0], sizes = [1, 16], strides = [1, 1]} : vector<4x16xf32> to vector<1x16xf32>
    %473 = vector.broadcast %471 : vector<3x1xf32> to vector<3x16xf32>
    %474 = vector.broadcast %472 : vector<1x16xf32> to vector<3x16xf32>
    %475 = arith.mulf %473, %474 : vector<3x16xf32>
    %476 = arith.addf %470, %475 : vector<3x16xf32>
    %477 = vector.extract_strided_slice %1 {offsets = [0, 3], sizes = [3, 1], strides = [1, 1]} : vector<3x4xf32> to vector<3x1xf32>
    %478 = vector.extract_strided_slice %458 {offsets = [3, 0], sizes = [1, 16], strides = [1, 1]} : vector<4x16xf32> to vector<1x16xf32>
    %479 = vector.broadcast %477 : vector<3x1xf32> to vector<3x16xf32>
    %480 = vector.broadcast %478 : vector<1x16xf32> to vector<3x16xf32>
    %481 = arith.mulf %479, %480 : vector<3x16xf32>
    %482 = arith.addf %476, %481 : vector<3x16xf32>
    %c0_71 = arith.constant 0 : index
    %c0_72 = arith.constant 0 : index
    %c4_73 = arith.constant 4 : index
    %c0_74 = arith.constant 0 : index
    %483 = vector.load %arg10[%c0_71, %c0_72, %c4_73, %c0_74] : memref<1x3x16x16xf32, #tpu.memory_space<vmem>>, vector<1x3x1x16xf32>
    %484 = vector.shape_cast %483 : vector<1x3x1x16xf32> to vector<3x16xf32>
    %485 = vector.shape_cast %482 : vector<3x16xf32> to vector<1x3x1x16xf32>
    tpu.vector_store %arg10[%c0_71, %c0_72, %c4_73, %c0_74], %485 {strides = array<i32>} : memref<1x3x16x16xf32, #tpu.memory_space<vmem>>, vector<1x3x1x16xf32>,
    %c5_i32 = arith.constant 5 : i32
    %486 = arith.addi %5, %c5_i32 : i32
    %487 = arith.index_cast %486 : i32 to index
    %488 = memref.load %arg2[%487] : memref<16xi32, #tpu.memory_space<smem>>
    %489 = arith.index_cast %486 : i32 to index
    %490 = memref.load %arg3[%489] : memref<16xi32, #tpu.memory_space<smem>>
    %491 = arith.index_cast %486 : i32 to index
    %492 = memref.load %arg4[%491] : memref<16xi32, #tpu.memory_space<smem>>
    %493 = arith.sitofp %492 : i32 to f32
    %cst_75 = arith.constant 5.96046448E-8 : f32
    %494 = arith.mulf %493, %cst_75 : f32
    %c0_76 = arith.constant 0 : index
    %495 = arith.index_cast %488 : i32 to index
    %c0_77 = arith.constant 0 : index
    %c0_78 = arith.constant 0 : index
    %496 = vector.load %arg6[%c0_76, %495, %c0_77, %c0_78] : memref<1x8x4x8xf32, #tpu.memory_space<vmem>>, vector<1x1x4x8xf32>
    %497 = vector.shape_cast %496 : vector<1x1x4x8xf32> to vector<4x8xf32>
    %c0_79 = arith.constant 0 : index
    %498 = arith.index_cast %490 : i32 to index
    %c0_80 = arith.constant 0 : index
    %c0_81 = arith.constant 0 : index
    %499 = vector.load %arg6[%c0_79, %498, %c0_80, %c0_81] : memref<1x8x4x8xf32, #tpu.memory_space<vmem>>, vector<1x1x4x8xf32>
    %500 = vector.shape_cast %499 : vector<1x1x4x8xf32> to vector<4x8xf32>
    %501 = arith.subf %500, %497 : vector<4x8xf32>
    %502 = vector.broadcast %494 : f32 to vector<4x8xf32>
    %503 = arith.mulf %502, %501 : vector<4x8xf32>
    %504 = arith.addf %497, %503 : vector<4x8xf32>
    %505 = vector.extract_strided_slice %504 {offsets = [0, 0], sizes = [4, 1], strides = [1, 1]} : vector<4x8xf32> to vector<4x1xf32>
    %506 = vector.extract_strided_slice %0 {offsets = [0, 0], sizes = [1, 16], strides = [1, 1]} : vector<8x16xf32> to vector<1x16xf32>
    %507 = vector.broadcast %505 : vector<4x1xf32> to vector<4x16xf32>
    %508 = vector.broadcast %506 : vector<1x16xf32> to vector<4x16xf32>
    %509 = arith.mulf %507, %508 : vector<4x16xf32>
    %510 = vector.extract_strided_slice %504 {offsets = [0, 1], sizes = [4, 1], strides = [1, 1]} : vector<4x8xf32> to vector<4x1xf32>
    %511 = vector.extract_strided_slice %0 {offsets = [1, 0], sizes = [1, 16], strides = [1, 1]} : vector<8x16xf32> to vector<1x16xf32>
    %512 = vector.broadcast %510 : vector<4x1xf32> to vector<4x16xf32>
    %513 = vector.broadcast %511 : vector<1x16xf32> to vector<4x16xf32>
    %514 = arith.mulf %512, %513 : vector<4x16xf32>
    %515 = arith.addf %509, %514 : vector<4x16xf32>
    %516 = vector.extract_strided_slice %504 {offsets = [0, 2], sizes = [4, 1], strides = [1, 1]} : vector<4x8xf32> to vector<4x1xf32>
    %517 = vector.extract_strided_slice %0 {offsets = [2, 0], sizes = [1, 16], strides = [1, 1]} : vector<8x16xf32> to vector<1x16xf32>
    %518 = vector.broadcast %516 : vector<4x1xf32> to vector<4x16xf32>
    %519 = vector.broadcast %517 : vector<1x16xf32> to vector<4x16xf32>
    %520 = arith.mulf %518, %519 : vector<4x16xf32>
    %521 = arith.addf %515, %520 : vector<4x16xf32>
    %522 = vector.extract_strided_slice %504 {offsets = [0, 3], sizes = [4, 1], strides = [1, 1]} : vector<4x8xf32> to vector<4x1xf32>
    %523 = vector.extract_strided_slice %0 {offsets = [3, 0], sizes = [1, 16], strides = [1, 1]} : vector<8x16xf32> to vector<1x16xf32>
    %524 = vector.broadcast %522 : vector<4x1xf32> to vector<4x16xf32>
    %525 = vector.broadcast %523 : vector<1x16xf32> to vector<4x16xf32>
    %526 = arith.mulf %524, %525 : vector<4x16xf32>
    %527 = arith.addf %521, %526 : vector<4x16xf32>
    %528 = vector.extract_strided_slice %504 {offsets = [0, 4], sizes = [4, 1], strides = [1, 1]} : vector<4x8xf32> to vector<4x1xf32>
    %529 = vector.extract_strided_slice %0 {offsets = [4, 0], sizes = [1, 16], strides = [1, 1]} : vector<8x16xf32> to vector<1x16xf32>
    %530 = vector.broadcast %528 : vector<4x1xf32> to vector<4x16xf32>
    %531 = vector.broadcast %529 : vector<1x16xf32> to vector<4x16xf32>
    %532 = arith.mulf %530, %531 : vector<4x16xf32>
    %533 = arith.addf %527, %532 : vector<4x16xf32>
    %534 = vector.extract_strided_slice %504 {offsets = [0, 5], sizes = [4, 1], strides = [1, 1]} : vector<4x8xf32> to vector<4x1xf32>
    %535 = vector.extract_strided_slice %0 {offsets = [5, 0], sizes = [1, 16], strides = [1, 1]} : vector<8x16xf32> to vector<1x16xf32>
    %536 = vector.broadcast %534 : vector<4x1xf32> to vector<4x16xf32>
    %537 = vector.broadcast %535 : vector<1x16xf32> to vector<4x16xf32>
    %538 = arith.mulf %536, %537 : vector<4x16xf32>
    %539 = arith.addf %533, %538 : vector<4x16xf32>
    %540 = vector.extract_strided_slice %504 {offsets = [0, 6], sizes = [4, 1], strides = [1, 1]} : vector<4x8xf32> to vector<4x1xf32>
    %541 = vector.extract_strided_slice %0 {offsets = [6, 0], sizes = [1, 16], strides = [1, 1]} : vector<8x16xf32> to vector<1x16xf32>
    %542 = vector.broadcast %540 : vector<4x1xf32> to vector<4x16xf32>
    %543 = vector.broadcast %541 : vector<1x16xf32> to vector<4x16xf32>
    %544 = arith.mulf %542, %543 : vector<4x16xf32>
    %545 = arith.addf %539, %544 : vector<4x16xf32>
    %546 = vector.extract_strided_slice %504 {offsets = [0, 7], sizes = [4, 1], strides = [1, 1]} : vector<4x8xf32> to vector<4x1xf32>
    %547 = vector.extract_strided_slice %0 {offsets = [7, 0], sizes = [1, 16], strides = [1, 1]} : vector<8x16xf32> to vector<1x16xf32>
    %548 = vector.broadcast %546 : vector<4x1xf32> to vector<4x16xf32>
    %549 = vector.broadcast %547 : vector<1x16xf32> to vector<4x16xf32>
    %550 = arith.mulf %548, %549 : vector<4x16xf32>
    %551 = arith.addf %545, %550 : vector<4x16xf32>
    %c0_82 = arith.constant 0 : index
    %c0_83 = arith.constant 0 : index
    %c5 = arith.constant 5 : index
    %c0_84 = arith.constant 0 : index
    %552 = vector.load %arg5[%c0_82, %c0_83, %c5, %c0_84] : memref<1x4x16x16xf32, #tpu.memory_space<vmem>>, vector<1x4x1x16xf32>
    %553 = vector.shape_cast %552 : vector<1x4x1x16xf32> to vector<4x16xf32>
    %554 = arith.mulf %553, %551 : vector<4x16xf32>
    %555 = vector.extract_strided_slice %1 {offsets = [0, 0], sizes = [3, 1], strides = [1, 1]} : vector<3x4xf32> to vector<3x1xf32>
    %556 = vector.extract_strided_slice %554 {offsets = [0, 0], sizes = [1, 16], strides = [1, 1]} : vector<4x16xf32> to vector<1x16xf32>
    %557 = vector.broadcast %555 : vector<3x1xf32> to vector<3x16xf32>
    %558 = vector.broadcast %556 : vector<1x16xf32> to vector<3x16xf32>
    %559 = arith.mulf %557, %558 : vector<3x16xf32>
    %560 = arith.addf %4, %559 : vector<3x16xf32>
    %561 = vector.extract_strided_slice %1 {offsets = [0, 1], sizes = [3, 1], strides = [1, 1]} : vector<3x4xf32> to vector<3x1xf32>
    %562 = vector.extract_strided_slice %554 {offsets = [1, 0], sizes = [1, 16], strides = [1, 1]} : vector<4x16xf32> to vector<1x16xf32>
    %563 = vector.broadcast %561 : vector<3x1xf32> to vector<3x16xf32>
    %564 = vector.broadcast %562 : vector<1x16xf32> to vector<3x16xf32>
    %565 = arith.mulf %563, %564 : vector<3x16xf32>
    %566 = arith.addf %560, %565 : vector<3x16xf32>
    %567 = vector.extract_strided_slice %1 {offsets = [0, 2], sizes = [3, 1], strides = [1, 1]} : vector<3x4xf32> to vector<3x1xf32>
    %568 = vector.extract_strided_slice %554 {offsets = [2, 0], sizes = [1, 16], strides = [1, 1]} : vector<4x16xf32> to vector<1x16xf32>
    %569 = vector.broadcast %567 : vector<3x1xf32> to vector<3x16xf32>
    %570 = vector.broadcast %568 : vector<1x16xf32> to vector<3x16xf32>
    %571 = arith.mulf %569, %570 : vector<3x16xf32>
    %572 = arith.addf %566, %571 : vector<3x16xf32>
    %573 = vector.extract_strided_slice %1 {offsets = [0, 3], sizes = [3, 1], strides = [1, 1]} : vector<3x4xf32> to vector<3x1xf32>
    %574 = vector.extract_strided_slice %554 {offsets = [3, 0], sizes = [1, 16], strides = [1, 1]} : vector<4x16xf32> to vector<1x16xf32>
    %575 = vector.broadcast %573 : vector<3x1xf32> to vector<3x16xf32>
    %576 = vector.broadcast %574 : vector<1x16xf32> to vector<3x16xf32>
    %577 = arith.mulf %575, %576 : vector<3x16xf32>
    %578 = arith.addf %572, %577 : vector<3x16xf32>
    %c0_85 = arith.constant 0 : index
    %c0_86 = arith.constant 0 : index
    %c5_87 = arith.constant 5 : index
    %c0_88 = arith.constant 0 : index
    %579 = vector.load %arg10[%c0_85, %c0_86, %c5_87, %c0_88] : memref<1x3x16x16xf32, #tpu.memory_space<vmem>>, vector<1x3x1x16xf32>
    %580 = vector.shape_cast %579 : vector<1x3x1x16xf32> to vector<3x16xf32>
    %581 = vector.shape_cast %578 : vector<3x16xf32> to vector<1x3x1x16xf32>
    tpu.vector_store %arg10[%c0_85, %c0_86, %c5_87, %c0_88], %581 {strides = array<i32>} : memref<1x3x16x16xf32, #tpu.memory_space<vmem>>, vector<1x3x1x16xf32>,
    %c6_i32 = arith.constant 6 : i32
    %582 = arith.addi %5, %c6_i32 : i32
    %583 = arith.index_cast %582 : i32 to index
    %584 = memref.load %arg2[%583] : memref<16xi32, #tpu.memory_space<smem>>
    %585 = arith.index_cast %582 : i32 to index
    %586 = memref.load %arg3[%585] : memref<16xi32, #tpu.memory_space<smem>>
    %587 = arith.index_cast %582 : i32 to index
    %588 = memref.load %arg4[%587] : memref<16xi32, #tpu.memory_space<smem>>
    %589 = arith.sitofp %588 : i32 to f32
    %cst_89 = arith.constant 5.96046448E-8 : f32
    %590 = arith.mulf %589, %cst_89 : f32
    %c0_90 = arith.constant 0 : index
    %591 = arith.index_cast %584 : i32 to index
    %c0_91 = arith.constant 0 : index
    %c0_92 = arith.constant 0 : index
    %592 = vector.load %arg6[%c0_90, %591, %c0_91, %c0_92] : memref<1x8x4x8xf32, #tpu.memory_space<vmem>>, vector<1x1x4x8xf32>
    %593 = vector.shape_cast %592 : vector<1x1x4x8xf32> to vector<4x8xf32>
    %c0_93 = arith.constant 0 : index
    %594 = arith.index_cast %586 : i32 to index
    %c0_94 = arith.constant 0 : index
    %c0_95 = arith.constant 0 : index
    %595 = vector.load %arg6[%c0_93, %594, %c0_94, %c0_95] : memref<1x8x4x8xf32, #tpu.memory_space<vmem>>, vector<1x1x4x8xf32>
    %596 = vector.shape_cast %595 : vector<1x1x4x8xf32> to vector<4x8xf32>
    %597 = arith.subf %596, %593 : vector<4x8xf32>
    %598 = vector.broadcast %590 : f32 to vector<4x8xf32>
    %599 = arith.mulf %598, %597 : vector<4x8xf32>
    %600 = arith.addf %593, %599 : vector<4x8xf32>
    %601 = vector.extract_strided_slice %600 {offsets = [0, 0], sizes = [4, 1], strides = [1, 1]} : vector<4x8xf32> to vector<4x1xf32>
    %602 = vector.extract_strided_slice %0 {offsets = [0, 0], sizes = [1, 16], strides = [1, 1]} : vector<8x16xf32> to vector<1x16xf32>
    %603 = vector.broadcast %601 : vector<4x1xf32> to vector<4x16xf32>
    %604 = vector.broadcast %602 : vector<1x16xf32> to vector<4x16xf32>
    %605 = arith.mulf %603, %604 : vector<4x16xf32>
    %606 = vector.extract_strided_slice %600 {offsets = [0, 1], sizes = [4, 1], strides = [1, 1]} : vector<4x8xf32> to vector<4x1xf32>
    %607 = vector.extract_strided_slice %0 {offsets = [1, 0], sizes = [1, 16], strides = [1, 1]} : vector<8x16xf32> to vector<1x16xf32>
    %608 = vector.broadcast %606 : vector<4x1xf32> to vector<4x16xf32>
    %609 = vector.broadcast %607 : vector<1x16xf32> to vector<4x16xf32>
    %610 = arith.mulf %608, %609 : vector<4x16xf32>
    %611 = arith.addf %605, %610 : vector<4x16xf32>
    %612 = vector.extract_strided_slice %600 {offsets = [0, 2], sizes = [4, 1], strides = [1, 1]} : vector<4x8xf32> to vector<4x1xf32>
    %613 = vector.extract_strided_slice %0 {offsets = [2, 0], sizes = [1, 16], strides = [1, 1]} : vector<8x16xf32> to vector<1x16xf32>
    %614 = vector.broadcast %612 : vector<4x1xf32> to vector<4x16xf32>
    %615 = vector.broadcast %613 : vector<1x16xf32> to vector<4x16xf32>
    %616 = arith.mulf %614, %615 : vector<4x16xf32>
    %617 = arith.addf %611, %616 : vector<4x16xf32>
    %618 = vector.extract_strided_slice %600 {offsets = [0, 3], sizes = [4, 1], strides = [1, 1]} : vector<4x8xf32> to vector<4x1xf32>
    %619 = vector.extract_strided_slice %0 {offsets = [3, 0], sizes = [1, 16], strides = [1, 1]} : vector<8x16xf32> to vector<1x16xf32>
    %620 = vector.broadcast %618 : vector<4x1xf32> to vector<4x16xf32>
    %621 = vector.broadcast %619 : vector<1x16xf32> to vector<4x16xf32>
    %622 = arith.mulf %620, %621 : vector<4x16xf32>
    %623 = arith.addf %617, %622 : vector<4x16xf32>
    %624 = vector.extract_strided_slice %600 {offsets = [0, 4], sizes = [4, 1], strides = [1, 1]} : vector<4x8xf32> to vector<4x1xf32>
    %625 = vector.extract_strided_slice %0 {offsets = [4, 0], sizes = [1, 16], strides = [1, 1]} : vector<8x16xf32> to vector<1x16xf32>
    %626 = vector.broadcast %624 : vector<4x1xf32> to vector<4x16xf32>
    %627 = vector.broadcast %625 : vector<1x16xf32> to vector<4x16xf32>
    %628 = arith.mulf %626, %627 : vector<4x16xf32>
    %629 = arith.addf %623, %628 : vector<4x16xf32>
    %630 = vector.extract_strided_slice %600 {offsets = [0, 5], sizes = [4, 1], strides = [1, 1]} : vector<4x8xf32> to vector<4x1xf32>
    %631 = vector.extract_strided_slice %0 {offsets = [5, 0], sizes = [1, 16], strides = [1, 1]} : vector<8x16xf32> to vector<1x16xf32>
    %632 = vector.broadcast %630 : vector<4x1xf32> to vector<4x16xf32>
    %633 = vector.broadcast %631 : vector<1x16xf32> to vector<4x16xf32>
    %634 = arith.mulf %632, %633 : vector<4x16xf32>
    %635 = arith.addf %629, %634 : vector<4x16xf32>
    %636 = vector.extract_strided_slice %600 {offsets = [0, 6], sizes = [4, 1], strides = [1, 1]} : vector<4x8xf32> to vector<4x1xf32>
    %637 = vector.extract_strided_slice %0 {offsets = [6, 0], sizes = [1, 16], strides = [1, 1]} : vector<8x16xf32> to vector<1x16xf32>
    %638 = vector.broadcast %636 : vector<4x1xf32> to vector<4x16xf32>
    %639 = vector.broadcast %637 : vector<1x16xf32> to vector<4x16xf32>
    %640 = arith.mulf %638, %639 : vector<4x16xf32>
    %641 = arith.addf %635, %640 : vector<4x16xf32>
    %642 = vector.extract_strided_slice %600 {offsets = [0, 7], sizes = [4, 1], strides = [1, 1]} : vector<4x8xf32> to vector<4x1xf32>
    %643 = vector.extract_strided_slice %0 {offsets = [7, 0], sizes = [1, 16], strides = [1, 1]} : vector<8x16xf32> to vector<1x16xf32>
    %644 = vector.broadcast %642 : vector<4x1xf32> to vector<4x16xf32>
    %645 = vector.broadcast %643 : vector<1x16xf32> to vector<4x16xf32>
    %646 = arith.mulf %644, %645 : vector<4x16xf32>
    %647 = arith.addf %641, %646 : vector<4x16xf32>
    %c0_96 = arith.constant 0 : index
    %c0_97 = arith.constant 0 : index
    %c6 = arith.constant 6 : index
    %c0_98 = arith.constant 0 : index
    %648 = vector.load %arg5[%c0_96, %c0_97, %c6, %c0_98] : memref<1x4x16x16xf32, #tpu.memory_space<vmem>>, vector<1x4x1x16xf32>
    %649 = vector.shape_cast %648 : vector<1x4x1x16xf32> to vector<4x16xf32>
    %650 = arith.mulf %649, %647 : vector<4x16xf32>
    %651 = vector.extract_strided_slice %1 {offsets = [0, 0], sizes = [3, 1], strides = [1, 1]} : vector<3x4xf32> to vector<3x1xf32>
    %652 = vector.extract_strided_slice %650 {offsets = [0, 0], sizes = [1, 16], strides = [1, 1]} : vector<4x16xf32> to vector<1x16xf32>
    %653 = vector.broadcast %651 : vector<3x1xf32> to vector<3x16xf32>
    %654 = vector.broadcast %652 : vector<1x16xf32> to vector<3x16xf32>
    %655 = arith.mulf %653, %654 : vector<3x16xf32>
    %656 = arith.addf %4, %655 : vector<3x16xf32>
    %657 = vector.extract_strided_slice %1 {offsets = [0, 1], sizes = [3, 1], strides = [1, 1]} : vector<3x4xf32> to vector<3x1xf32>
    %658 = vector.extract_strided_slice %650 {offsets = [1, 0], sizes = [1, 16], strides = [1, 1]} : vector<4x16xf32> to vector<1x16xf32>
    %659 = vector.broadcast %657 : vector<3x1xf32> to vector<3x16xf32>
    %660 = vector.broadcast %658 : vector<1x16xf32> to vector<3x16xf32>
    %661 = arith.mulf %659, %660 : vector<3x16xf32>
    %662 = arith.addf %656, %661 : vector<3x16xf32>
    %663 = vector.extract_strided_slice %1 {offsets = [0, 2], sizes = [3, 1], strides = [1, 1]} : vector<3x4xf32> to vector<3x1xf32>
    %664 = vector.extract_strided_slice %650 {offsets = [2, 0], sizes = [1, 16], strides = [1, 1]} : vector<4x16xf32> to vector<1x16xf32>
    %665 = vector.broadcast %663 : vector<3x1xf32> to vector<3x16xf32>
    %666 = vector.broadcast %664 : vector<1x16xf32> to vector<3x16xf32>
    %667 = arith.mulf %665, %666 : vector<3x16xf32>
    %668 = arith.addf %662, %667 : vector<3x16xf32>
    %669 = vector.extract_strided_slice %1 {offsets = [0, 3], sizes = [3, 1], strides = [1, 1]} : vector<3x4xf32> to vector<3x1xf32>
    %670 = vector.extract_strided_slice %650 {offsets = [3, 0], sizes = [1, 16], strides = [1, 1]} : vector<4x16xf32> to vector<1x16xf32>
    %671 = vector.broadcast %669 : vector<3x1xf32> to vector<3x16xf32>
    %672 = vector.broadcast %670 : vector<1x16xf32> to vector<3x16xf32>
    %673 = arith.mulf %671, %672 : vector<3x16xf32>
    %674 = arith.addf %668, %673 : vector<3x16xf32>
    %c0_99 = arith.constant 0 : index
    %c0_100 = arith.constant 0 : index
    %c6_101 = arith.constant 6 : index
    %c0_102 = arith.constant 0 : index
    %675 = vector.load %arg10[%c0_99, %c0_100, %c6_101, %c0_102] : memref<1x3x16x16xf32, #tpu.memory_space<vmem>>, vector<1x3x1x16xf32>
    %676 = vector.shape_cast %675 : vector<1x3x1x16xf32> to vector<3x16xf32>
    %677 = vector.shape_cast %674 : vector<3x16xf32> to vector<1x3x1x16xf32>
    tpu.vector_store %arg10[%c0_99, %c0_100, %c6_101, %c0_102], %677 {strides = array<i32>} : memref<1x3x16x16xf32, #tpu.memory_space<vmem>>, vector<1x3x1x16xf32>,
    %c7_i32 = arith.constant 7 : i32
    %678 = arith.addi %5, %c7_i32 : i32
    %679 = arith.index_cast %678 : i32 to index
    %680 = memref.load %arg2[%679] : memref<16xi32, #tpu.memory_space<smem>>
    %681 = arith.index_cast %678 : i32 to index
    %682 = memref.load %arg3[%681] : memref<16xi32, #tpu.memory_space<smem>>
    %683 = arith.index_cast %678 : i32 to index
    %684 = memref.load %arg4[%683] : memref<16xi32, #tpu.memory_space<smem>>
    %685 = arith.sitofp %684 : i32 to f32
    %cst_103 = arith.constant 5.96046448E-8 : f32
    %686 = arith.mulf %685, %cst_103 : f32
    %c0_104 = arith.constant 0 : index
    %687 = arith.index_cast %680 : i32 to index
    %c0_105 = arith.constant 0 : index
    %c0_106 = arith.constant 0 : index
    %688 = vector.load %arg6[%c0_104, %687, %c0_105, %c0_106] : memref<1x8x4x8xf32, #tpu.memory_space<vmem>>, vector<1x1x4x8xf32>
    %689 = vector.shape_cast %688 : vector<1x1x4x8xf32> to vector<4x8xf32>
    %c0_107 = arith.constant 0 : index
    %690 = arith.index_cast %682 : i32 to index
    %c0_108 = arith.constant 0 : index
    %c0_109 = arith.constant 0 : index
    %691 = vector.load %arg6[%c0_107, %690, %c0_108, %c0_109] : memref<1x8x4x8xf32, #tpu.memory_space<vmem>>, vector<1x1x4x8xf32>
    %692 = vector.shape_cast %691 : vector<1x1x4x8xf32> to vector<4x8xf32>
    %693 = arith.subf %692, %689 : vector<4x8xf32>
    %694 = vector.broadcast %686 : f32 to vector<4x8xf32>
    %695 = arith.mulf %694, %693 : vector<4x8xf32>
    %696 = arith.addf %689, %695 : vector<4x8xf32>
    %697 = vector.extract_strided_slice %696 {offsets = [0, 0], sizes = [4, 1], strides = [1, 1]} : vector<4x8xf32> to vector<4x1xf32>
    %698 = vector.extract_strided_slice %0 {offsets = [0, 0], sizes = [1, 16], strides = [1, 1]} : vector<8x16xf32> to vector<1x16xf32>
    %699 = vector.broadcast %697 : vector<4x1xf32> to vector<4x16xf32>
    %700 = vector.broadcast %698 : vector<1x16xf32> to vector<4x16xf32>
    %701 = arith.mulf %699, %700 : vector<4x16xf32>
    %702 = vector.extract_strided_slice %696 {offsets = [0, 1], sizes = [4, 1], strides = [1, 1]} : vector<4x8xf32> to vector<4x1xf32>
    %703 = vector.extract_strided_slice %0 {offsets = [1, 0], sizes = [1, 16], strides = [1, 1]} : vector<8x16xf32> to vector<1x16xf32>
    %704 = vector.broadcast %702 : vector<4x1xf32> to vector<4x16xf32>
    %705 = vector.broadcast %703 : vector<1x16xf32> to vector<4x16xf32>
    %706 = arith.mulf %704, %705 : vector<4x16xf32>
    %707 = arith.addf %701, %706 : vector<4x16xf32>
    %708 = vector.extract_strided_slice %696 {offsets = [0, 2], sizes = [4, 1], strides = [1, 1]} : vector<4x8xf32> to vector<4x1xf32>
    %709 = vector.extract_strided_slice %0 {offsets = [2, 0], sizes = [1, 16], strides = [1, 1]} : vector<8x16xf32> to vector<1x16xf32>
    %710 = vector.broadcast %708 : vector<4x1xf32> to vector<4x16xf32>
    %711 = vector.broadcast %709 : vector<1x16xf32> to vector<4x16xf32>
    %712 = arith.mulf %710, %711 : vector<4x16xf32>
    %713 = arith.addf %707, %712 : vector<4x16xf32>
    %714 = vector.extract_strided_slice %696 {offsets = [0, 3], sizes = [4, 1], strides = [1, 1]} : vector<4x8xf32> to vector<4x1xf32>
    %715 = vector.extract_strided_slice %0 {offsets = [3, 0], sizes = [1, 16], strides = [1, 1]} : vector<8x16xf32> to vector<1x16xf32>
    %716 = vector.broadcast %714 : vector<4x1xf32> to vector<4x16xf32>
    %717 = vector.broadcast %715 : vector<1x16xf32> to vector<4x16xf32>
    %718 = arith.mulf %716, %717 : vector<4x16xf32>
    %719 = arith.addf %713, %718 : vector<4x16xf32>
    %720 = vector.extract_strided_slice %696 {offsets = [0, 4], sizes = [4, 1], strides = [1, 1]} : vector<4x8xf32> to vector<4x1xf32>
    %721 = vector.extract_strided_slice %0 {offsets = [4, 0], sizes = [1, 16], strides = [1, 1]} : vector<8x16xf32> to vector<1x16xf32>
    %722 = vector.broadcast %720 : vector<4x1xf32> to vector<4x16xf32>
    %723 = vector.broadcast %721 : vector<1x16xf32> to vector<4x16xf32>
    %724 = arith.mulf %722, %723 : vector<4x16xf32>
    %725 = arith.addf %719, %724 : vector<4x16xf32>
    %726 = vector.extract_strided_slice %696 {offsets = [0, 5], sizes = [4, 1], strides = [1, 1]} : vector<4x8xf32> to vector<4x1xf32>
    %727 = vector.extract_strided_slice %0 {offsets = [5, 0], sizes = [1, 16], strides = [1, 1]} : vector<8x16xf32> to vector<1x16xf32>
    %728 = vector.broadcast %726 : vector<4x1xf32> to vector<4x16xf32>
    %729 = vector.broadcast %727 : vector<1x16xf32> to vector<4x16xf32>
    %730 = arith.mulf %728, %729 : vector<4x16xf32>
    %731 = arith.addf %725, %730 : vector<4x16xf32>
    %732 = vector.extract_strided_slice %696 {offsets = [0, 6], sizes = [4, 1], strides = [1, 1]} : vector<4x8xf32> to vector<4x1xf32>
    %733 = vector.extract_strided_slice %0 {offsets = [6, 0], sizes = [1, 16], strides = [1, 1]} : vector<8x16xf32> to vector<1x16xf32>
    %734 = vector.broadcast %732 : vector<4x1xf32> to vector<4x16xf32>
    %735 = vector.broadcast %733 : vector<1x16xf32> to vector<4x16xf32>
    %736 = arith.mulf %734, %735 : vector<4x16xf32>
    %737 = arith.addf %731, %736 : vector<4x16xf32>
    %738 = vector.extract_strided_slice %696 {offsets = [0, 7], sizes = [4, 1], strides = [1, 1]} : vector<4x8xf32> to vector<4x1xf32>
    %739 = vector.extract_strided_slice %0 {offsets = [7, 0], sizes = [1, 16], strides = [1, 1]} : vector<8x16xf32> to vector<1x16xf32>
    %740 = vector.broadcast %738 : vector<4x1xf32> to vector<4x16xf32>
    %741 = vector.broadcast %739 : vector<1x16xf32> to vector<4x16xf32>
    %742 = arith.mulf %740, %741 : vector<4x16xf32>
    %743 = arith.addf %737, %742 : vector<4x16xf32>
    %c0_110 = arith.constant 0 : index
    %c0_111 = arith.constant 0 : index
    %c7 = arith.constant 7 : index
    %c0_112 = arith.constant 0 : index
    %744 = vector.load %arg5[%c0_110, %c0_111, %c7, %c0_112] : memref<1x4x16x16xf32, #tpu.memory_space<vmem>>, vector<1x4x1x16xf32>
    %745 = vector.shape_cast %744 : vector<1x4x1x16xf32> to vector<4x16xf32>
    %746 = arith.mulf %745, %743 : vector<4x16xf32>
    %747 = vector.extract_strided_slice %1 {offsets = [0, 0], sizes = [3, 1], strides = [1, 1]} : vector<3x4xf32> to vector<3x1xf32>
    %748 = vector.extract_strided_slice %746 {offsets = [0, 0], sizes = [1, 16], strides = [1, 1]} : vector<4x16xf32> to vector<1x16xf32>
    %749 = vector.broadcast %747 : vector<3x1xf32> to vector<3x16xf32>
    %750 = vector.broadcast %748 : vector<1x16xf32> to vector<3x16xf32>
    %751 = arith.mulf %749, %750 : vector<3x16xf32>
    %752 = arith.addf %4, %751 : vector<3x16xf32>
    %753 = vector.extract_strided_slice %1 {offsets = [0, 1], sizes = [3, 1], strides = [1, 1]} : vector<3x4xf32> to vector<3x1xf32>
    %754 = vector.extract_strided_slice %746 {offsets = [1, 0], sizes = [1, 16], strides = [1, 1]} : vector<4x16xf32> to vector<1x16xf32>
    %755 = vector.broadcast %753 : vector<3x1xf32> to vector<3x16xf32>
    %756 = vector.broadcast %754 : vector<1x16xf32> to vector<3x16xf32>
    %757 = arith.mulf %755, %756 : vector<3x16xf32>
    %758 = arith.addf %752, %757 : vector<3x16xf32>
    %759 = vector.extract_strided_slice %1 {offsets = [0, 2], sizes = [3, 1], strides = [1, 1]} : vector<3x4xf32> to vector<3x1xf32>
    %760 = vector.extract_strided_slice %746 {offsets = [2, 0], sizes = [1, 16], strides = [1, 1]} : vector<4x16xf32> to vector<1x16xf32>
    %761 = vector.broadcast %759 : vector<3x1xf32> to vector<3x16xf32>
    %762 = vector.broadcast %760 : vector<1x16xf32> to vector<3x16xf32>
    %763 = arith.mulf %761, %762 : vector<3x16xf32>
    %764 = arith.addf %758, %763 : vector<3x16xf32>
    %765 = vector.extract_strided_slice %1 {offsets = [0, 3], sizes = [3, 1], strides = [1, 1]} : vector<3x4xf32> to vector<3x1xf32>
    %766 = vector.extract_strided_slice %746 {offsets = [3, 0], sizes = [1, 16], strides = [1, 1]} : vector<4x16xf32> to vector<1x16xf32>
    %767 = vector.broadcast %765 : vector<3x1xf32> to vector<3x16xf32>
    %768 = vector.broadcast %766 : vector<1x16xf32> to vector<3x16xf32>
    %769 = arith.mulf %767, %768 : vector<3x16xf32>
    %770 = arith.addf %764, %769 : vector<3x16xf32>
    %c0_113 = arith.constant 0 : index
    %c0_114 = arith.constant 0 : index
    %c7_115 = arith.constant 7 : index
    %c0_116 = arith.constant 0 : index
    %771 = vector.load %arg10[%c0_113, %c0_114, %c7_115, %c0_116] : memref<1x3x16x16xf32, #tpu.memory_space<vmem>>, vector<1x3x1x16xf32>
    %772 = vector.shape_cast %771 : vector<1x3x1x16xf32> to vector<3x16xf32>
    %773 = vector.shape_cast %770 : vector<3x16xf32> to vector<1x3x1x16xf32>
    tpu.vector_store %arg10[%c0_113, %c0_114, %c7_115, %c0_116], %773 {strides = array<i32>} : memref<1x3x16x16xf32, #tpu.memory_space<vmem>>, vector<1x3x1x16xf32>,
    %c8_i32 = arith.constant 8 : i32
    %774 = arith.addi %5, %c8_i32 : i32
    %775 = arith.index_cast %774 : i32 to index
    %776 = memref.load %arg2[%775] : memref<16xi32, #tpu.memory_space<smem>>
    %777 = arith.index_cast %774 : i32 to index
    %778 = memref.load %arg3[%777] : memref<16xi32, #tpu.memory_space<smem>>
    %779 = arith.index_cast %774 : i32 to index
    %780 = memref.load %arg4[%779] : memref<16xi32, #tpu.memory_space<smem>>
    %781 = arith.sitofp %780 : i32 to f32
    %cst_117 = arith.constant 5.96046448E-8 : f32
    %782 = arith.mulf %781, %cst_117 : f32
    %c0_118 = arith.constant 0 : index
    %783 = arith.index_cast %776 : i32 to index
    %c0_119 = arith.constant 0 : index
    %c0_120 = arith.constant 0 : index
    %784 = vector.load %arg6[%c0_118, %783, %c0_119, %c0_120] : memref<1x8x4x8xf32, #tpu.memory_space<vmem>>, vector<1x1x4x8xf32>
    %785 = vector.shape_cast %784 : vector<1x1x4x8xf32> to vector<4x8xf32>
    %c0_121 = arith.constant 0 : index
    %786 = arith.index_cast %778 : i32 to index
    %c0_122 = arith.constant 0 : index
    %c0_123 = arith.constant 0 : index
    %787 = vector.load %arg6[%c0_121, %786, %c0_122, %c0_123] : memref<1x8x4x8xf32, #tpu.memory_space<vmem>>, vector<1x1x4x8xf32>
    %788 = vector.shape_cast %787 : vector<1x1x4x8xf32> to vector<4x8xf32>
    %789 = arith.subf %788, %785 : vector<4x8xf32>
    %790 = vector.broadcast %782 : f32 to vector<4x8xf32>
    %791 = arith.mulf %790, %789 : vector<4x8xf32>
    %792 = arith.addf %785, %791 : vector<4x8xf32>
    %793 = vector.extract_strided_slice %792 {offsets = [0, 0], sizes = [4, 1], strides = [1, 1]} : vector<4x8xf32> to vector<4x1xf32>
    %794 = vector.extract_strided_slice %0 {offsets = [0, 0], sizes = [1, 16], strides = [1, 1]} : vector<8x16xf32> to vector<1x16xf32>
    %795 = vector.broadcast %793 : vector<4x1xf32> to vector<4x16xf32>
    %796 = vector.broadcast %794 : vector<1x16xf32> to vector<4x16xf32>
    %797 = arith.mulf %795, %796 : vector<4x16xf32>
    %798 = vector.extract_strided_slice %792 {offsets = [0, 1], sizes = [4, 1], strides = [1, 1]} : vector<4x8xf32> to vector<4x1xf32>
    %799 = vector.extract_strided_slice %0 {offsets = [1, 0], sizes = [1, 16], strides = [1, 1]} : vector<8x16xf32> to vector<1x16xf32>
    %800 = vector.broadcast %798 : vector<4x1xf32> to vector<4x16xf32>
    %801 = vector.broadcast %799 : vector<1x16xf32> to vector<4x16xf32>
    %802 = arith.mulf %800, %801 : vector<4x16xf32>
    %803 = arith.addf %797, %802 : vector<4x16xf32>
    %804 = vector.extract_strided_slice %792 {offsets = [0, 2], sizes = [4, 1], strides = [1, 1]} : vector<4x8xf32> to vector<4x1xf32>
    %805 = vector.extract_strided_slice %0 {offsets = [2, 0], sizes = [1, 16], strides = [1, 1]} : vector<8x16xf32> to vector<1x16xf32>
    %806 = vector.broadcast %804 : vector<4x1xf32> to vector<4x16xf32>
    %807 = vector.broadcast %805 : vector<1x16xf32> to vector<4x16xf32>
    %808 = arith.mulf %806, %807 : vector<4x16xf32>
    %809 = arith.addf %803, %808 : vector<4x16xf32>
    %810 = vector.extract_strided_slice %792 {offsets = [0, 3], sizes = [4, 1], strides = [1, 1]} : vector<4x8xf32> to vector<4x1xf32>
    %811 = vector.extract_strided_slice %0 {offsets = [3, 0], sizes = [1, 16], strides = [1, 1]} : vector<8x16xf32> to vector<1x16xf32>
    %812 = vector.broadcast %810 : vector<4x1xf32> to vector<4x16xf32>
    %813 = vector.broadcast %811 : vector<1x16xf32> to vector<4x16xf32>
    %814 = arith.mulf %812, %813 : vector<4x16xf32>
    %815 = arith.addf %809, %814 : vector<4x16xf32>
    %816 = vector.extract_strided_slice %792 {offsets = [0, 4], sizes = [4, 1], strides = [1, 1]} : vector<4x8xf32> to vector<4x1xf32>
    %817 = vector.extract_strided_slice %0 {offsets = [4, 0], sizes = [1, 16], strides = [1, 1]} : vector<8x16xf32> to vector<1x16xf32>
    %818 = vector.broadcast %816 : vector<4x1xf32> to vector<4x16xf32>
    %819 = vector.broadcast %817 : vector<1x16xf32> to vector<4x16xf32>
    %820 = arith.mulf %818, %819 : vector<4x16xf32>
    %821 = arith.addf %815, %820 : vector<4x16xf32>
    %822 = vector.extract_strided_slice %792 {offsets = [0, 5], sizes = [4, 1], strides = [1, 1]} : vector<4x8xf32> to vector<4x1xf32>
    %823 = vector.extract_strided_slice %0 {offsets = [5, 0], sizes = [1, 16], strides = [1, 1]} : vector<8x16xf32> to vector<1x16xf32>
    %824 = vector.broadcast %822 : vector<4x1xf32> to vector<4x16xf32>
    %825 = vector.broadcast %823 : vector<1x16xf32> to vector<4x16xf32>
    %826 = arith.mulf %824, %825 : vector<4x16xf32>
    %827 = arith.addf %821, %826 : vector<4x16xf32>
    %828 = vector.extract_strided_slice %792 {offsets = [0, 6], sizes = [4, 1], strides = [1, 1]} : vector<4x8xf32> to vector<4x1xf32>
    %829 = vector.extract_strided_slice %0 {offsets = [6, 0], sizes = [1, 16], strides = [1, 1]} : vector<8x16xf32> to vector<1x16xf32>
    %830 = vector.broadcast %828 : vector<4x1xf32> to vector<4x16xf32>
    %831 = vector.broadcast %829 : vector<1x16xf32> to vector<4x16xf32>
    %832 = arith.mulf %830, %831 : vector<4x16xf32>
    %833 = arith.addf %827, %832 : vector<4x16xf32>
    %834 = vector.extract_strided_slice %792 {offsets = [0, 7], sizes = [4, 1], strides = [1, 1]} : vector<4x8xf32> to vector<4x1xf32>
    %835 = vector.extract_strided_slice %0 {offsets = [7, 0], sizes = [1, 16], strides = [1, 1]} : vector<8x16xf32> to vector<1x16xf32>
    %836 = vector.broadcast %834 : vector<4x1xf32> to vector<4x16xf32>
    %837 = vector.broadcast %835 : vector<1x16xf32> to vector<4x16xf32>
    %838 = arith.mulf %836, %837 : vector<4x16xf32>
    %839 = arith.addf %833, %838 : vector<4x16xf32>
    %c0_124 = arith.constant 0 : index
    %c0_125 = arith.constant 0 : index
    %c8 = arith.constant 8 : index
    %c0_126 = arith.constant 0 : index
    %840 = vector.load %arg5[%c0_124, %c0_125, %c8, %c0_126] : memref<1x4x16x16xf32, #tpu.memory_space<vmem>>, vector<1x4x1x16xf32>
    %841 = vector.shape_cast %840 : vector<1x4x1x16xf32> to vector<4x16xf32>
    %842 = arith.mulf %841, %839 : vector<4x16xf32>
    %843 = vector.extract_strided_slice %1 {offsets = [0, 0], sizes = [3, 1], strides = [1, 1]} : vector<3x4xf32> to vector<3x1xf32>
    %844 = vector.extract_strided_slice %842 {offsets = [0, 0], sizes = [1, 16], strides = [1, 1]} : vector<4x16xf32> to vector<1x16xf32>
    %845 = vector.broadcast %843 : vector<3x1xf32> to vector<3x16xf32>
    %846 = vector.broadcast %844 : vector<1x16xf32> to vector<3x16xf32>
    %847 = arith.mulf %845, %846 : vector<3x16xf32>
    %848 = arith.addf %4, %847 : vector<3x16xf32>
    %849 = vector.extract_strided_slice %1 {offsets = [0, 1], sizes = [3, 1], strides = [1, 1]} : vector<3x4xf32> to vector<3x1xf32>
    %850 = vector.extract_strided_slice %842 {offsets = [1, 0], sizes = [1, 16], strides = [1, 1]} : vector<4x16xf32> to vector<1x16xf32>
    %851 = vector.broadcast %849 : vector<3x1xf32> to vector<3x16xf32>
    %852 = vector.broadcast %850 : vector<1x16xf32> to vector<3x16xf32>
    %853 = arith.mulf %851, %852 : vector<3x16xf32>
    %854 = arith.addf %848, %853 : vector<3x16xf32>
    %855 = vector.extract_strided_slice %1 {offsets = [0, 2], sizes = [3, 1], strides = [1, 1]} : vector<3x4xf32> to vector<3x1xf32>
    %856 = vector.extract_strided_slice %842 {offsets = [2, 0], sizes = [1, 16], strides = [1, 1]} : vector<4x16xf32> to vector<1x16xf32>
    %857 = vector.broadcast %855 : vector<3x1xf32> to vector<3x16xf32>
    %858 = vector.broadcast %856 : vector<1x16xf32> to vector<3x16xf32>
    %859 = arith.mulf %857, %858 : vector<3x16xf32>
    %860 = arith.addf %854, %859 : vector<3x16xf32>
    %861 = vector.extract_strided_slice %1 {offsets = [0, 3], sizes = [3, 1], strides = [1, 1]} : vector<3x4xf32> to vector<3x1xf32>
    %862 = vector.extract_strided_slice %842 {offsets = [3, 0], sizes = [1, 16], strides = [1, 1]} : vector<4x16xf32> to vector<1x16xf32>
    %863 = vector.broadcast %861 : vector<3x1xf32> to vector<3x16xf32>
    %864 = vector.broadcast %862 : vector<1x16xf32> to vector<3x16xf32>
    %865 = arith.mulf %863, %864 : vector<3x16xf32>
    %866 = arith.addf %860, %865 : vector<3x16xf32>
    %c0_127 = arith.constant 0 : index
    %c0_128 = arith.constant 0 : index
    %c8_129 = arith.constant 8 : index
    %c0_130 = arith.constant 0 : index
    %867 = vector.load %arg10[%c0_127, %c0_128, %c8_129, %c0_130] : memref<1x3x16x16xf32, #tpu.memory_space<vmem>>, vector<1x3x1x16xf32>
    %868 = vector.shape_cast %867 : vector<1x3x1x16xf32> to vector<3x16xf32>
    %869 = vector.shape_cast %866 : vector<3x16xf32> to vector<1x3x1x16xf32>
    tpu.vector_store %arg10[%c0_127, %c0_128, %c8_129, %c0_130], %869 {strides = array<i32>} : memref<1x3x16x16xf32, #tpu.memory_space<vmem>>, vector<1x3x1x16xf32>,
    %c9_i32 = arith.constant 9 : i32
    %870 = arith.addi %5, %c9_i32 : i32
    %871 = arith.index_cast %870 : i32 to index
    %872 = memref.load %arg2[%871] : memref<16xi32, #tpu.memory_space<smem>>
    %873 = arith.index_cast %870 : i32 to index
    %874 = memref.load %arg3[%873] : memref<16xi32, #tpu.memory_space<smem>>
    %875 = arith.index_cast %870 : i32 to index
    %876 = memref.load %arg4[%875] : memref<16xi32, #tpu.memory_space<smem>>
    %877 = arith.sitofp %876 : i32 to f32
    %cst_131 = arith.constant 5.96046448E-8 : f32
    %878 = arith.mulf %877, %cst_131 : f32
    %c0_132 = arith.constant 0 : index
    %879 = arith.index_cast %872 : i32 to index
    %c0_133 = arith.constant 0 : index
    %c0_134 = arith.constant 0 : index
    %880 = vector.load %arg6[%c0_132, %879, %c0_133, %c0_134] : memref<1x8x4x8xf32, #tpu.memory_space<vmem>>, vector<1x1x4x8xf32>
    %881 = vector.shape_cast %880 : vector<1x1x4x8xf32> to vector<4x8xf32>
    %c0_135 = arith.constant 0 : index
    %882 = arith.index_cast %874 : i32 to index
    %c0_136 = arith.constant 0 : index
    %c0_137 = arith.constant 0 : index
    %883 = vector.load %arg6[%c0_135, %882, %c0_136, %c0_137] : memref<1x8x4x8xf32, #tpu.memory_space<vmem>>, vector<1x1x4x8xf32>
    %884 = vector.shape_cast %883 : vector<1x1x4x8xf32> to vector<4x8xf32>
    %885 = arith.subf %884, %881 : vector<4x8xf32>
    %886 = vector.broadcast %878 : f32 to vector<4x8xf32>
    %887 = arith.mulf %886, %885 : vector<4x8xf32>
    %888 = arith.addf %881, %887 : vector<4x8xf32>
    %889 = vector.extract_strided_slice %888 {offsets = [0, 0], sizes = [4, 1], strides = [1, 1]} : vector<4x8xf32> to vector<4x1xf32>
    %890 = vector.extract_strided_slice %0 {offsets = [0, 0], sizes = [1, 16], strides = [1, 1]} : vector<8x16xf32> to vector<1x16xf32>
    %891 = vector.broadcast %889 : vector<4x1xf32> to vector<4x16xf32>
    %892 = vector.broadcast %890 : vector<1x16xf32> to vector<4x16xf32>
    %893 = arith.mulf %891, %892 : vector<4x16xf32>
    %894 = vector.extract_strided_slice %888 {offsets = [0, 1], sizes = [4, 1], strides = [1, 1]} : vector<4x8xf32> to vector<4x1xf32>
    %895 = vector.extract_strided_slice %0 {offsets = [1, 0], sizes = [1, 16], strides = [1, 1]} : vector<8x16xf32> to vector<1x16xf32>
    %896 = vector.broadcast %894 : vector<4x1xf32> to vector<4x16xf32>
    %897 = vector.broadcast %895 : vector<1x16xf32> to vector<4x16xf32>
    %898 = arith.mulf %896, %897 : vector<4x16xf32>
    %899 = arith.addf %893, %898 : vector<4x16xf32>
    %900 = vector.extract_strided_slice %888 {offsets = [0, 2], sizes = [4, 1], strides = [1, 1]} : vector<4x8xf32> to vector<4x1xf32>
    %901 = vector.extract_strided_slice %0 {offsets = [2, 0], sizes = [1, 16], strides = [1, 1]} : vector<8x16xf32> to vector<1x16xf32>
    %902 = vector.broadcast %900 : vector<4x1xf32> to vector<4x16xf32>
    %903 = vector.broadcast %901 : vector<1x16xf32> to vector<4x16xf32>
    %904 = arith.mulf %902, %903 : vector<4x16xf32>
    %905 = arith.addf %899, %904 : vector<4x16xf32>
    %906 = vector.extract_strided_slice %888 {offsets = [0, 3], sizes = [4, 1], strides = [1, 1]} : vector<4x8xf32> to vector<4x1xf32>
    %907 = vector.extract_strided_slice %0 {offsets = [3, 0], sizes = [1, 16], strides = [1, 1]} : vector<8x16xf32> to vector<1x16xf32>
    %908 = vector.broadcast %906 : vector<4x1xf32> to vector<4x16xf32>
    %909 = vector.broadcast %907 : vector<1x16xf32> to vector<4x16xf32>
    %910 = arith.mulf %908, %909 : vector<4x16xf32>
    %911 = arith.addf %905, %910 : vector<4x16xf32>
    %912 = vector.extract_strided_slice %888 {offsets = [0, 4], sizes = [4, 1], strides = [1, 1]} : vector<4x8xf32> to vector<4x1xf32>
    %913 = vector.extract_strided_slice %0 {offsets = [4, 0], sizes = [1, 16], strides = [1, 1]} : vector<8x16xf32> to vector<1x16xf32>
    %914 = vector.broadcast %912 : vector<4x1xf32> to vector<4x16xf32>
    %915 = vector.broadcast %913 : vector<1x16xf32> to vector<4x16xf32>
    %916 = arith.mulf %914, %915 : vector<4x16xf32>
    %917 = arith.addf %911, %916 : vector<4x16xf32>
    %918 = vector.extract_strided_slice %888 {offsets = [0, 5], sizes = [4, 1], strides = [1, 1]} : vector<4x8xf32> to vector<4x1xf32>
    %919 = vector.extract_strided_slice %0 {offsets = [5, 0], sizes = [1, 16], strides = [1, 1]} : vector<8x16xf32> to vector<1x16xf32>
    %920 = vector.broadcast %918 : vector<4x1xf32> to vector<4x16xf32>
    %921 = vector.broadcast %919 : vector<1x16xf32> to vector<4x16xf32>
    %922 = arith.mulf %920, %921 : vector<4x16xf32>
    %923 = arith.addf %917, %922 : vector<4x16xf32>
    %924 = vector.extract_strided_slice %888 {offsets = [0, 6], sizes = [4, 1], strides = [1, 1]} : vector<4x8xf32> to vector<4x1xf32>
    %925 = vector.extract_strided_slice %0 {offsets = [6, 0], sizes = [1, 16], strides = [1, 1]} : vector<8x16xf32> to vector<1x16xf32>
    %926 = vector.broadcast %924 : vector<4x1xf32> to vector<4x16xf32>
    %927 = vector.broadcast %925 : vector<1x16xf32> to vector<4x16xf32>
    %928 = arith.mulf %926, %927 : vector<4x16xf32>
    %929 = arith.addf %923, %928 : vector<4x16xf32>
    %930 = vector.extract_strided_slice %888 {offsets = [0, 7], sizes = [4, 1], strides = [1, 1]} : vector<4x8xf32> to vector<4x1xf32>
    %931 = vector.extract_strided_slice %0 {offsets = [7, 0], sizes = [1, 16], strides = [1, 1]} : vector<8x16xf32> to vector<1x16xf32>
    %932 = vector.broadcast %930 : vector<4x1xf32> to vector<4x16xf32>
    %933 = vector.broadcast %931 : vector<1x16xf32> to vector<4x16xf32>
    %934 = arith.mulf %932, %933 : vector<4x16xf32>
    %935 = arith.addf %929, %934 : vector<4x16xf32>
    %c0_138 = arith.constant 0 : index
    %c0_139 = arith.constant 0 : index
    %c9 = arith.constant 9 : index
    %c0_140 = arith.constant 0 : index
    %936 = vector.load %arg5[%c0_138, %c0_139, %c9, %c0_140] : memref<1x4x16x16xf32, #tpu.memory_space<vmem>>, vector<1x4x1x16xf32>
    %937 = vector.shape_cast %936 : vector<1x4x1x16xf32> to vector<4x16xf32>
    %938 = arith.mulf %937, %935 : vector<4x16xf32>
    %939 = vector.extract_strided_slice %1 {offsets = [0, 0], sizes = [3, 1], strides = [1, 1]} : vector<3x4xf32> to vector<3x1xf32>
    %940 = vector.extract_strided_slice %938 {offsets = [0, 0], sizes = [1, 16], strides = [1, 1]} : vector<4x16xf32> to vector<1x16xf32>
    %941 = vector.broadcast %939 : vector<3x1xf32> to vector<3x16xf32>
    %942 = vector.broadcast %940 : vector<1x16xf32> to vector<3x16xf32>
    %943 = arith.mulf %941, %942 : vector<3x16xf32>
    %944 = arith.addf %4, %943 : vector<3x16xf32>
    %945 = vector.extract_strided_slice %1 {offsets = [0, 1], sizes = [3, 1], strides = [1, 1]} : vector<3x4xf32> to vector<3x1xf32>
    %946 = vector.extract_strided_slice %938 {offsets = [1, 0], sizes = [1, 16], strides = [1, 1]} : vector<4x16xf32> to vector<1x16xf32>
    %947 = vector.broadcast %945 : vector<3x1xf32> to vector<3x16xf32>
    %948 = vector.broadcast %946 : vector<1x16xf32> to vector<3x16xf32>
    %949 = arith.mulf %947, %948 : vector<3x16xf32>
    %950 = arith.addf %944, %949 : vector<3x16xf32>
    %951 = vector.extract_strided_slice %1 {offsets = [0, 2], sizes = [3, 1], strides = [1, 1]} : vector<3x4xf32> to vector<3x1xf32>
    %952 = vector.extract_strided_slice %938 {offsets = [2, 0], sizes = [1, 16], strides = [1, 1]} : vector<4x16xf32> to vector<1x16xf32>
    %953 = vector.broadcast %951 : vector<3x1xf32> to vector<3x16xf32>
    %954 = vector.broadcast %952 : vector<1x16xf32> to vector<3x16xf32>
    %955 = arith.mulf %953, %954 : vector<3x16xf32>
    %956 = arith.addf %950, %955 : vector<3x16xf32>
    %957 = vector.extract_strided_slice %1 {offsets = [0, 3], sizes = [3, 1], strides = [1, 1]} : vector<3x4xf32> to vector<3x1xf32>
    %958 = vector.extract_strided_slice %938 {offsets = [3, 0], sizes = [1, 16], strides = [1, 1]} : vector<4x16xf32> to vector<1x16xf32>
    %959 = vector.broadcast %957 : vector<3x1xf32> to vector<3x16xf32>
    %960 = vector.broadcast %958 : vector<1x16xf32> to vector<3x16xf32>
    %961 = arith.mulf %959, %960 : vector<3x16xf32>
    %962 = arith.addf %956, %961 : vector<3x16xf32>
    %c0_141 = arith.constant 0 : index
    %c0_142 = arith.constant 0 : index
    %c9_143 = arith.constant 9 : index
    %c0_144 = arith.constant 0 : index
    %963 = vector.load %arg10[%c0_141, %c0_142, %c9_143, %c0_144] : memref<1x3x16x16xf32, #tpu.memory_space<vmem>>, vector<1x3x1x16xf32>
    %964 = vector.shape_cast %963 : vector<1x3x1x16xf32> to vector<3x16xf32>
    %965 = vector.shape_cast %962 : vector<3x16xf32> to vector<1x3x1x16xf32>
    tpu.vector_store %arg10[%c0_141, %c0_142, %c9_143, %c0_144], %965 {strides = array<i32>} : memref<1x3x16x16xf32, #tpu.memory_space<vmem>>, vector<1x3x1x16xf32>,
    %c10_i32 = arith.constant 10 : i32
    %966 = arith.addi %5, %c10_i32 : i32
    %967 = arith.index_cast %966 : i32 to index
    %968 = memref.load %arg2[%967] : memref<16xi32, #tpu.memory_space<smem>>
    %969 = arith.index_cast %966 : i32 to index
    %970 = memref.load %arg3[%969] : memref<16xi32, #tpu.memory_space<smem>>
    %971 = arith.index_cast %966 : i32 to index
    %972 = memref.load %arg4[%971] : memref<16xi32, #tpu.memory_space<smem>>
    %973 = arith.sitofp %972 : i32 to f32
    %cst_145 = arith.constant 5.96046448E-8 : f32
    %974 = arith.mulf %973, %cst_145 : f32
    %c0_146 = arith.constant 0 : index
    %975 = arith.index_cast %968 : i32 to index
    %c0_147 = arith.constant 0 : index
    %c0_148 = arith.constant 0 : index
    %976 = vector.load %arg6[%c0_146, %975, %c0_147, %c0_148] : memref<1x8x4x8xf32, #tpu.memory_space<vmem>>, vector<1x1x4x8xf32>
    %977 = vector.shape_cast %976 : vector<1x1x4x8xf32> to vector<4x8xf32>
    %c0_149 = arith.constant 0 : index
    %978 = arith.index_cast %970 : i32 to index
    %c0_150 = arith.constant 0 : index
    %c0_151 = arith.constant 0 : index
    %979 = vector.load %arg6[%c0_149, %978, %c0_150, %c0_151] : memref<1x8x4x8xf32, #tpu.memory_space<vmem>>, vector<1x1x4x8xf32>
    %980 = vector.shape_cast %979 : vector<1x1x4x8xf32> to vector<4x8xf32>
    %981 = arith.subf %980, %977 : vector<4x8xf32>
    %982 = vector.broadcast %974 : f32 to vector<4x8xf32>
    %983 = arith.mulf %982, %981 : vector<4x8xf32>
    %984 = arith.addf %977, %983 : vector<4x8xf32>
    %985 = vector.extract_strided_slice %984 {offsets = [0, 0], sizes = [4, 1], strides = [1, 1]} : vector<4x8xf32> to vector<4x1xf32>
    %986 = vector.extract_strided_slice %0 {offsets = [0, 0], sizes = [1, 16], strides = [1, 1]} : vector<8x16xf32> to vector<1x16xf32>
    %987 = vector.broadcast %985 : vector<4x1xf32> to vector<4x16xf32>
    %988 = vector.broadcast %986 : vector<1x16xf32> to vector<4x16xf32>
    %989 = arith.mulf %987, %988 : vector<4x16xf32>
    %990 = vector.extract_strided_slice %984 {offsets = [0, 1], sizes = [4, 1], strides = [1, 1]} : vector<4x8xf32> to vector<4x1xf32>
    %991 = vector.extract_strided_slice %0 {offsets = [1, 0], sizes = [1, 16], strides = [1, 1]} : vector<8x16xf32> to vector<1x16xf32>
    %992 = vector.broadcast %990 : vector<4x1xf32> to vector<4x16xf32>
    %993 = vector.broadcast %991 : vector<1x16xf32> to vector<4x16xf32>
    %994 = arith.mulf %992, %993 : vector<4x16xf32>
    %995 = arith.addf %989, %994 : vector<4x16xf32>
    %996 = vector.extract_strided_slice %984 {offsets = [0, 2], sizes = [4, 1], strides = [1, 1]} : vector<4x8xf32> to vector<4x1xf32>
    %997 = vector.extract_strided_slice %0 {offsets = [2, 0], sizes = [1, 16], strides = [1, 1]} : vector<8x16xf32> to vector<1x16xf32>
    %998 = vector.broadcast %996 : vector<4x1xf32> to vector<4x16xf32>
    %999 = vector.broadcast %997 : vector<1x16xf32> to vector<4x16xf32>
    %1000 = arith.mulf %998, %999 : vector<4x16xf32>
    %1001 = arith.addf %995, %1000 : vector<4x16xf32>
    %1002 = vector.extract_strided_slice %984 {offsets = [0, 3], sizes = [4, 1], strides = [1, 1]} : vector<4x8xf32> to vector<4x1xf32>
    %1003 = vector.extract_strided_slice %0 {offsets = [3, 0], sizes = [1, 16], strides = [1, 1]} : vector<8x16xf32> to vector<1x16xf32>
    %1004 = vector.broadcast %1002 : vector<4x1xf32> to vector<4x16xf32>
    %1005 = vector.broadcast %1003 : vector<1x16xf32> to vector<4x16xf32>
    %1006 = arith.mulf %1004, %1005 : vector<4x16xf32>
    %1007 = arith.addf %1001, %1006 : vector<4x16xf32>
    %1008 = vector.extract_strided_slice %984 {offsets = [0, 4], sizes = [4, 1], strides = [1, 1]} : vector<4x8xf32> to vector<4x1xf32>
    %1009 = vector.extract_strided_slice %0 {offsets = [4, 0], sizes = [1, 16], strides = [1, 1]} : vector<8x16xf32> to vector<1x16xf32>
    %1010 = vector.broadcast %1008 : vector<4x1xf32> to vector<4x16xf32>
    %1011 = vector.broadcast %1009 : vector<1x16xf32> to vector<4x16xf32>
    %1012 = arith.mulf %1010, %1011 : vector<4x16xf32>
    %1013 = arith.addf %1007, %1012 : vector<4x16xf32>
    %1014 = vector.extract_strided_slice %984 {offsets = [0, 5], sizes = [4, 1], strides = [1, 1]} : vector<4x8xf32> to vector<4x1xf32>
    %1015 = vector.extract_strided_slice %0 {offsets = [5, 0], sizes = [1, 16], strides = [1, 1]} : vector<8x16xf32> to vector<1x16xf32>
    %1016 = vector.broadcast %1014 : vector<4x1xf32> to vector<4x16xf32>
    %1017 = vector.broadcast %1015 : vector<1x16xf32> to vector<4x16xf32>
    %1018 = arith.mulf %1016, %1017 : vector<4x16xf32>
    %1019 = arith.addf %1013, %1018 : vector<4x16xf32>
    %1020 = vector.extract_strided_slice %984 {offsets = [0, 6], sizes = [4, 1], strides = [1, 1]} : vector<4x8xf32> to vector<4x1xf32>
    %1021 = vector.extract_strided_slice %0 {offsets = [6, 0], sizes = [1, 16], strides = [1, 1]} : vector<8x16xf32> to vector<1x16xf32>
    %1022 = vector.broadcast %1020 : vector<4x1xf32> to vector<4x16xf32>
    %1023 = vector.broadcast %1021 : vector<1x16xf32> to vector<4x16xf32>
    %1024 = arith.mulf %1022, %1023 : vector<4x16xf32>
    %1025 = arith.addf %1019, %1024 : vector<4x16xf32>
    %1026 = vector.extract_strided_slice %984 {offsets = [0, 7], sizes = [4, 1], strides = [1, 1]} : vector<4x8xf32> to vector<4x1xf32>
    %1027 = vector.extract_strided_slice %0 {offsets = [7, 0], sizes = [1, 16], strides = [1, 1]} : vector<8x16xf32> to vector<1x16xf32>
    %1028 = vector.broadcast %1026 : vector<4x1xf32> to vector<4x16xf32>
    %1029 = vector.broadcast %1027 : vector<1x16xf32> to vector<4x16xf32>
    %1030 = arith.mulf %1028, %1029 : vector<4x16xf32>
    %1031 = arith.addf %1025, %1030 : vector<4x16xf32>
    %c0_152 = arith.constant 0 : index
    %c0_153 = arith.constant 0 : index
    %c10 = arith.constant 10 : index
    %c0_154 = arith.constant 0 : index
    %1032 = vector.load %arg5[%c0_152, %c0_153, %c10, %c0_154] : memref<1x4x16x16xf32, #tpu.memory_space<vmem>>, vector<1x4x1x16xf32>
    %1033 = vector.shape_cast %1032 : vector<1x4x1x16xf32> to vector<4x16xf32>
    %1034 = arith.mulf %1033, %1031 : vector<4x16xf32>
    %1035 = vector.extract_strided_slice %1 {offsets = [0, 0], sizes = [3, 1], strides = [1, 1]} : vector<3x4xf32> to vector<3x1xf32>
    %1036 = vector.extract_strided_slice %1034 {offsets = [0, 0], sizes = [1, 16], strides = [1, 1]} : vector<4x16xf32> to vector<1x16xf32>
    %1037 = vector.broadcast %1035 : vector<3x1xf32> to vector<3x16xf32>
    %1038 = vector.broadcast %1036 : vector<1x16xf32> to vector<3x16xf32>
    %1039 = arith.mulf %1037, %1038 : vector<3x16xf32>
    %1040 = arith.addf %4, %1039 : vector<3x16xf32>
    %1041 = vector.extract_strided_slice %1 {offsets = [0, 1], sizes = [3, 1], strides = [1, 1]} : vector<3x4xf32> to vector<3x1xf32>
    %1042 = vector.extract_strided_slice %1034 {offsets = [1, 0], sizes = [1, 16], strides = [1, 1]} : vector<4x16xf32> to vector<1x16xf32>
    %1043 = vector.broadcast %1041 : vector<3x1xf32> to vector<3x16xf32>
    %1044 = vector.broadcast %1042 : vector<1x16xf32> to vector<3x16xf32>
    %1045 = arith.mulf %1043, %1044 : vector<3x16xf32>
    %1046 = arith.addf %1040, %1045 : vector<3x16xf32>
    %1047 = vector.extract_strided_slice %1 {offsets = [0, 2], sizes = [3, 1], strides = [1, 1]} : vector<3x4xf32> to vector<3x1xf32>
    %1048 = vector.extract_strided_slice %1034 {offsets = [2, 0], sizes = [1, 16], strides = [1, 1]} : vector<4x16xf32> to vector<1x16xf32>
    %1049 = vector.broadcast %1047 : vector<3x1xf32> to vector<3x16xf32>
    %1050 = vector.broadcast %1048 : vector<1x16xf32> to vector<3x16xf32>
    %1051 = arith.mulf %1049, %1050 : vector<3x16xf32>
    %1052 = arith.addf %1046, %1051 : vector<3x16xf32>
    %1053 = vector.extract_strided_slice %1 {offsets = [0, 3], sizes = [3, 1], strides = [1, 1]} : vector<3x4xf32> to vector<3x1xf32>
    %1054 = vector.extract_strided_slice %1034 {offsets = [3, 0], sizes = [1, 16], strides = [1, 1]} : vector<4x16xf32> to vector<1x16xf32>
    %1055 = vector.broadcast %1053 : vector<3x1xf32> to vector<3x16xf32>
    %1056 = vector.broadcast %1054 : vector<1x16xf32> to vector<3x16xf32>
    %1057 = arith.mulf %1055, %1056 : vector<3x16xf32>
    %1058 = arith.addf %1052, %1057 : vector<3x16xf32>
    %c0_155 = arith.constant 0 : index
    %c0_156 = arith.constant 0 : index
    %c10_157 = arith.constant 10 : index
    %c0_158 = arith.constant 0 : index
    %1059 = vector.load %arg10[%c0_155, %c0_156, %c10_157, %c0_158] : memref<1x3x16x16xf32, #tpu.memory_space<vmem>>, vector<1x3x1x16xf32>
    %1060 = vector.shape_cast %1059 : vector<1x3x1x16xf32> to vector<3x16xf32>
    %1061 = vector.shape_cast %1058 : vector<3x16xf32> to vector<1x3x1x16xf32>
    tpu.vector_store %arg10[%c0_155, %c0_156, %c10_157, %c0_158], %1061 {strides = array<i32>} : memref<1x3x16x16xf32, #tpu.memory_space<vmem>>, vector<1x3x1x16xf32>,
    %c11_i32 = arith.constant 11 : i32
    %1062 = arith.addi %5, %c11_i32 : i32
    %1063 = arith.index_cast %1062 : i32 to index
    %1064 = memref.load %arg2[%1063] : memref<16xi32, #tpu.memory_space<smem>>
    %1065 = arith.index_cast %1062 : i32 to index
    %1066 = memref.load %arg3[%1065] : memref<16xi32, #tpu.memory_space<smem>>
    %1067 = arith.index_cast %1062 : i32 to index
    %1068 = memref.load %arg4[%1067] : memref<16xi32, #tpu.memory_space<smem>>
    %1069 = arith.sitofp %1068 : i32 to f32
    %cst_159 = arith.constant 5.96046448E-8 : f32
    %1070 = arith.mulf %1069, %cst_159 : f32
    %c0_160 = arith.constant 0 : index
    %1071 = arith.index_cast %1064 : i32 to index
    %c0_161 = arith.constant 0 : index
    %c0_162 = arith.constant 0 : index
    %1072 = vector.load %arg6[%c0_160, %1071, %c0_161, %c0_162] : memref<1x8x4x8xf32, #tpu.memory_space<vmem>>, vector<1x1x4x8xf32>
    %1073 = vector.shape_cast %1072 : vector<1x1x4x8xf32> to vector<4x8xf32>
    %c0_163 = arith.constant 0 : index
    %1074 = arith.index_cast %1066 : i32 to index
    %c0_164 = arith.constant 0 : index
    %c0_165 = arith.constant 0 : index
    %1075 = vector.load %arg6[%c0_163, %1074, %c0_164, %c0_165] : memref<1x8x4x8xf32, #tpu.memory_space<vmem>>, vector<1x1x4x8xf32>
    %1076 = vector.shape_cast %1075 : vector<1x1x4x8xf32> to vector<4x8xf32>
    %1077 = arith.subf %1076, %1073 : vector<4x8xf32>
    %1078 = vector.broadcast %1070 : f32 to vector<4x8xf32>
    %1079 = arith.mulf %1078, %1077 : vector<4x8xf32>
    %1080 = arith.addf %1073, %1079 : vector<4x8xf32>
    %1081 = vector.extract_strided_slice %1080 {offsets = [0, 0], sizes = [4, 1], strides = [1, 1]} : vector<4x8xf32> to vector<4x1xf32>
    %1082 = vector.extract_strided_slice %0 {offsets = [0, 0], sizes = [1, 16], strides = [1, 1]} : vector<8x16xf32> to vector<1x16xf32>
    %1083 = vector.broadcast %1081 : vector<4x1xf32> to vector<4x16xf32>
    %1084 = vector.broadcast %1082 : vector<1x16xf32> to vector<4x16xf32>
    %1085 = arith.mulf %1083, %1084 : vector<4x16xf32>
    %1086 = vector.extract_strided_slice %1080 {offsets = [0, 1], sizes = [4, 1], strides = [1, 1]} : vector<4x8xf32> to vector<4x1xf32>
    %1087 = vector.extract_strided_slice %0 {offsets = [1, 0], sizes = [1, 16], strides = [1, 1]} : vector<8x16xf32> to vector<1x16xf32>
    %1088 = vector.broadcast %1086 : vector<4x1xf32> to vector<4x16xf32>
    %1089 = vector.broadcast %1087 : vector<1x16xf32> to vector<4x16xf32>
    %1090 = arith.mulf %1088, %1089 : vector<4x16xf32>
    %1091 = arith.addf %1085, %1090 : vector<4x16xf32>
    %1092 = vector.extract_strided_slice %1080 {offsets = [0, 2], sizes = [4, 1], strides = [1, 1]} : vector<4x8xf32> to vector<4x1xf32>
    %1093 = vector.extract_strided_slice %0 {offsets = [2, 0], sizes = [1, 16], strides = [1, 1]} : vector<8x16xf32> to vector<1x16xf32>
    %1094 = vector.broadcast %1092 : vector<4x1xf32> to vector<4x16xf32>
    %1095 = vector.broadcast %1093 : vector<1x16xf32> to vector<4x16xf32>
    %1096 = arith.mulf %1094, %1095 : vector<4x16xf32>
    %1097 = arith.addf %1091, %1096 : vector<4x16xf32>
    %1098 = vector.extract_strided_slice %1080 {offsets = [0, 3], sizes = [4, 1], strides = [1, 1]} : vector<4x8xf32> to vector<4x1xf32>
    %1099 = vector.extract_strided_slice %0 {offsets = [3, 0], sizes = [1, 16], strides = [1, 1]} : vector<8x16xf32> to vector<1x16xf32>
    %1100 = vector.broadcast %1098 : vector<4x1xf32> to vector<4x16xf32>
    %1101 = vector.broadcast %1099 : vector<1x16xf32> to vector<4x16xf32>
    %1102 = arith.mulf %1100, %1101 : vector<4x16xf32>
    %1103 = arith.addf %1097, %1102 : vector<4x16xf32>
    %1104 = vector.extract_strided_slice %1080 {offsets = [0, 4], sizes = [4, 1], strides = [1, 1]} : vector<4x8xf32> to vector<4x1xf32>
    %1105 = vector.extract_strided_slice %0 {offsets = [4, 0], sizes = [1, 16], strides = [1, 1]} : vector<8x16xf32> to vector<1x16xf32>
    %1106 = vector.broadcast %1104 : vector<4x1xf32> to vector<4x16xf32>
    %1107 = vector.broadcast %1105 : vector<1x16xf32> to vector<4x16xf32>
    %1108 = arith.mulf %1106, %1107 : vector<4x16xf32>
    %1109 = arith.addf %1103, %1108 : vector<4x16xf32>
    %1110 = vector.extract_strided_slice %1080 {offsets = [0, 5], sizes = [4, 1], strides = [1, 1]} : vector<4x8xf32> to vector<4x1xf32>
    %1111 = vector.extract_strided_slice %0 {offsets = [5, 0], sizes = [1, 16], strides = [1, 1]} : vector<8x16xf32> to vector<1x16xf32>
    %1112 = vector.broadcast %1110 : vector<4x1xf32> to vector<4x16xf32>
    %1113 = vector.broadcast %1111 : vector<1x16xf32> to vector<4x16xf32>
    %1114 = arith.mulf %1112, %1113 : vector<4x16xf32>
    %1115 = arith.addf %1109, %1114 : vector<4x16xf32>
    %1116 = vector.extract_strided_slice %1080 {offsets = [0, 6], sizes = [4, 1], strides = [1, 1]} : vector<4x8xf32> to vector<4x1xf32>
    %1117 = vector.extract_strided_slice %0 {offsets = [6, 0], sizes = [1, 16], strides = [1, 1]} : vector<8x16xf32> to vector<1x16xf32>
    %1118 = vector.broadcast %1116 : vector<4x1xf32> to vector<4x16xf32>
    %1119 = vector.broadcast %1117 : vector<1x16xf32> to vector<4x16xf32>
    %1120 = arith.mulf %1118, %1119 : vector<4x16xf32>
    %1121 = arith.addf %1115, %1120 : vector<4x16xf32>
    %1122 = vector.extract_strided_slice %1080 {offsets = [0, 7], sizes = [4, 1], strides = [1, 1]} : vector<4x8xf32> to vector<4x1xf32>
    %1123 = vector.extract_strided_slice %0 {offsets = [7, 0], sizes = [1, 16], strides = [1, 1]} : vector<8x16xf32> to vector<1x16xf32>
    %1124 = vector.broadcast %1122 : vector<4x1xf32> to vector<4x16xf32>
    %1125 = vector.broadcast %1123 : vector<1x16xf32> to vector<4x16xf32>
    %1126 = arith.mulf %1124, %1125 : vector<4x16xf32>
    %1127 = arith.addf %1121, %1126 : vector<4x16xf32>
    %c0_166 = arith.constant 0 : index
    %c0_167 = arith.constant 0 : index
    %c11 = arith.constant 11 : index
    %c0_168 = arith.constant 0 : index
    %1128 = vector.load %arg5[%c0_166, %c0_167, %c11, %c0_168] : memref<1x4x16x16xf32, #tpu.memory_space<vmem>>, vector<1x4x1x16xf32>
    %1129 = vector.shape_cast %1128 : vector<1x4x1x16xf32> to vector<4x16xf32>
    %1130 = arith.mulf %1129, %1127 : vector<4x16xf32>
    %1131 = vector.extract_strided_slice %1 {offsets = [0, 0], sizes = [3, 1], strides = [1, 1]} : vector<3x4xf32> to vector<3x1xf32>
    %1132 = vector.extract_strided_slice %1130 {offsets = [0, 0], sizes = [1, 16], strides = [1, 1]} : vector<4x16xf32> to vector<1x16xf32>
    %1133 = vector.broadcast %1131 : vector<3x1xf32> to vector<3x16xf32>
    %1134 = vector.broadcast %1132 : vector<1x16xf32> to vector<3x16xf32>
    %1135 = arith.mulf %1133, %1134 : vector<3x16xf32>
    %1136 = arith.addf %4, %1135 : vector<3x16xf32>
    %1137 = vector.extract_strided_slice %1 {offsets = [0, 1], sizes = [3, 1], strides = [1, 1]} : vector<3x4xf32> to vector<3x1xf32>
    %1138 = vector.extract_strided_slice %1130 {offsets = [1, 0], sizes = [1, 16], strides = [1, 1]} : vector<4x16xf32> to vector<1x16xf32>
    %1139 = vector.broadcast %1137 : vector<3x1xf32> to vector<3x16xf32>
    %1140 = vector.broadcast %1138 : vector<1x16xf32> to vector<3x16xf32>
    %1141 = arith.mulf %1139, %1140 : vector<3x16xf32>
    %1142 = arith.addf %1136, %1141 : vector<3x16xf32>
    %1143 = vector.extract_strided_slice %1 {offsets = [0, 2], sizes = [3, 1], strides = [1, 1]} : vector<3x4xf32> to vector<3x1xf32>
    %1144 = vector.extract_strided_slice %1130 {offsets = [2, 0], sizes = [1, 16], strides = [1, 1]} : vector<4x16xf32> to vector<1x16xf32>
    %1145 = vector.broadcast %1143 : vector<3x1xf32> to vector<3x16xf32>
    %1146 = vector.broadcast %1144 : vector<1x16xf32> to vector<3x16xf32>
    %1147 = arith.mulf %1145, %1146 : vector<3x16xf32>
    %1148 = arith.addf %1142, %1147 : vector<3x16xf32>
    %1149 = vector.extract_strided_slice %1 {offsets = [0, 3], sizes = [3, 1], strides = [1, 1]} : vector<3x4xf32> to vector<3x1xf32>
    %1150 = vector.extract_strided_slice %1130 {offsets = [3, 0], sizes = [1, 16], strides = [1, 1]} : vector<4x16xf32> to vector<1x16xf32>
    %1151 = vector.broadcast %1149 : vector<3x1xf32> to vector<3x16xf32>
    %1152 = vector.broadcast %1150 : vector<1x16xf32> to vector<3x16xf32>
    %1153 = arith.mulf %1151, %1152 : vector<3x16xf32>
    %1154 = arith.addf %1148, %1153 : vector<3x16xf32>
    %c0_169 = arith.constant 0 : index
    %c0_170 = arith.constant 0 : index
    %c11_171 = arith.constant 11 : index
    %c0_172 = arith.constant 0 : index
    %1155 = vector.load %arg10[%c0_169, %c0_170, %c11_171, %c0_172] : memref<1x3x16x16xf32, #tpu.memory_space<vmem>>, vector<1x3x1x16xf32>
    %1156 = vector.shape_cast %1155 : vector<1x3x1x16xf32> to vector<3x16xf32>
    %1157 = vector.shape_cast %1154 : vector<3x16xf32> to vector<1x3x1x16xf32>
    tpu.vector_store %arg10[%c0_169, %c0_170, %c11_171, %c0_172], %1157 {strides = array<i32>} : memref<1x3x16x16xf32, #tpu.memory_space<vmem>>, vector<1x3x1x16xf32>,
    %c12_i32 = arith.constant 12 : i32
    %1158 = arith.addi %5, %c12_i32 : i32
    %1159 = arith.index_cast %1158 : i32 to index
    %1160 = memref.load %arg2[%1159] : memref<16xi32, #tpu.memory_space<smem>>
    %1161 = arith.index_cast %1158 : i32 to index
    %1162 = memref.load %arg3[%1161] : memref<16xi32, #tpu.memory_space<smem>>
    %1163 = arith.index_cast %1158 : i32 to index
    %1164 = memref.load %arg4[%1163] : memref<16xi32, #tpu.memory_space<smem>>
    %1165 = arith.sitofp %1164 : i32 to f32
    %cst_173 = arith.constant 5.96046448E-8 : f32
    %1166 = arith.mulf %1165, %cst_173 : f32
    %c0_174 = arith.constant 0 : index
    %1167 = arith.index_cast %1160 : i32 to index
    %c0_175 = arith.constant 0 : index
    %c0_176 = arith.constant 0 : index
    %1168 = vector.load %arg6[%c0_174, %1167, %c0_175, %c0_176] : memref<1x8x4x8xf32, #tpu.memory_space<vmem>>, vector<1x1x4x8xf32>
    %1169 = vector.shape_cast %1168 : vector<1x1x4x8xf32> to vector<4x8xf32>
    %c0_177 = arith.constant 0 : index
    %1170 = arith.index_cast %1162 : i32 to index
    %c0_178 = arith.constant 0 : index
    %c0_179 = arith.constant 0 : index
    %1171 = vector.load %arg6[%c0_177, %1170, %c0_178, %c0_179] : memref<1x8x4x8xf32, #tpu.memory_space<vmem>>, vector<1x1x4x8xf32>
    %1172 = vector.shape_cast %1171 : vector<1x1x4x8xf32> to vector<4x8xf32>
    %1173 = arith.subf %1172, %1169 : vector<4x8xf32>
    %1174 = vector.broadcast %1166 : f32 to vector<4x8xf32>
    %1175 = arith.mulf %1174, %1173 : vector<4x8xf32>
    %1176 = arith.addf %1169, %1175 : vector<4x8xf32>
    %1177 = vector.extract_strided_slice %1176 {offsets = [0, 0], sizes = [4, 1], strides = [1, 1]} : vector<4x8xf32> to vector<4x1xf32>
    %1178 = vector.extract_strided_slice %0 {offsets = [0, 0], sizes = [1, 16], strides = [1, 1]} : vector<8x16xf32> to vector<1x16xf32>
    %1179 = vector.broadcast %1177 : vector<4x1xf32> to vector<4x16xf32>
    %1180 = vector.broadcast %1178 : vector<1x16xf32> to vector<4x16xf32>
    %1181 = arith.mulf %1179, %1180 : vector<4x16xf32>
    %1182 = vector.extract_strided_slice %1176 {offsets = [0, 1], sizes = [4, 1], strides = [1, 1]} : vector<4x8xf32> to vector<4x1xf32>
    %1183 = vector.extract_strided_slice %0 {offsets = [1, 0], sizes = [1, 16], strides = [1, 1]} : vector<8x16xf32> to vector<1x16xf32>
    %1184 = vector.broadcast %1182 : vector<4x1xf32> to vector<4x16xf32>
    %1185 = vector.broadcast %1183 : vector<1x16xf32> to vector<4x16xf32>
    %1186 = arith.mulf %1184, %1185 : vector<4x16xf32>
    %1187 = arith.addf %1181, %1186 : vector<4x16xf32>
    %1188 = vector.extract_strided_slice %1176 {offsets = [0, 2], sizes = [4, 1], strides = [1, 1]} : vector<4x8xf32> to vector<4x1xf32>
    %1189 = vector.extract_strided_slice %0 {offsets = [2, 0], sizes = [1, 16], strides = [1, 1]} : vector<8x16xf32> to vector<1x16xf32>
    %1190 = vector.broadcast %1188 : vector<4x1xf32> to vector<4x16xf32>
    %1191 = vector.broadcast %1189 : vector<1x16xf32> to vector<4x16xf32>
    %1192 = arith.mulf %1190, %1191 : vector<4x16xf32>
    %1193 = arith.addf %1187, %1192 : vector<4x16xf32>
    %1194 = vector.extract_strided_slice %1176 {offsets = [0, 3], sizes = [4, 1], strides = [1, 1]} : vector<4x8xf32> to vector<4x1xf32>
    %1195 = vector.extract_strided_slice %0 {offsets = [3, 0], sizes = [1, 16], strides = [1, 1]} : vector<8x16xf32> to vector<1x16xf32>
    %1196 = vector.broadcast %1194 : vector<4x1xf32> to vector<4x16xf32>
    %1197 = vector.broadcast %1195 : vector<1x16xf32> to vector<4x16xf32>
    %1198 = arith.mulf %1196, %1197 : vector<4x16xf32>
    %1199 = arith.addf %1193, %1198 : vector<4x16xf32>
    %1200 = vector.extract_strided_slice %1176 {offsets = [0, 4], sizes = [4, 1], strides = [1, 1]} : vector<4x8xf32> to vector<4x1xf32>
    %1201 = vector.extract_strided_slice %0 {offsets = [4, 0], sizes = [1, 16], strides = [1, 1]} : vector<8x16xf32> to vector<1x16xf32>
    %1202 = vector.broadcast %1200 : vector<4x1xf32> to vector<4x16xf32>
    %1203 = vector.broadcast %1201 : vector<1x16xf32> to vector<4x16xf32>
    %1204 = arith.mulf %1202, %1203 : vector<4x16xf32>
    %1205 = arith.addf %1199, %1204 : vector<4x16xf32>
    %1206 = vector.extract_strided_slice %1176 {offsets = [0, 5], sizes = [4, 1], strides = [1, 1]} : vector<4x8xf32> to vector<4x1xf32>
    %1207 = vector.extract_strided_slice %0 {offsets = [5, 0], sizes = [1, 16], strides = [1, 1]} : vector<8x16xf32> to vector<1x16xf32>
    %1208 = vector.broadcast %1206 : vector<4x1xf32> to vector<4x16xf32>
    %1209 = vector.broadcast %1207 : vector<1x16xf32> to vector<4x16xf32>
    %1210 = arith.mulf %1208, %1209 : vector<4x16xf32>
    %1211 = arith.addf %1205, %1210 : vector<4x16xf32>
    %1212 = vector.extract_strided_slice %1176 {offsets = [0, 6], sizes = [4, 1], strides = [1, 1]} : vector<4x8xf32> to vector<4x1xf32>
    %1213 = vector.extract_strided_slice %0 {offsets = [6, 0], sizes = [1, 16], strides = [1, 1]} : vector<8x16xf32> to vector<1x16xf32>
    %1214 = vector.broadcast %1212 : vector<4x1xf32> to vector<4x16xf32>
    %1215 = vector.broadcast %1213 : vector<1x16xf32> to vector<4x16xf32>
    %1216 = arith.mulf %1214, %1215 : vector<4x16xf32>
    %1217 = arith.addf %1211, %1216 : vector<4x16xf32>
    %1218 = vector.extract_strided_slice %1176 {offsets = [0, 7], sizes = [4, 1], strides = [1, 1]} : vector<4x8xf32> to vector<4x1xf32>
    %1219 = vector.extract_strided_slice %0 {offsets = [7, 0], sizes = [1, 16], strides = [1, 1]} : vector<8x16xf32> to vector<1x16xf32>
    %1220 = vector.broadcast %1218 : vector<4x1xf32> to vector<4x16xf32>
    %1221 = vector.broadcast %1219 : vector<1x16xf32> to vector<4x16xf32>
    %1222 = arith.mulf %1220, %1221 : vector<4x16xf32>
    %1223 = arith.addf %1217, %1222 : vector<4x16xf32>
    %c0_180 = arith.constant 0 : index
    %c0_181 = arith.constant 0 : index
    %c12 = arith.constant 12 : index
    %c0_182 = arith.constant 0 : index
    %1224 = vector.load %arg5[%c0_180, %c0_181, %c12, %c0_182] : memref<1x4x16x16xf32, #tpu.memory_space<vmem>>, vector<1x4x1x16xf32>
    %1225 = vector.shape_cast %1224 : vector<1x4x1x16xf32> to vector<4x16xf32>
    %1226 = arith.mulf %1225, %1223 : vector<4x16xf32>
    %1227 = vector.extract_strided_slice %1 {offsets = [0, 0], sizes = [3, 1], strides = [1, 1]} : vector<3x4xf32> to vector<3x1xf32>
    %1228 = vector.extract_strided_slice %1226 {offsets = [0, 0], sizes = [1, 16], strides = [1, 1]} : vector<4x16xf32> to vector<1x16xf32>
    %1229 = vector.broadcast %1227 : vector<3x1xf32> to vector<3x16xf32>
    %1230 = vector.broadcast %1228 : vector<1x16xf32> to vector<3x16xf32>
    %1231 = arith.mulf %1229, %1230 : vector<3x16xf32>
    %1232 = arith.addf %4, %1231 : vector<3x16xf32>
    %1233 = vector.extract_strided_slice %1 {offsets = [0, 1], sizes = [3, 1], strides = [1, 1]} : vector<3x4xf32> to vector<3x1xf32>
    %1234 = vector.extract_strided_slice %1226 {offsets = [1, 0], sizes = [1, 16], strides = [1, 1]} : vector<4x16xf32> to vector<1x16xf32>
    %1235 = vector.broadcast %1233 : vector<3x1xf32> to vector<3x16xf32>
    %1236 = vector.broadcast %1234 : vector<1x16xf32> to vector<3x16xf32>
    %1237 = arith.mulf %1235, %1236 : vector<3x16xf32>
    %1238 = arith.addf %1232, %1237 : vector<3x16xf32>
    %1239 = vector.extract_strided_slice %1 {offsets = [0, 2], sizes = [3, 1], strides = [1, 1]} : vector<3x4xf32> to vector<3x1xf32>
    %1240 = vector.extract_strided_slice %1226 {offsets = [2, 0], sizes = [1, 16], strides = [1, 1]} : vector<4x16xf32> to vector<1x16xf32>
    %1241 = vector.broadcast %1239 : vector<3x1xf32> to vector<3x16xf32>
    %1242 = vector.broadcast %1240 : vector<1x16xf32> to vector<3x16xf32>
    %1243 = arith.mulf %1241, %1242 : vector<3x16xf32>
    %1244 = arith.addf %1238, %1243 : vector<3x16xf32>
    %1245 = vector.extract_strided_slice %1 {offsets = [0, 3], sizes = [3, 1], strides = [1, 1]} : vector<3x4xf32> to vector<3x1xf32>
    %1246 = vector.extract_strided_slice %1226 {offsets = [3, 0], sizes = [1, 16], strides = [1, 1]} : vector<4x16xf32> to vector<1x16xf32>
    %1247 = vector.broadcast %1245 : vector<3x1xf32> to vector<3x16xf32>
    %1248 = vector.broadcast %1246 : vector<1x16xf32> to vector<3x16xf32>
    %1249 = arith.mulf %1247, %1248 : vector<3x16xf32>
    %1250 = arith.addf %1244, %1249 : vector<3x16xf32>
    %c0_183 = arith.constant 0 : index
    %c0_184 = arith.constant 0 : index
    %c12_185 = arith.constant 12 : index
    %c0_186 = arith.constant 0 : index
    %1251 = vector.load %arg10[%c0_183, %c0_184, %c12_185, %c0_186] : memref<1x3x16x16xf32, #tpu.memory_space<vmem>>, vector<1x3x1x16xf32>
    %1252 = vector.shape_cast %1251 : vector<1x3x1x16xf32> to vector<3x16xf32>
    %1253 = vector.shape_cast %1250 : vector<3x16xf32> to vector<1x3x1x16xf32>
    tpu.vector_store %arg10[%c0_183, %c0_184, %c12_185, %c0_186], %1253 {strides = array<i32>} : memref<1x3x16x16xf32, #tpu.memory_space<vmem>>, vector<1x3x1x16xf32>,
    %c13_i32 = arith.constant 13 : i32
    %1254 = arith.addi %5, %c13_i32 : i32
    %1255 = arith.index_cast %1254 : i32 to index
    %1256 = memref.load %arg2[%1255] : memref<16xi32, #tpu.memory_space<smem>>
    %1257 = arith.index_cast %1254 : i32 to index
    %1258 = memref.load %arg3[%1257] : memref<16xi32, #tpu.memory_space<smem>>
    %1259 = arith.index_cast %1254 : i32 to index
    %1260 = memref.load %arg4[%1259] : memref<16xi32, #tpu.memory_space<smem>>
    %1261 = arith.sitofp %1260 : i32 to f32
    %cst_187 = arith.constant 5.96046448E-8 : f32
    %1262 = arith.mulf %1261, %cst_187 : f32
    %c0_188 = arith.constant 0 : index
    %1263 = arith.index_cast %1256 : i32 to index
    %c0_189 = arith.constant 0 : index
    %c0_190 = arith.constant 0 : index
    %1264 = vector.load %arg6[%c0_188, %1263, %c0_189, %c0_190] : memref<1x8x4x8xf32, #tpu.memory_space<vmem>>, vector<1x1x4x8xf32>
    %1265 = vector.shape_cast %1264 : vector<1x1x4x8xf32> to vector<4x8xf32>
    %c0_191 = arith.constant 0 : index
    %1266 = arith.index_cast %1258 : i32 to index
    %c0_192 = arith.constant 0 : index
    %c0_193 = arith.constant 0 : index
    %1267 = vector.load %arg6[%c0_191, %1266, %c0_192, %c0_193] : memref<1x8x4x8xf32, #tpu.memory_space<vmem>>, vector<1x1x4x8xf32>
    %1268 = vector.shape_cast %1267 : vector<1x1x4x8xf32> to vector<4x8xf32>
    %1269 = arith.subf %1268, %1265 : vector<4x8xf32>
    %1270 = vector.broadcast %1262 : f32 to vector<4x8xf32>
    %1271 = arith.mulf %1270, %1269 : vector<4x8xf32>
    %1272 = arith.addf %1265, %1271 : vector<4x8xf32>
    %1273 = vector.extract_strided_slice %1272 {offsets = [0, 0], sizes = [4, 1], strides = [1, 1]} : vector<4x8xf32> to vector<4x1xf32>
    %1274 = vector.extract_strided_slice %0 {offsets = [0, 0], sizes = [1, 16], strides = [1, 1]} : vector<8x16xf32> to vector<1x16xf32>
    %1275 = vector.broadcast %1273 : vector<4x1xf32> to vector<4x16xf32>
    %1276 = vector.broadcast %1274 : vector<1x16xf32> to vector<4x16xf32>
    %1277 = arith.mulf %1275, %1276 : vector<4x16xf32>
    %1278 = vector.extract_strided_slice %1272 {offsets = [0, 1], sizes = [4, 1], strides = [1, 1]} : vector<4x8xf32> to vector<4x1xf32>
    %1279 = vector.extract_strided_slice %0 {offsets = [1, 0], sizes = [1, 16], strides = [1, 1]} : vector<8x16xf32> to vector<1x16xf32>
    %1280 = vector.broadcast %1278 : vector<4x1xf32> to vector<4x16xf32>
    %1281 = vector.broadcast %1279 : vector<1x16xf32> to vector<4x16xf32>
    %1282 = arith.mulf %1280, %1281 : vector<4x16xf32>
    %1283 = arith.addf %1277, %1282 : vector<4x16xf32>
    %1284 = vector.extract_strided_slice %1272 {offsets = [0, 2], sizes = [4, 1], strides = [1, 1]} : vector<4x8xf32> to vector<4x1xf32>
    %1285 = vector.extract_strided_slice %0 {offsets = [2, 0], sizes = [1, 16], strides = [1, 1]} : vector<8x16xf32> to vector<1x16xf32>
    %1286 = vector.broadcast %1284 : vector<4x1xf32> to vector<4x16xf32>
    %1287 = vector.broadcast %1285 : vector<1x16xf32> to vector<4x16xf32>
    %1288 = arith.mulf %1286, %1287 : vector<4x16xf32>
    %1289 = arith.addf %1283, %1288 : vector<4x16xf32>
    %1290 = vector.extract_strided_slice %1272 {offsets = [0, 3], sizes = [4, 1], strides = [1, 1]} : vector<4x8xf32> to vector<4x1xf32>
    %1291 = vector.extract_strided_slice %0 {offsets = [3, 0], sizes = [1, 16], strides = [1, 1]} : vector<8x16xf32> to vector<1x16xf32>
    %1292 = vector.broadcast %1290 : vector<4x1xf32> to vector<4x16xf32>
    %1293 = vector.broadcast %1291 : vector<1x16xf32> to vector<4x16xf32>
    %1294 = arith.mulf %1292, %1293 : vector<4x16xf32>
    %1295 = arith.addf %1289, %1294 : vector<4x16xf32>
    %1296 = vector.extract_strided_slice %1272 {offsets = [0, 4], sizes = [4, 1], strides = [1, 1]} : vector<4x8xf32> to vector<4x1xf32>
    %1297 = vector.extract_strided_slice %0 {offsets = [4, 0], sizes = [1, 16], strides = [1, 1]} : vector<8x16xf32> to vector<1x16xf32>
    %1298 = vector.broadcast %1296 : vector<4x1xf32> to vector<4x16xf32>
    %1299 = vector.broadcast %1297 : vector<1x16xf32> to vector<4x16xf32>
    %1300 = arith.mulf %1298, %1299 : vector<4x16xf32>
    %1301 = arith.addf %1295, %1300 : vector<4x16xf32>
    %1302 = vector.extract_strided_slice %1272 {offsets = [0, 5], sizes = [4, 1], strides = [1, 1]} : vector<4x8xf32> to vector<4x1xf32>
    %1303 = vector.extract_strided_slice %0 {offsets = [5, 0], sizes = [1, 16], strides = [1, 1]} : vector<8x16xf32> to vector<1x16xf32>
    %1304 = vector.broadcast %1302 : vector<4x1xf32> to vector<4x16xf32>
    %1305 = vector.broadcast %1303 : vector<1x16xf32> to vector<4x16xf32>
    %1306 = arith.mulf %1304, %1305 : vector<4x16xf32>
    %1307 = arith.addf %1301, %1306 : vector<4x16xf32>
    %1308 = vector.extract_strided_slice %1272 {offsets = [0, 6], sizes = [4, 1], strides = [1, 1]} : vector<4x8xf32> to vector<4x1xf32>
    %1309 = vector.extract_strided_slice %0 {offsets = [6, 0], sizes = [1, 16], strides = [1, 1]} : vector<8x16xf32> to vector<1x16xf32>
    %1310 = vector.broadcast %1308 : vector<4x1xf32> to vector<4x16xf32>
    %1311 = vector.broadcast %1309 : vector<1x16xf32> to vector<4x16xf32>
    %1312 = arith.mulf %1310, %1311 : vector<4x16xf32>
    %1313 = arith.addf %1307, %1312 : vector<4x16xf32>
    %1314 = vector.extract_strided_slice %1272 {offsets = [0, 7], sizes = [4, 1], strides = [1, 1]} : vector<4x8xf32> to vector<4x1xf32>
    %1315 = vector.extract_strided_slice %0 {offsets = [7, 0], sizes = [1, 16], strides = [1, 1]} : vector<8x16xf32> to vector<1x16xf32>
    %1316 = vector.broadcast %1314 : vector<4x1xf32> to vector<4x16xf32>
    %1317 = vector.broadcast %1315 : vector<1x16xf32> to vector<4x16xf32>
    %1318 = arith.mulf %1316, %1317 : vector<4x16xf32>
    %1319 = arith.addf %1313, %1318 : vector<4x16xf32>
    %c0_194 = arith.constant 0 : index
    %c0_195 = arith.constant 0 : index
    %c13 = arith.constant 13 : index
    %c0_196 = arith.constant 0 : index
    %1320 = vector.load %arg5[%c0_194, %c0_195, %c13, %c0_196] : memref<1x4x16x16xf32, #tpu.memory_space<vmem>>, vector<1x4x1x16xf32>
    %1321 = vector.shape_cast %1320 : vector<1x4x1x16xf32> to vector<4x16xf32>
    %1322 = arith.mulf %1321, %1319 : vector<4x16xf32>
    %1323 = vector.extract_strided_slice %1 {offsets = [0, 0], sizes = [3, 1], strides = [1, 1]} : vector<3x4xf32> to vector<3x1xf32>
    %1324 = vector.extract_strided_slice %1322 {offsets = [0, 0], sizes = [1, 16], strides = [1, 1]} : vector<4x16xf32> to vector<1x16xf32>
    %1325 = vector.broadcast %1323 : vector<3x1xf32> to vector<3x16xf32>
    %1326 = vector.broadcast %1324 : vector<1x16xf32> to vector<3x16xf32>
    %1327 = arith.mulf %1325, %1326 : vector<3x16xf32>
    %1328 = arith.addf %4, %1327 : vector<3x16xf32>
    %1329 = vector.extract_strided_slice %1 {offsets = [0, 1], sizes = [3, 1], strides = [1, 1]} : vector<3x4xf32> to vector<3x1xf32>
    %1330 = vector.extract_strided_slice %1322 {offsets = [1, 0], sizes = [1, 16], strides = [1, 1]} : vector<4x16xf32> to vector<1x16xf32>
    %1331 = vector.broadcast %1329 : vector<3x1xf32> to vector<3x16xf32>
    %1332 = vector.broadcast %1330 : vector<1x16xf32> to vector<3x16xf32>
    %1333 = arith.mulf %1331, %1332 : vector<3x16xf32>
    %1334 = arith.addf %1328, %1333 : vector<3x16xf32>
    %1335 = vector.extract_strided_slice %1 {offsets = [0, 2], sizes = [3, 1], strides = [1, 1]} : vector<3x4xf32> to vector<3x1xf32>
    %1336 = vector.extract_strided_slice %1322 {offsets = [2, 0], sizes = [1, 16], strides = [1, 1]} : vector<4x16xf32> to vector<1x16xf32>
    %1337 = vector.broadcast %1335 : vector<3x1xf32> to vector<3x16xf32>
    %1338 = vector.broadcast %1336 : vector<1x16xf32> to vector<3x16xf32>
    %1339 = arith.mulf %1337, %1338 : vector<3x16xf32>
    %1340 = arith.addf %1334, %1339 : vector<3x16xf32>
    %1341 = vector.extract_strided_slice %1 {offsets = [0, 3], sizes = [3, 1], strides = [1, 1]} : vector<3x4xf32> to vector<3x1xf32>
    %1342 = vector.extract_strided_slice %1322 {offsets = [3, 0], sizes = [1, 16], strides = [1, 1]} : vector<4x16xf32> to vector<1x16xf32>
    %1343 = vector.broadcast %1341 : vector<3x1xf32> to vector<3x16xf32>
    %1344 = vector.broadcast %1342 : vector<1x16xf32> to vector<3x16xf32>
    %1345 = arith.mulf %1343, %1344 : vector<3x16xf32>
    %1346 = arith.addf %1340, %1345 : vector<3x16xf32>
    %c0_197 = arith.constant 0 : index
    %c0_198 = arith.constant 0 : index
    %c13_199 = arith.constant 13 : index
    %c0_200 = arith.constant 0 : index
    %1347 = vector.load %arg10[%c0_197, %c0_198, %c13_199, %c0_200] : memref<1x3x16x16xf32, #tpu.memory_space<vmem>>, vector<1x3x1x16xf32>
    %1348 = vector.shape_cast %1347 : vector<1x3x1x16xf32> to vector<3x16xf32>
    %1349 = vector.shape_cast %1346 : vector<3x16xf32> to vector<1x3x1x16xf32>
    tpu.vector_store %arg10[%c0_197, %c0_198, %c13_199, %c0_200], %1349 {strides = array<i32>} : memref<1x3x16x16xf32, #tpu.memory_space<vmem>>, vector<1x3x1x16xf32>,
    %c14_i32 = arith.constant 14 : i32
    %1350 = arith.addi %5, %c14_i32 : i32
    %1351 = arith.index_cast %1350 : i32 to index
    %1352 = memref.load %arg2[%1351] : memref<16xi32, #tpu.memory_space<smem>>
    %1353 = arith.index_cast %1350 : i32 to index
    %1354 = memref.load %arg3[%1353] : memref<16xi32, #tpu.memory_space<smem>>
    %1355 = arith.index_cast %1350 : i32 to index
    %1356 = memref.load %arg4[%1355] : memref<16xi32, #tpu.memory_space<smem>>
    %1357 = arith.sitofp %1356 : i32 to f32
    %cst_201 = arith.constant 5.96046448E-8 : f32
    %1358 = arith.mulf %1357, %cst_201 : f32
    %c0_202 = arith.constant 0 : index
    %1359 = arith.index_cast %1352 : i32 to index
    %c0_203 = arith.constant 0 : index
    %c0_204 = arith.constant 0 : index
    %1360 = vector.load %arg6[%c0_202, %1359, %c0_203, %c0_204] : memref<1x8x4x8xf32, #tpu.memory_space<vmem>>, vector<1x1x4x8xf32>
    %1361 = vector.shape_cast %1360 : vector<1x1x4x8xf32> to vector<4x8xf32>
    %c0_205 = arith.constant 0 : index
    %1362 = arith.index_cast %1354 : i32 to index
    %c0_206 = arith.constant 0 : index
    %c0_207 = arith.constant 0 : index
    %1363 = vector.load %arg6[%c0_205, %1362, %c0_206, %c0_207] : memref<1x8x4x8xf32, #tpu.memory_space<vmem>>, vector<1x1x4x8xf32>
    %1364 = vector.shape_cast %1363 : vector<1x1x4x8xf32> to vector<4x8xf32>
    %1365 = arith.subf %1364, %1361 : vector<4x8xf32>
    %1366 = vector.broadcast %1358 : f32 to vector<4x8xf32>
    %1367 = arith.mulf %1366, %1365 : vector<4x8xf32>
    %1368 = arith.addf %1361, %1367 : vector<4x8xf32>
    %1369 = vector.extract_strided_slice %1368 {offsets = [0, 0], sizes = [4, 1], strides = [1, 1]} : vector<4x8xf32> to vector<4x1xf32>
    %1370 = vector.extract_strided_slice %0 {offsets = [0, 0], sizes = [1, 16], strides = [1, 1]} : vector<8x16xf32> to vector<1x16xf32>
    %1371 = vector.broadcast %1369 : vector<4x1xf32> to vector<4x16xf32>
    %1372 = vector.broadcast %1370 : vector<1x16xf32> to vector<4x16xf32>
    %1373 = arith.mulf %1371, %1372 : vector<4x16xf32>
    %1374 = vector.extract_strided_slice %1368 {offsets = [0, 1], sizes = [4, 1], strides = [1, 1]} : vector<4x8xf32> to vector<4x1xf32>
    %1375 = vector.extract_strided_slice %0 {offsets = [1, 0], sizes = [1, 16], strides = [1, 1]} : vector<8x16xf32> to vector<1x16xf32>
    %1376 = vector.broadcast %1374 : vector<4x1xf32> to vector<4x16xf32>
    %1377 = vector.broadcast %1375 : vector<1x16xf32> to vector<4x16xf32>
    %1378 = arith.mulf %1376, %1377 : vector<4x16xf32>
    %1379 = arith.addf %1373, %1378 : vector<4x16xf32>
    %1380 = vector.extract_strided_slice %1368 {offsets = [0, 2], sizes = [4, 1], strides = [1, 1]} : vector<4x8xf32> to vector<4x1xf32>
    %1381 = vector.extract_strided_slice %0 {offsets = [2, 0], sizes = [1, 16], strides = [1, 1]} : vector<8x16xf32> to vector<1x16xf32>
    %1382 = vector.broadcast %1380 : vector<4x1xf32> to vector<4x16xf32>
    %1383 = vector.broadcast %1381 : vector<1x16xf32> to vector<4x16xf32>
    %1384 = arith.mulf %1382, %1383 : vector<4x16xf32>
    %1385 = arith.addf %1379, %1384 : vector<4x16xf32>
    %1386 = vector.extract_strided_slice %1368 {offsets = [0, 3], sizes = [4, 1], strides = [1, 1]} : vector<4x8xf32> to vector<4x1xf32>
    %1387 = vector.extract_strided_slice %0 {offsets = [3, 0], sizes = [1, 16], strides = [1, 1]} : vector<8x16xf32> to vector<1x16xf32>
    %1388 = vector.broadcast %1386 : vector<4x1xf32> to vector<4x16xf32>
    %1389 = vector.broadcast %1387 : vector<1x16xf32> to vector<4x16xf32>
    %1390 = arith.mulf %1388, %1389 : vector<4x16xf32>
    %1391 = arith.addf %1385, %1390 : vector<4x16xf32>
    %1392 = vector.extract_strided_slice %1368 {offsets = [0, 4], sizes = [4, 1], strides = [1, 1]} : vector<4x8xf32> to vector<4x1xf32>
    %1393 = vector.extract_strided_slice %0 {offsets = [4, 0], sizes = [1, 16], strides = [1, 1]} : vector<8x16xf32> to vector<1x16xf32>
    %1394 = vector.broadcast %1392 : vector<4x1xf32> to vector<4x16xf32>
    %1395 = vector.broadcast %1393 : vector<1x16xf32> to vector<4x16xf32>
    %1396 = arith.mulf %1394, %1395 : vector<4x16xf32>
    %1397 = arith.addf %1391, %1396 : vector<4x16xf32>
    %1398 = vector.extract_strided_slice %1368 {offsets = [0, 5], sizes = [4, 1], strides = [1, 1]} : vector<4x8xf32> to vector<4x1xf32>
    %1399 = vector.extract_strided_slice %0 {offsets = [5, 0], sizes = [1, 16], strides = [1, 1]} : vector<8x16xf32> to vector<1x16xf32>
    %1400 = vector.broadcast %1398 : vector<4x1xf32> to vector<4x16xf32>
    %1401 = vector.broadcast %1399 : vector<1x16xf32> to vector<4x16xf32>
    %1402 = arith.mulf %1400, %1401 : vector<4x16xf32>
    %1403 = arith.addf %1397, %1402 : vector<4x16xf32>
    %1404 = vector.extract_strided_slice %1368 {offsets = [0, 6], sizes = [4, 1], strides = [1, 1]} : vector<4x8xf32> to vector<4x1xf32>
    %1405 = vector.extract_strided_slice %0 {offsets = [6, 0], sizes = [1, 16], strides = [1, 1]} : vector<8x16xf32> to vector<1x16xf32>
    %1406 = vector.broadcast %1404 : vector<4x1xf32> to vector<4x16xf32>
    %1407 = vector.broadcast %1405 : vector<1x16xf32> to vector<4x16xf32>
    %1408 = arith.mulf %1406, %1407 : vector<4x16xf32>
    %1409 = arith.addf %1403, %1408 : vector<4x16xf32>
    %1410 = vector.extract_strided_slice %1368 {offsets = [0, 7], sizes = [4, 1], strides = [1, 1]} : vector<4x8xf32> to vector<4x1xf32>
    %1411 = vector.extract_strided_slice %0 {offsets = [7, 0], sizes = [1, 16], strides = [1, 1]} : vector<8x16xf32> to vector<1x16xf32>
    %1412 = vector.broadcast %1410 : vector<4x1xf32> to vector<4x16xf32>
    %1413 = vector.broadcast %1411 : vector<1x16xf32> to vector<4x16xf32>
    %1414 = arith.mulf %1412, %1413 : vector<4x16xf32>
    %1415 = arith.addf %1409, %1414 : vector<4x16xf32>
    %c0_208 = arith.constant 0 : index
    %c0_209 = arith.constant 0 : index
    %c14 = arith.constant 14 : index
    %c0_210 = arith.constant 0 : index
    %1416 = vector.load %arg5[%c0_208, %c0_209, %c14, %c0_210] : memref<1x4x16x16xf32, #tpu.memory_space<vmem>>, vector<1x4x1x16xf32>
    %1417 = vector.shape_cast %1416 : vector<1x4x1x16xf32> to vector<4x16xf32>
    %1418 = arith.mulf %1417, %1415 : vector<4x16xf32>
    %1419 = vector.extract_strided_slice %1 {offsets = [0, 0], sizes = [3, 1], strides = [1, 1]} : vector<3x4xf32> to vector<3x1xf32>
    %1420 = vector.extract_strided_slice %1418 {offsets = [0, 0], sizes = [1, 16], strides = [1, 1]} : vector<4x16xf32> to vector<1x16xf32>
    %1421 = vector.broadcast %1419 : vector<3x1xf32> to vector<3x16xf32>
    %1422 = vector.broadcast %1420 : vector<1x16xf32> to vector<3x16xf32>
    %1423 = arith.mulf %1421, %1422 : vector<3x16xf32>
    %1424 = arith.addf %4, %1423 : vector<3x16xf32>
    %1425 = vector.extract_strided_slice %1 {offsets = [0, 1], sizes = [3, 1], strides = [1, 1]} : vector<3x4xf32> to vector<3x1xf32>
    %1426 = vector.extract_strided_slice %1418 {offsets = [1, 0], sizes = [1, 16], strides = [1, 1]} : vector<4x16xf32> to vector<1x16xf32>
    %1427 = vector.broadcast %1425 : vector<3x1xf32> to vector<3x16xf32>
    %1428 = vector.broadcast %1426 : vector<1x16xf32> to vector<3x16xf32>
    %1429 = arith.mulf %1427, %1428 : vector<3x16xf32>
    %1430 = arith.addf %1424, %1429 : vector<3x16xf32>
    %1431 = vector.extract_strided_slice %1 {offsets = [0, 2], sizes = [3, 1], strides = [1, 1]} : vector<3x4xf32> to vector<3x1xf32>
    %1432 = vector.extract_strided_slice %1418 {offsets = [2, 0], sizes = [1, 16], strides = [1, 1]} : vector<4x16xf32> to vector<1x16xf32>
    %1433 = vector.broadcast %1431 : vector<3x1xf32> to vector<3x16xf32>
    %1434 = vector.broadcast %1432 : vector<1x16xf32> to vector<3x16xf32>
    %1435 = arith.mulf %1433, %1434 : vector<3x16xf32>
    %1436 = arith.addf %1430, %1435 : vector<3x16xf32>
    %1437 = vector.extract_strided_slice %1 {offsets = [0, 3], sizes = [3, 1], strides = [1, 1]} : vector<3x4xf32> to vector<3x1xf32>
    %1438 = vector.extract_strided_slice %1418 {offsets = [3, 0], sizes = [1, 16], strides = [1, 1]} : vector<4x16xf32> to vector<1x16xf32>
    %1439 = vector.broadcast %1437 : vector<3x1xf32> to vector<3x16xf32>
    %1440 = vector.broadcast %1438 : vector<1x16xf32> to vector<3x16xf32>
    %1441 = arith.mulf %1439, %1440 : vector<3x16xf32>
    %1442 = arith.addf %1436, %1441 : vector<3x16xf32>
    %c0_211 = arith.constant 0 : index
    %c0_212 = arith.constant 0 : index
    %c14_213 = arith.constant 14 : index
    %c0_214 = arith.constant 0 : index
    %1443 = vector.load %arg10[%c0_211, %c0_212, %c14_213, %c0_214] : memref<1x3x16x16xf32, #tpu.memory_space<vmem>>, vector<1x3x1x16xf32>
    %1444 = vector.shape_cast %1443 : vector<1x3x1x16xf32> to vector<3x16xf32>
    %1445 = vector.shape_cast %1442 : vector<3x16xf32> to vector<1x3x1x16xf32>
    tpu.vector_store %arg10[%c0_211, %c0_212, %c14_213, %c0_214], %1445 {strides = array<i32>} : memref<1x3x16x16xf32, #tpu.memory_space<vmem>>, vector<1x3x1x16xf32>,
    %c15_i32 = arith.constant 15 : i32
    %1446 = arith.addi %5, %c15_i32 : i32
    %1447 = arith.index_cast %1446 : i32 to index
    %1448 = memref.load %arg2[%1447] : memref<16xi32, #tpu.memory_space<smem>>
    %1449 = arith.index_cast %1446 : i32 to index
    %1450 = memref.load %arg3[%1449] : memref<16xi32, #tpu.memory_space<smem>>
    %1451 = arith.index_cast %1446 : i32 to index
    %1452 = memref.load %arg4[%1451] : memref<16xi32, #tpu.memory_space<smem>>
    %1453 = arith.sitofp %1452 : i32 to f32
    %cst_215 = arith.constant 5.96046448E-8 : f32
    %1454 = arith.mulf %1453, %cst_215 : f32
    %c0_216 = arith.constant 0 : index
    %1455 = arith.index_cast %1448 : i32 to index
    %c0_217 = arith.constant 0 : index
    %c0_218 = arith.constant 0 : index
    %1456 = vector.load %arg6[%c0_216, %1455, %c0_217, %c0_218] : memref<1x8x4x8xf32, #tpu.memory_space<vmem>>, vector<1x1x4x8xf32>
    %1457 = vector.shape_cast %1456 : vector<1x1x4x8xf32> to vector<4x8xf32>
    %c0_219 = arith.constant 0 : index
    %1458 = arith.index_cast %1450 : i32 to index
    %c0_220 = arith.constant 0 : index
    %c0_221 = arith.constant 0 : index
    %1459 = vector.load %arg6[%c0_219, %1458, %c0_220, %c0_221] : memref<1x8x4x8xf32, #tpu.memory_space<vmem>>, vector<1x1x4x8xf32>
    %1460 = vector.shape_cast %1459 : vector<1x1x4x8xf32> to vector<4x8xf32>
    %1461 = arith.subf %1460, %1457 : vector<4x8xf32>
    %1462 = vector.broadcast %1454 : f32 to vector<4x8xf32>
    %1463 = arith.mulf %1462, %1461 : vector<4x8xf32>
    %1464 = arith.addf %1457, %1463 : vector<4x8xf32>
    %1465 = vector.extract_strided_slice %1464 {offsets = [0, 0], sizes = [4, 1], strides = [1, 1]} : vector<4x8xf32> to vector<4x1xf32>
    %1466 = vector.extract_strided_slice %0 {offsets = [0, 0], sizes = [1, 16], strides = [1, 1]} : vector<8x16xf32> to vector<1x16xf32>
    %1467 = vector.broadcast %1465 : vector<4x1xf32> to vector<4x16xf32>
    %1468 = vector.broadcast %1466 : vector<1x16xf32> to vector<4x16xf32>
    %1469 = arith.mulf %1467, %1468 : vector<4x16xf32>
    %1470 = vector.extract_strided_slice %1464 {offsets = [0, 1], sizes = [4, 1], strides = [1, 1]} : vector<4x8xf32> to vector<4x1xf32>
    %1471 = vector.extract_strided_slice %0 {offsets = [1, 0], sizes = [1, 16], strides = [1, 1]} : vector<8x16xf32> to vector<1x16xf32>
    %1472 = vector.broadcast %1470 : vector<4x1xf32> to vector<4x16xf32>
    %1473 = vector.broadcast %1471 : vector<1x16xf32> to vector<4x16xf32>
    %1474 = arith.mulf %1472, %1473 : vector<4x16xf32>
    %1475 = arith.addf %1469, %1474 : vector<4x16xf32>
    %1476 = vector.extract_strided_slice %1464 {offsets = [0, 2], sizes = [4, 1], strides = [1, 1]} : vector<4x8xf32> to vector<4x1xf32>
    %1477 = vector.extract_strided_slice %0 {offsets = [2, 0], sizes = [1, 16], strides = [1, 1]} : vector<8x16xf32> to vector<1x16xf32>
    %1478 = vector.broadcast %1476 : vector<4x1xf32> to vector<4x16xf32>
    %1479 = vector.broadcast %1477 : vector<1x16xf32> to vector<4x16xf32>
    %1480 = arith.mulf %1478, %1479 : vector<4x16xf32>
    %1481 = arith.addf %1475, %1480 : vector<4x16xf32>
    %1482 = vector.extract_strided_slice %1464 {offsets = [0, 3], sizes = [4, 1], strides = [1, 1]} : vector<4x8xf32> to vector<4x1xf32>
    %1483 = vector.extract_strided_slice %0 {offsets = [3, 0], sizes = [1, 16], strides = [1, 1]} : vector<8x16xf32> to vector<1x16xf32>
    %1484 = vector.broadcast %1482 : vector<4x1xf32> to vector<4x16xf32>
    %1485 = vector.broadcast %1483 : vector<1x16xf32> to vector<4x16xf32>
    %1486 = arith.mulf %1484, %1485 : vector<4x16xf32>
    %1487 = arith.addf %1481, %1486 : vector<4x16xf32>
    %1488 = vector.extract_strided_slice %1464 {offsets = [0, 4], sizes = [4, 1], strides = [1, 1]} : vector<4x8xf32> to vector<4x1xf32>
    %1489 = vector.extract_strided_slice %0 {offsets = [4, 0], sizes = [1, 16], strides = [1, 1]} : vector<8x16xf32> to vector<1x16xf32>
    %1490 = vector.broadcast %1488 : vector<4x1xf32> to vector<4x16xf32>
    %1491 = vector.broadcast %1489 : vector<1x16xf32> to vector<4x16xf32>
    %1492 = arith.mulf %1490, %1491 : vector<4x16xf32>
    %1493 = arith.addf %1487, %1492 : vector<4x16xf32>
    %1494 = vector.extract_strided_slice %1464 {offsets = [0, 5], sizes = [4, 1], strides = [1, 1]} : vector<4x8xf32> to vector<4x1xf32>
    %1495 = vector.extract_strided_slice %0 {offsets = [5, 0], sizes = [1, 16], strides = [1, 1]} : vector<8x16xf32> to vector<1x16xf32>
    %1496 = vector.broadcast %1494 : vector<4x1xf32> to vector<4x16xf32>
    %1497 = vector.broadcast %1495 : vector<1x16xf32> to vector<4x16xf32>
    %1498 = arith.mulf %1496, %1497 : vector<4x16xf32>
    %1499 = arith.addf %1493, %1498 : vector<4x16xf32>
    %1500 = vector.extract_strided_slice %1464 {offsets = [0, 6], sizes = [4, 1], strides = [1, 1]} : vector<4x8xf32> to vector<4x1xf32>
    %1501 = vector.extract_strided_slice %0 {offsets = [6, 0], sizes = [1, 16], strides = [1, 1]} : vector<8x16xf32> to vector<1x16xf32>
    %1502 = vector.broadcast %1500 : vector<4x1xf32> to vector<4x16xf32>
    %1503 = vector.broadcast %1501 : vector<1x16xf32> to vector<4x16xf32>
    %1504 = arith.mulf %1502, %1503 : vector<4x16xf32>
    %1505 = arith.addf %1499, %1504 : vector<4x16xf32>
    %1506 = vector.extract_strided_slice %1464 {offsets = [0, 7], sizes = [4, 1], strides = [1, 1]} : vector<4x8xf32> to vector<4x1xf32>
    %1507 = vector.extract_strided_slice %0 {offsets = [7, 0], sizes = [1, 16], strides = [1, 1]} : vector<8x16xf32> to vector<1x16xf32>
    %1508 = vector.broadcast %1506 : vector<4x1xf32> to vector<4x16xf32>
    %1509 = vector.broadcast %1507 : vector<1x16xf32> to vector<4x16xf32>
    %1510 = arith.mulf %1508, %1509 : vector<4x16xf32>
    %1511 = arith.addf %1505, %1510 : vector<4x16xf32>
    %c0_222 = arith.constant 0 : index
    %c0_223 = arith.constant 0 : index
    %c15 = arith.constant 15 : index
    %c0_224 = arith.constant 0 : index
    %1512 = vector.load %arg5[%c0_222, %c0_223, %c15, %c0_224] : memref<1x4x16x16xf32, #tpu.memory_space<vmem>>, vector<1x4x1x16xf32>
    %1513 = vector.shape_cast %1512 : vector<1x4x1x16xf32> to vector<4x16xf32>
    %1514 = arith.mulf %1513, %1511 : vector<4x16xf32>
    %1515 = vector.extract_strided_slice %1 {offsets = [0, 0], sizes = [3, 1], strides = [1, 1]} : vector<3x4xf32> to vector<3x1xf32>
    %1516 = vector.extract_strided_slice %1514 {offsets = [0, 0], sizes = [1, 16], strides = [1, 1]} : vector<4x16xf32> to vector<1x16xf32>
    %1517 = vector.broadcast %1515 : vector<3x1xf32> to vector<3x16xf32>
    %1518 = vector.broadcast %1516 : vector<1x16xf32> to vector<3x16xf32>
    %1519 = arith.mulf %1517, %1518 : vector<3x16xf32>
    %1520 = arith.addf %4, %1519 : vector<3x16xf32>
    %1521 = vector.extract_strided_slice %1 {offsets = [0, 1], sizes = [3, 1], strides = [1, 1]} : vector<3x4xf32> to vector<3x1xf32>
    %1522 = vector.extract_strided_slice %1514 {offsets = [1, 0], sizes = [1, 16], strides = [1, 1]} : vector<4x16xf32> to vector<1x16xf32>
    %1523 = vector.broadcast %1521 : vector<3x1xf32> to vector<3x16xf32>
    %1524 = vector.broadcast %1522 : vector<1x16xf32> to vector<3x16xf32>
    %1525 = arith.mulf %1523, %1524 : vector<3x16xf32>
    %1526 = arith.addf %1520, %1525 : vector<3x16xf32>
    %1527 = vector.extract_strided_slice %1 {offsets = [0, 2], sizes = [3, 1], strides = [1, 1]} : vector<3x4xf32> to vector<3x1xf32>
    %1528 = vector.extract_strided_slice %1514 {offsets = [2, 0], sizes = [1, 16], strides = [1, 1]} : vector<4x16xf32> to vector<1x16xf32>
    %1529 = vector.broadcast %1527 : vector<3x1xf32> to vector<3x16xf32>
    %1530 = vector.broadcast %1528 : vector<1x16xf32> to vector<3x16xf32>
    %1531 = arith.mulf %1529, %1530 : vector<3x16xf32>
    %1532 = arith.addf %1526, %1531 : vector<3x16xf32>
    %1533 = vector.extract_strided_slice %1 {offsets = [0, 3], sizes = [3, 1], strides = [1, 1]} : vector<3x4xf32> to vector<3x1xf32>
    %1534 = vector.extract_strided_slice %1514 {offsets = [3, 0], sizes = [1, 16], strides = [1, 1]} : vector<4x16xf32> to vector<1x16xf32>
    %1535 = vector.broadcast %1533 : vector<3x1xf32> to vector<3x16xf32>
    %1536 = vector.broadcast %1534 : vector<1x16xf32> to vector<3x16xf32>
    %1537 = arith.mulf %1535, %1536 : vector<3x16xf32>
    %1538 = arith.addf %1532, %1537 : vector<3x16xf32>
    %c0_225 = arith.constant 0 : index
    %c0_226 = arith.constant 0 : index
    %c15_227 = arith.constant 15 : index
    %c0_228 = arith.constant 0 : index
    %1539 = vector.load %arg10[%c0_225, %c0_226, %c15_227, %c0_228] : memref<1x3x16x16xf32, #tpu.memory_space<vmem>>, vector<1x3x1x16xf32>
    %1540 = vector.shape_cast %1539 : vector<1x3x1x16xf32> to vector<3x16xf32>
    %1541 = vector.shape_cast %1538 : vector<3x16xf32> to vector<1x3x1x16xf32>
    tpu.vector_store %arg10[%c0_225, %c0_226, %c15_227, %c0_228], %1541 {strides = array<i32>} : memref<1x3x16x16xf32, #tpu.memory_space<vmem>>, vector<1x3x1x16xf32>,
    return
  }
  func.func @transform_0(%arg0: i32, %arg1: i32, %arg2: memref<16xi32, #tpu.memory_space<smem>>, %arg3: memref<16xi32, #tpu.memory_space<smem>>, %arg4: memref<16xi32, #tpu.memory_space<smem>>) -> (i32, i32, i32, i32) {
    %c0_i32 = arith.constant 0 : i32
    %c0_i32_0 = arith.constant 0 : i32
    %c0_i32_1 = arith.constant 0 : i32
    return %arg0, %c0_i32, %arg1, %c0_i32_0 : i32, i32, i32, i32
  }
  func.func @transform_1(%arg0: i32, %arg1: i32, %arg2: memref<16xi32, #tpu.memory_space<smem>>, %arg3: memref<16xi32, #tpu.memory_space<smem>>, %arg4: memref<16xi32, #tpu.memory_space<smem>>) -> (i32, i32, i32, i32) {
    %c0_i32 = arith.constant 0 : i32
    %c0_i32_0 = arith.constant 0 : i32
    %c0_i32_1 = arith.constant 0 : i32
    %c0_i32_2 = arith.constant 0 : i32
    return %arg0, %c0_i32, %c0_i32_0, %c0_i32_1 : i32, i32, i32, i32
  }
  func.func @transform_2(%arg0: i32, %arg1: i32, %arg2: memref<16xi32, #tpu.memory_space<smem>>, %arg3: memref<16xi32, #tpu.memory_space<smem>>, %arg4: memref<16xi32, #tpu.memory_space<smem>>) -> (i32, i32) {
    %c0_i32 = arith.constant 0 : i32
    %c0_i32_0 = arith.constant 0 : i32
    %c0_i32_1 = arith.constant 0 : i32
    return %c0_i32, %c0_i32_0 : i32, i32
  }
  func.func @transform_3(%arg0: i32, %arg1: i32, %arg2: memref<16xi32, #tpu.memory_space<smem>>, %arg3: memref<16xi32, #tpu.memory_space<smem>>, %arg4: memref<16xi32, #tpu.memory_space<smem>>) -> (i32, i32) {
    %c0_i32 = arith.constant 0 : i32
    %c0_i32_0 = arith.constant 0 : i32
    %c0_i32_1 = arith.constant 0 : i32
    return %c0_i32, %c0_i32_0 : i32, i32
  }
  func.func @transform_4(%arg0: i32, %arg1: i32, %arg2: memref<16xi32, #tpu.memory_space<smem>>, %arg3: memref<16xi32, #tpu.memory_space<smem>>, %arg4: memref<16xi32, #tpu.memory_space<smem>>) -> (i32, i32) {
    %c0_i32 = arith.constant 0 : i32
    %c0_i32_0 = arith.constant 0 : i32
    %c0_i32_1 = arith.constant 0 : i32
    return %c0_i32, %c0_i32_0 : i32, i32
  }
  func.func @transform_5(%arg0: i32, %arg1: i32, %arg2: memref<16xi32, #tpu.memory_space<smem>>, %arg3: memref<16xi32, #tpu.memory_space<smem>>, %arg4: memref<16xi32, #tpu.memory_space<smem>>) -> (i32, i32, i32, i32) {
    %c0_i32 = arith.constant 0 : i32
    %c0_i32_0 = arith.constant 0 : i32
    %c0_i32_1 = arith.constant 0 : i32
    return %arg0, %c0_i32, %arg1, %c0_i32_0 : i32, i32, i32, i32
  }
}

</mosaic_0001>

<llo_original>
// kernel: tpu_custom_call.1
$region0: #{tpu_custom_call.1}
  #allocation0 [shape = 'u32[]', space=smem, size = 0x4, offset = 0x4, fixed_abs, tag = 'smem constant byte address 0x4 - core index']
  #allocation1 [shape = 'u32[144,128]{1,0:T(1,128)}', space=vmem, size = 0x12000, scoped, tag = 'internal scratch']
  #allocation2 [shape = 's32[1]{0}', space=sflag, size = 0x4, scoped, tag = 'scoped memory for tpu_custom_call.1']
  #allocation3 [shape = 'u8[512]{0}', space=smem, size = 0x200, scoped, tag = 'prefetched SMEM operand 0']
  #allocation4 [shape = 'u8[512]{0}', space=smem, size = 0x200, scoped, tag = 'prefetched SMEM operand 1']
  #allocation5 [shape = 'u8[512]{0}', space=smem, size = 0x200, scoped, tag = 'prefetched SMEM operand 2']
  %s0 = inlined_call_operand.vmem [shape: s32[16], index: 0, kind: input, shape index: {}]
  %s1 = inlined_call_operand.vmem [shape: s32[16], index: 1, kind: input, shape index: {}]
  %s2 = inlined_call_operand.vmem [shape: s32[16], index: 2, kind: input, shape index: {}]
  %s3 = inlined_call_operand.hbm [shape: f32[2,4,16,16], index: 3, kind: input, shape index: {}]
  %s4 = inlined_call_operand.hbm [shape: f32[2,8,4,8], index: 4, kind: input, shape index: {}]
  %s5 = inlined_call_operand.vmem [shape: f32[8,16], index: 5, kind: input, shape index: {}]
  %s6 = inlined_call_operand.vmem [shape: f32[3,4], index: 6, kind: input, shape index: {}]
  %s7 = inlined_call_operand.vmem [shape: f32[3,1], index: 7, kind: input, shape index: {}]
  %s8 = inlined_call_operand.hbm [shape: f32[2,3,16,16], index: 8, kind: output, shape index: {}]
  %s9 = sld [smem:[#allocation0]]
  $region61: #{tpu_custom_call.1} parent=0
    _
  %s11 = ssub.s32 1, %s9
  %s12 = scalar_select 0, %s11, %s9
  %s13 = sshll.u32 %s0, 4
  %s14 = int_to_ptr.vmem [resolvable:$true] %s13
  %16 = dma.vmem_to_smem %s14, 16, [#allocation3], [#allocation2]
  %s17 = sshll.u32 %s1, 4
  %s18 = int_to_ptr.vmem [resolvable:$true] %s17
  %20 = dma.vmem_to_smem %s18, 16, [#allocation4], [#allocation2]
  %s21 = sshll.u32 %s2, 4
  %s22 = int_to_ptr.vmem [resolvable:$true] %s21
  %24 = dma.vmem_to_smem %s22, 16, [#allocation5], [#allocation2]
  %25 = dma.done [#allocation2], 48
  %26 = sfence
  $region1: #{tpu_custom_call.1} parent=0
    #allocation6 [shape = 'u8[65536]{0}', space=vmem, size = 0x10000, scoped, tag = 'input window, operand 3']
    #allocation7 [shape = 's32[2]{0}', space=sflag, size = 0x8, scoped, tag = 'scoped memory for tpu_custom_call.1']
    #allocation8 [shape = 's32[2]{0}', space=sflag, size = 0x8, scoped, tag = 'scoped memory for tpu_custom_call.1']
    #allocation9 [shape = 'u8[32768]{0}', space=vmem, size = 0x8000, scoped, tag = 'input window, operand 4']
    #allocation10 [shape = 's32[2]{0}', space=sflag, size = 0x8, scoped, tag = 'scoped memory for tpu_custom_call.1']
    #allocation11 [shape = 'u8[49152]{0}', space=vmem, size = 0xc000, scoped, tag = 'output window, operand 0']
    %27 = vsyncpa [#allocation7], 0
    %s28 = scalar_lea.sflag [#allocation7], 1
    %29 = vsyncpa %s28, 0
    %30 = vsyncpa [#allocation10], 0
    %s31 = scalar_lea.sflag [#allocation10], 1
    %32 = vsyncpa %s31, 0
    %33 = vsyncpa [#allocation8], 0
    %s34 = scalar_lea.sflag [#allocation8], 1
    %35 = vsyncpa %s34, 0
    loop: start=0, step=1, limit=4
    $region2: #{tpu_custom_call.1} parent=1 // loop_pre_header
      _
    $region3: #{tpu_custom_call.1} parent=1 // loop_header
      %s37 = sphi 0, %s41
      %p38 = scmp.ge.s32.totalorder %s37, 4
      %s44 = sphi 0, %s56
      %s45 = sphi 0, %s52
      %s46 = sphi 0, %s44
      %s47 = sphi 0, %s45
      %s48 = sphi 0, %s46
      %s49 = sphi 0, %s47
      %s61 = sphi 0, %s63
      %s64 = sphi 0, %s61
      %s65 = sphi 0, %s64
      %s81 = sphi 0, %s65
      %s87 = sphi 0, %s89
      %s90 = sphi 0, %s87
      %s91 = sphi 0, %s90
      %s107 = sphi 0, %s91
      %s111 = sphi 0, %s111
      %s113 = sphi 0, %s111
      %s114 = sphi 0, %s113
      %s128 = sphi 0, %s114
      %s132 = sphi 0, %s132
      %s134 = sphi 0, %s132
      %s135 = sphi 0, %s134
      %s149 = sphi 0, %s135
      %s153 = sphi 0, %s153
      %s155 = sphi 0, %s153
      %s156 = sphi 0, %s155
      %s170 = sphi 0, %s156
      %s178 = sphi 0, %s180
      %s181 = sphi 0, %s178
      %s182 = sphi 0, %s181
      %s198 = sphi 0, %s182
    $region4: #{tpu_custom_call.1} parent=1 // loop_header_branch
      %40 = sbr.rel (%p38) target = $region8
    $region5: #{tpu_custom_call.1} parent=1 // loop_body
      %s42 = ssub.s32 %s37, 1
      %s43 = ssub.s32 %s37, 2
      %s50 = sadd.s32 1, %s45
      %p51 = scmp.ge.s32.totalorder %s50, 1
      %s52 = scalar_select %p51, 0, %s50
      %s53 = sadd.s32 1, %s44
      %s54 = scalar_select %p51, %s53, %s44
      %p55 = scmp.ge.s32.totalorder %s54, 2
      %s56 = scalar_select %p55, 0, %s54
      %s57 = ssub.s32 %s44, %s56
      %s58 = ssub.s32 %s45, %s52
      %s59 = sor.u32 %s57, %s58
      %p60 = scmp.eq.s32.totalorder %s59, 0
      %s62 = sadd.s32 %s61, 1
      %s63 = scalar_select %p60, %s61, %s62
      %p66 = pneg %p60
      %p67 = scmp.eq.s32.totalorder %s37, 1
      %p68 = por %p66, %p67
      %p69 = scmp.ne.s32.totalorder %s61, %s64
      %p70 = scmp.eq.s32.totalorder %s37, 0
      %p71 = por %p69, %p70
      %p72 = scmp.ne.s32.totalorder %s61, %s64
      %p73 = scmp.eq.s32.totalorder %s42, 1
      %p74 = por %p72, %p73
      %p75 = scmp.ne.s32.totalorder %s64, %s65
      %p76 = scmp.eq.s32.totalorder %s42, 0
      %p77 = por %p75, %p76
      %p78 = scmp.ne.s32.totalorder %s64, %s65
      %p79 = scmp.eq.s32.totalorder %s43, 1
      %p80 = por %p78, %p79
      %p82 = scmp.ne.s32.totalorder %s65, %s81
      %p83 = scmp.eq.s32.totalorder %s43, 0
      %p84 = por %p82, %p83
      %s85 = ssub.s32 %s44, %s56
      %p86 = scmp.eq.s32.totalorder %s85, 0
      %s88 = sadd.s32 %s87, 1
      %s89 = scalar_select %p86, %s87, %s88
      %p92 = pneg %p86
      %p93 = scmp.eq.s32.totalorder %s37, 1
      %p94 = por %p92, %p93
      %p95 = scmp.ne.s32.totalorder %s87, %s90
      %p96 = scmp.eq.s32.totalorder %s37, 0
      %p97 = por %p95, %p96
      %p98 = scmp.ne.s32.totalorder %s87, %s90
      %p99 = scmp.eq.s32.totalorder %s42, 1
      %p100 = por %p98, %p99
      %p101 = scmp.ne.s32.totalorder %s90, %s91
      %p102 = scmp.eq.s32.totalorder %s42, 0
      %p103 = por %p101, %p102
      %p104 = scmp.ne.s32.totalorder %s90, %s91
      %p105 = scmp.eq.s32.totalorder %s43, 1
      %p106 = por %p104, %p105
      %p108 = scmp.ne.s32.totalorder %s91, %s107
      %p109 = scmp.eq.s32.totalorder %s43, 0
      %p110 = por %p108, %p109
      %s112 = sadd.s32 %s111, 1
      %p115 = scmp.eq.s32.totalorder %s37, 1
      %p116 = scmp.ne.s32.totalorder %s111, %s113
      %p117 = scmp.eq.s32.totalorder %s37, 0
      %p118 = por %p116, %p117
      %p119 = scmp.ne.s32.totalorder %s111, %s113
      %p120 = scmp.eq.s32.totalorder %s42, 1
      %p121 = por %p119, %p120
      %p122 = scmp.ne.s32.totalorder %s113, %s114
      %p123 = scmp.eq.s32.totalorder %s42, 0
      %p124 = por %p122, %p123
      %p125 = scmp.ne.s32.totalorder %s113, %s114
      %p126 = scmp.eq.s32.totalorder %s43, 1
      %p127 = por %p125, %p126
      %p129 = scmp.ne.s32.totalorder %s114, %s128
      %p130 = scmp.eq.s32.totalorder %s43, 0
      %p131 = por %p129, %p130
      %s133 = sadd.s32 %s132, 1
      %p136 = scmp.eq.s32.totalorder %s37, 1
      %p137 = scmp.ne.s32.totalorder %s132, %s134
      %p138 = scmp.eq.s32.totalorder %s37, 0
      %p139 = por %p137, %p138
      %p140 = scmp.ne.s32.totalorder %s132, %s134
      %p141 = scmp.eq.s32.totalorder %s42, 1
      %p142 = por %p140, %p141
      %p143 = scmp.ne.s32.totalorder %s134, %s135
      %p144 = scmp.eq.s32.totalorder %s42, 0
      %p145 = por %p143, %p144
      %p146 = scmp.ne.s32.totalorder %s134, %s135
      %p147 = scmp.eq.s32.totalorder %s43, 1
      %p148 = por %p146, %p147
      %p150 = scmp.ne.s32.totalorder %s135, %s149
      %p151 = scmp.eq.s32.totalorder %s43, 0
      %p152 = por %p150, %p151
      %s154 = sadd.s32 %s153, 1
      %p157 = scmp.eq.s32.totalorder %s37, 1
      %p158 = scmp.ne.s32.totalorder %s153, %s155
      %p159 = scmp.eq.s32.totalorder %s37, 0
      %p160 = por %p158, %p159
      %p161 = scmp.ne.s32.totalorder %s153, %s155
      %p162 = scmp.eq.s32.totalorder %s42, 1
      %p163 = por %p161, %p162
      %p164 = scmp.ne.s32.totalorder %s155, %s156
      %p165 = scmp.eq.s32.totalorder %s42, 0
      %p166 = por %p164, %p165
      %p167 = scmp.ne.s32.totalorder %s155, %s156
      %p168 = scmp.eq.s32.totalorder %s43, 1
      %p169 = por %p167, %p168
      %p171 = scmp.ne.s32.totalorder %s156, %s170
      %p172 = scmp.eq.s32.totalorder %s43, 0
      %p173 = por %p171, %p172
      %s174 = ssub.s32 %s44, %s56
      %s175 = ssub.s32 %s45, %s52
      %s176 = sor.u32 %s174, %s175
      %p177 = scmp.eq.s32.totalorder %s176, 0
      %s179 = sadd.s32 %s178, 1
      %s180 = scalar_select %p177, %s178, %s179
      %p183 = pneg %p177
      %p184 = scmp.eq.s32.totalorder %s37, 1
      %p185 = por %p183, %p184
      %p186 = scmp.ne.s32.totalorder %s178, %s181
      %p187 = scmp.eq.s32.totalorder %s37, 0
      %p188 = por %p186, %p187
      %p189 = scmp.ne.s32.totalorder %s178, %s181
      %p190 = scmp.eq.s32.totalorder %s42, 1
      %p191 = por %p189, %p190
      %p192 = scmp.ne.s32.totalorder %s181, %s182
      %p193 = scmp.eq.s32.totalorder %s42, 0
      %p194 = por %p192, %p193
      %p195 = scmp.ne.s32.totalorder %s181, %s182
      %p196 = scmp.eq.s32.totalorder %s43, 1
      %p197 = por %p195, %p196
      %p199 = scmp.ne.s32.totalorder %s182, %s198
      %p200 = scmp.eq.s32.totalorder %s43, 0
      %p201 = por %p199, %p200
      %p202 = scmp.le.s32.totalorder 1, %s37
      %p203 = scmp.lt.s32.totalorder %s37, 3
      %p204 = pnand %p202, %p203
      %p205 = pneg %p204
      // Predicated region
      $region9: #{tpu_custom_call.1} parent=5 // pred_check
        _
      $region10: #{tpu_custom_call.1} parent=5 // pred_check_branch
        %207 = sbr.rel (%p204) target = $region12
      $region11: #{tpu_custom_call.1} parent=5 // pred_region
        %s208 = ssub.s32 %s37, 1
        // Predicated region
        $region13: #{tpu_custom_call.1} parent=11 // pred_check
          %p209 = pneg %p124
        $region14: #{tpu_custom_call.1} parent=11 // pred_check_branch
          %211 = sbr.rel (%p209) target = $region16
        $region15: #{tpu_custom_call.1} parent=11 // pred_region
          _
        $region16: #{tpu_custom_call.1} parent=11 // pred_fallthru
          _
        // Predicated region
        $region17: #{tpu_custom_call.1} parent=11 // pred_check
          %p212 = pneg %p145
        $region18: #{tpu_custom_call.1} parent=11 // pred_check_branch
          %214 = sbr.rel (%p212) target = $region20
        $region19: #{tpu_custom_call.1} parent=11 // pred_region
          _
        $region20: #{tpu_custom_call.1} parent=11 // pred_fallthru
          _
        // Predicated region
        $region21: #{tpu_custom_call.1} parent=11 // pred_check
          %p215 = pneg %p166
        $region22: #{tpu_custom_call.1} parent=11 // pred_check_branch
          %217 = sbr.rel (%p215) target = $region24
        $region23: #{tpu_custom_call.1} parent=11 // pred_region
          _
        $region24: #{tpu_custom_call.1} parent=11 // pred_fallthru
          _
      $region12: #{tpu_custom_call.1} parent=5 // pred_fallthru
        _
      %p218 = scmp.lt.s32.totalorder %s37, 2
      // Predicated region
      $region25: #{tpu_custom_call.1} parent=5 // pred_check
        %p219 = pneg %p218
      $region26: #{tpu_custom_call.1} parent=5 // pred_check_branch
        %221 = sbr.rel (%p219) target = $region28
      $region27: #{tpu_custom_call.1} parent=5 // pred_region
        // Predicated region
        $region29: #{tpu_custom_call.1} parent=27 // pred_check
          %p222 = pneg %p71
        $region30: #{tpu_custom_call.1} parent=27 // pred_check_branch
          %224 = sbr.rel (%p222) target = $region32
        $region31: #{tpu_custom_call.1} parent=27 // pred_region
          %s225 = sand.u32 %s61, 1
          %s226 = scalar_lea.sflag [#allocation7], %s225
          %s227 = sand.u32 %s61, 1
          %s228 = smul.addr %s227, 64
          %s229 = scalar_lea.vmem [#allocation6], %s228
          %s230 = smul.u32 2, %s45
          %s232 = ssub.s32 1024, 1024
          %233 = vsyncadd %s226, %s232
          %s234 = smul.addr %s44, 8
          %s235 = sadd.s32 %s230, %s234
          %s236 = smul.addr %s235, 128
          %s237 = scalar_lea.hbm %s3, %s236
          %s238 = sshll.u32 %s229, 4
          %s239 = int_to_ptr.vmem [resolvable:$true] %s238
          %244 = dma.hbm_to_vmem [thread:$0]  %s237, 1024, %s239, %s226, 128, 128, 8
        $region32: #{tpu_custom_call.1} parent=27 // pred_fallthru
          _
        // Predicated region
        $region33: #{tpu_custom_call.1} parent=27 // pred_check
          %p245 = pneg %p97
        $region34: #{tpu_custom_call.1} parent=27 // pred_check_branch
          %247 = sbr.rel (%p245) target = $region36
        $region35: #{tpu_custom_call.1} parent=27 // pred_region
          %s248 = sand.u32 %s87, 1
          %s249 = scalar_lea.sflag [#allocation10], %s248
          %s250 = sand.u32 %s87, 1
          %s251 = smul.addr %s250, 32
          %s252 = scalar_lea.vmem [#allocation9], %s251
          %s254 = ssub.s32 512, 512
          %255 = vsyncadd %s249, %s254
          %s256 = smul.addr %s44, 8
          %s257 = smul.addr %s256, 64
          %s258 = scalar_lea.hbm %s4, %s257
          %s259 = sshll.u32 %s252, 4
          %s260 = int_to_ptr.vmem [resolvable:$true] %s259
          %265 = dma.hbm_to_vmem [thread:$0]  %s258, 512, %s260, %s249, 64, 64, 4
        $region36: #{tpu_custom_call.1} parent=27 // pred_fallthru
          _
      $region28: #{tpu_custom_call.1} parent=5 // pred_fallthru
        _
      %p266 = scmp.le.s32.totalorder 1, %s37
      %p267 = scmp.lt.s32.totalorder %s37, 3
      %p268 = pnand %p266, %p267
      %p269 = pneg %p268
      // Predicated region
      $region37: #{tpu_custom_call.1} parent=5 // pred_check
        _
      $region38: #{tpu_custom_call.1} parent=5 // pred_check_branch
        %271 = sbr.rel (%p268) target = $region40
      $region39: #{tpu_custom_call.1} parent=5 // pred_region
        %s272 = ssub.s32 %s37, 1
        %s273 = sand.u32 %s64, 1
        %s274 = scalar_lea.sflag [#allocation7], %s273
        %s275 = sand.u32 %s64, 1
        %s276 = smul.addr %s275, 64
        %s277 = scalar_lea.vmem [#allocation6], %s276
        // Predicated region
        $region41: #{tpu_custom_call.1} parent=39 // pred_check
          %p278 = pneg %p77
        $region42: #{tpu_custom_call.1} parent=39 // pred_check_branch
          %280 = sbr.rel (%p278) target = $region44
        $region43: #{tpu_custom_call.1} parent=39 // pred_region
          %281 = dma.done %s274, 1024
        $region44: #{tpu_custom_call.1} parent=39 // pred_fallthru
          _
        %s282 = sand.u32 %s90, 1
        %s283 = scalar_lea.sflag [#allocation10], %s282
        %s284 = sand.u32 %s90, 1
        %s285 = smul.addr %s284, 32
        %s286 = scalar_lea.vmem [#allocation9], %s285
        // Predicated region
        $region45: #{tpu_custom_call.1} parent=39 // pred_check
          %p287 = pneg %p103
        $region46: #{tpu_custom_call.1} parent=39 // pred_check_branch
          %289 = sbr.rel (%p287) target = $region48
        $region47: #{tpu_custom_call.1} parent=39 // pred_region
          %290 = dma.done %s283, 512
        $region48: #{tpu_custom_call.1} parent=39 // pred_fallthru
          _
        %s291 = sand.u32 %s64, 1
        %s292 = scalar_lea.sflag [#allocation7], %s291
        %s293 = sand.u32 %s64, 1
        %s294 = smul.addr %s293, 64
        %s295 = scalar_lea.vmem [#allocation6], %s294
        %p296 = pneg %p77
        %p297 = pneg %p74
        %s298 = sand.u32 %s90, 1
        %s299 = scalar_lea.sflag [#allocation10], %s298
        %s300 = sand.u32 %s90, 1
        %s301 = smul.addr %s300, 32
        %s302 = scalar_lea.vmem [#allocation9], %s301
        %p303 = pneg %p103
        %p304 = pneg %p100
        %p305 = pneg %p124
        %p306 = pneg %p121
        %p307 = pneg %p145
        %p308 = pneg %p142
        %p309 = pneg %p166
        %p310 = pneg %p163
        %p311 = pneg %p194
        %p312 = pneg %p191
        %s313 = sand.u32 %s181, 1
        %s314 = scalar_lea.sflag [#allocation8], %s313
        %s315 = sand.u32 %s181, 1
        %s316 = smul.addr %s315, 48
        %s317 = scalar_lea.vmem [#allocation11], %s316
        %s318 = smul.u32 2, %s47
        %s319 = smul.u32 2, %s47
        %v320 = vld [vmem:[%s5] sm:$0xff]
        %v321 = vld [vmem:[%s6] sm:$0x7]
        %v322 = vld [vmem:[%s7] sm:$0x7]
        %324 = vset.pattern.permute.xlu0 0
        %325 = vperm.xlu0 %324, %v322
        %v326 = vpop.permute.xlu0 %325
        %s328 = smul.u32 %s47, 16
        %s329 = sld [smem:[#allocation3 + %s328]]
        %s330 = sld [smem:[#allocation4 + %s328]]
        %s331 = sld [smem:[#allocation5 + %s328]]
        %s332 = scvt.s32.f32 %s331
        %s333 = smul.f32 %s332, 5.9604645e-08
        %s334 = smul.u32 %s329, 4
        %s335 = scalar_lea.vmem %s286, %s334 [#allocation9]
        %v336 = vld [vmem:[%s335] sm:$0xf]
        %s337 = smul.u32 %s330, 4
        %s338 = scalar_lea.vmem %s286, %s337 [#allocation9]
        %v339 = vld [vmem:[%s338] sm:$0xf]
        %v340 = vsub.f32 %v339, %v336
        %v341 = vstv %s333
        %v342 = vmul.f32 %v341, %v340
        %v343 = vadd.f32 %v336, %v342
        %345 = vset.pattern.permute.xlu0 0
        %346 = vperm.xlu0 %345, %v343
        %v347 = vpop.permute.xlu0 %346
        %v349 = vlaneseq
        %v350 = vshrl.u32 %v349, 7
        %v351 = vsub.s32 0, %v350
        %v352 = vrot.slane %v320, %v351
        %v353 = vmul.f32 %v347, %v352
        %354 = vset.pattern.permute.xlu0 1
        %355 = vperm.xlu0 %354, %v343
        %v356 = vpop.permute.xlu0 %355
        %v358 = vlaneseq
        %v359 = vshrl.u32 %v358, 7
        %v360 = vsub.s32 1, %v359
        %v361 = vrot.slane %v320, %v360
        %v362 = vmul.f32 %v356, %v361
        %v363 = vadd.f32 %v353, %v362
        %364 = vset.pattern.permute.xlu0 2
        %365 = vperm.xlu0 %364, %v343
        %v366 = vpop.permute.xlu0 %365
        %v368 = vlaneseq
        %v369 = vshrl.u32 %v368, 7
        %v370 = vsub.s32 2, %v369
        %v371 = vrot.slane %v320, %v370
        %v372 = vmul.f32 %v366, %v371
        %v373 = vadd.f32 %v363, %v372
        %374 = vset.pattern.permute.xlu0 3
        %375 = vperm.xlu0 %374, %v343
        %v376 = vpop.permute.xlu0 %375
        %v378 = vlaneseq
        %v379 = vshrl.u32 %v378, 7
        %v380 = vsub.s32 3, %v379
        %v381 = vrot.slane %v320, %v380
        %v382 = vmul.f32 %v376, %v381
        %v383 = vadd.f32 %v373, %v382
        %384 = vset.pattern.permute.xlu0 4
        %385 = vperm.xlu0 %384, %v343
        %v386 = vpop.permute.xlu0 %385
        %v388 = vlaneseq
        %v389 = vshrl.u32 %v388, 7
        %v390 = vsub.s32 4, %v389
        %v391 = vrot.slane %v320, %v390
        %v392 = vmul.f32 %v386, %v391
        %v393 = vadd.f32 %v383, %v392
        %394 = vset.pattern.permute.xlu0 5
        %395 = vperm.xlu0 %394, %v343
        %v396 = vpop.permute.xlu0 %395
        %v398 = vlaneseq
        %v399 = vshrl.u32 %v398, 7
        %v400 = vsub.s32 5, %v399
        %v401 = vrot.slane %v320, %v400
        %v402 = vmul.f32 %v396, %v401
        %v403 = vadd.f32 %v393, %v402
        %404 = vset.pattern.permute.xlu0 6
        %405 = vperm.xlu0 %404, %v343
        %v406 = vpop.permute.xlu0 %405
        %v408 = vlaneseq
        %v409 = vshrl.u32 %v408, 7
        %v410 = vsub.s32 6, %v409
        %v411 = vrot.slane %v320, %v410
        %v412 = vmul.f32 %v406, %v411
        %v413 = vadd.f32 %v403, %v412
        %414 = vset.pattern.permute.xlu0 7
        %415 = vperm.xlu0 %414, %v343
        %v416 = vpop.permute.xlu0 %415
        %v418 = vlaneseq
        %v419 = vshrl.u32 %v418, 7
        %v420 = vsub.s32 7, %v419
        %v421 = vrot.slane %v320, %v420
        %v422 = vmul.f32 %v416, %v421
        %v423 = vadd.f32 %v413, %v422
        %v424 = vld [vmem:[%s277] sm:$0x1]
        %v425 = vld [vmem:[%s277 + $0x10] sm:$0x1]
        %v426 = vld [vmem:[%s277 + $0x20] sm:$0x1]
        %v427 = vld [vmem:[%s277 + $0x30] sm:$0x1]
        %v429 = vrot.slane %v423, 1
        %v430 = vrot.slane %v423, 2
        %v431 = vrot.slane %v423, 3
        %v436 = vmul.f32 %v424, %v423
        %v437 = vmul.f32 %v425, %v429
        %v438 = vmul.f32 %v426, %v430
        %v439 = vmul.f32 %v427, %v431
        %441 = vset.pattern.permute.xlu0 0
        %442 = vperm.xlu0 %441, %v321
        %v443 = vpop.permute.xlu0 %442
        %v445 = vlaneseq
        %v446 = vshrl.u32 %v445, 7
        %v447 = vsub.s32 0, %v446
        %v448 = vrot.slane %v436, %v447
        %v449 = vmul.f32 %v443, %v448
        %v450 = vadd.f32 %v326, %v449
        %451 = vset.pattern.permute.xlu0 1
        %452 = vperm.xlu0 %451, %v321
        %v453 = vpop.permute.xlu0 %452
        %v455 = vlaneseq
        %v456 = vshrl.u32 %v455, 7
        %v457 = vsub.s32 0, %v456
        %v458 = vrot.slane %v437, %v457
        %v459 = vmul.f32 %v453, %v458
        %v460 = vadd.f32 %v450, %v459
        %461 = vset.pattern.permute.xlu0 2
        %462 = vperm.xlu0 %461, %v321
        %v463 = vpop.permute.xlu0 %462
        %v465 = vlaneseq
        %v466 = vshrl.u32 %v465, 7
        %v467 = vsub.s32 0, %v466
        %v468 = vrot.slane %v438, %v467
        %v469 = vmul.f32 %v463, %v468
        %v470 = vadd.f32 %v460, %v469
        %471 = vset.pattern.permute.xlu0 3
        %472 = vperm.xlu0 %471, %v321
        %v473 = vpop.permute.xlu0 %472
        %v475 = vlaneseq
        %v476 = vshrl.u32 %v475, 7
        %v477 = vsub.s32 0, %v476
        %v478 = vrot.slane %v439, %v477
        %v479 = vmul.f32 %v473, %v478
        %v480 = vadd.f32 %v470, %v479
        %v483 = vunpack.c.l.s4 1966171168
        %v484 = vunpack.c.0.s8 %v483
        %v485 = vlaneseq
        %v486 = vshrl.u32 %v485, 7
        %v487 = vsub.s32 %v484, %v486
        %v488 = vrot.slane %v480, %v487
        %v489 = vcombine.high %v488, %v488
        %v491 = vunpack.c.l.s4 1966171168
        %v492 = vunpack.c.0.s8 %v491
        %v493 = vlaneseq
        %v494 = vshrl.u32 %v493, 7
        %v495 = vsub.s32 %v492, %v494
        %v496 = vrot.slane %v488, %v495
        %v498 = vunpack.c.l.s4 1966171168
        %v499 = vunpack.c.0.s8 %v498
        %v500 = vlaneseq
        %v501 = vshrl.u32 %v500, 7
        %v502 = vsub.s32 %v499, %v501
        %v503 = vrot.slane %v489, %v502
        %v504 = vcombine.high %v496, %v496
        %vm508 = vcmask 122880
        %509 = vst.msk [vmem:[%s317] sm:$0x1] %vm508, %v496
        %510 = vst.msk [vmem:[%s317 + $0x10] sm:$0x1] %vm508, %v503
        %511 = vst.msk [vmem:[%s317 + $0x20] sm:$0x1] %vm508, %v504
        %s512 = sadd.s32 %s328, 1
        %s513 = sld [smem:[#allocation3 + %s512]]
        %s514 = sld [smem:[#allocation4 + %s512]]
        %s515 = sld [smem:[#allocation5 + %s512]]
        %s516 = scvt.s32.f32 %s515
        %s517 = smul.f32 %s516, 5.9604645e-08
        %s518 = smul.u32 %s513, 4
        %s519 = scalar_lea.vmem %s286, %s518 [#allocation9]
        %v520 = vld [vmem:[%s519] sm:$0xf]
        %s521 = smul.u32 %s514, 4
        %s522 = scalar_lea.vmem %s286, %s521 [#allocation9]
        %v523 = vld [vmem:[%s522] sm:$0xf]
        %v524 = vsub.f32 %v523, %v520
        %v525 = vstv %s517
        %v526 = vmul.f32 %v525, %v524
        %v527 = vadd.f32 %v520, %v526
        %529 = vset.pattern.permute.xlu0 0
        %530 = vperm.xlu0 %529, %v527
        %v531 = vpop.permute.xlu0 %530
        %v533 = vmul.f32 %v531, %v352
        %534 = vset.pattern.permute.xlu0 1
        %535 = vperm.xlu0 %534, %v527
        %v536 = vpop.permute.xlu0 %535
        %v538 = vmul.f32 %v536, %v361
        %v539 = vadd.f32 %v533, %v538
        %540 = vset.pattern.permute.xlu0 2
        %541 = vperm.xlu0 %540, %v527
        %v542 = vpop.permute.xlu0 %541
        %v544 = vmul.f32 %v542, %v371
        %v545 = vadd.f32 %v539, %v544
        %546 = vset.pattern.permute.xlu0 3
        %547 = vperm.xlu0 %546, %v527
        %v548 = vpop.permute.xlu0 %547
        %v550 = vmul.f32 %v548, %v381
        %v551 = vadd.f32 %v545, %v550
        %552 = vset.pattern.permute.xlu0 4
        %553 = vperm.xlu0 %552, %v527
        %v554 = vpop.permute.xlu0 %553
        %v556 = vmul.f32 %v554, %v391
        %v557 = vadd.f32 %v551, %v556
        %558 = vset.pattern.permute.xlu0 5
        %559 = vperm.xlu0 %558, %v527
        %v560 = vpop.permute.xlu0 %559
        %v562 = vmul.f32 %v560, %v401
        %v563 = vadd.f32 %v557, %v562
        %564 = vset.pattern.permute.xlu0 6
        %565 = vperm.xlu0 %564, %v527
        %v566 = vpop.permute.xlu0 %565
        %v568 = vmul.f32 %v566, %v411
        %v569 = vadd.f32 %v563, %v568
        %570 = vset.pattern.permute.xlu0 7
        %571 = vperm.xlu0 %570, %v527
        %v572 = vpop.permute.xlu0 %571
        %v574 = vmul.f32 %v572, %v421
        %v575 = vadd.f32 %v569, %v574
        %v576 = vld [vmem:[%s277 + $0x1] sm:$0x1]
        %v577 = vld [vmem:[%s277 + $0x11] sm:$0x1]
        %v578 = vld [vmem:[%s277 + $0x21] sm:$0x1]
        %v579 = vld [vmem:[%s277 + $0x31] sm:$0x1]
        %v581 = vrot.slane %v575, 1
        %v582 = vrot.slane %v575, 2
        %v583 = vrot.slane %v575, 3
        %v588 = vmul.f32 %v576, %v575
        %v589 = vmul.f32 %v577, %v581
        %v590 = vmul.f32 %v578, %v582
        %v591 = vmul.f32 %v579, %v583
        %v592 = vlaneseq
        %v593 = vshrl.u32 %v592, 7
        %v594 = vsub.s32 0, %v593
        %v595 = vrot.slane %v588, %v594
        %v596 = vmul.f32 %v443, %v595
        %v597 = vadd.f32 %v326, %v596
        %v598 = vlaneseq
        %v599 = vshrl.u32 %v598, 7
        %v600 = vsub.s32 0, %v599
        %v601 = vrot.slane %v589, %v600
        %v602 = vmul.f32 %v453, %v601
        %v603 = vadd.f32 %v597, %v602
        %v604 = vlaneseq
        %v605 = vshrl.u32 %v604, 7
        %v606 = vsub.s32 0, %v605
        %v607 = vrot.slane %v590, %v606
        %v608 = vmul.f32 %v463, %v607
        %v609 = vadd.f32 %v603, %v608
        %v610 = vlaneseq
        %v611 = vshrl.u32 %v610, 7
        %v612 = vsub.s32 0, %v611
        %v613 = vrot.slane %v591, %v612
        %v614 = vmul.f32 %v473, %v613
        %v615 = vadd.f32 %v609, %v614
        %v618 = vunpack.c.l.s4 1966171168
        %v619 = vunpack.c.0.s8 %v618
        %v620 = vlaneseq
        %v621 = vshrl.u32 %v620, 7
        %v622 = vsub.s32 %v619, %v621
        %v623 = vrot.slane %v615, %v622
        %v624 = vcombine.high %v623, %v623
        %v626 = vunpack.c.l.s4 1966171168
        %v627 = vunpack.c.0.s8 %v626
        %v628 = vlaneseq
        %v629 = vshrl.u32 %v628, 7
        %v630 = vsub.s32 %v627, %v629
        %v631 = vrot.slane %v623, %v630
        %v633 = vunpack.c.l.s4 1966171168
        %v634 = vunpack.c.0.s8 %v633
        %v635 = vlaneseq
        %v636 = vshrl.u32 %v635, 7
        %v637 = vsub.s32 %v634, %v636
        %v638 = vrot.slane %v624, %v637
        %v639 = vcombine.high %v631, %v631
        %643 = vst.msk [vmem:[%s317 + $0x1] sm:$0x1] %vm508, %v631
        %644 = vst.msk [vmem:[%s317 + $0x11] sm:$0x1] %vm508, %v638
        %645 = vst.msk [vmem:[%s317 + $0x21] sm:$0x1] %vm508, %v639
        %s646 = sadd.s32 %s328, 2
        %s647 = sld [smem:[#allocation3 + %s646]]
        %s648 = sld [smem:[#allocation4 + %s646]]
        %s649 = sld [smem:[#allocation5 + %s646]]
        %s650 = scvt.s32.f32 %s649
        %s651 = smul.f32 %s650, 5.9604645e-08
        %s652 = smul.u32 %s647, 4
        %s653 = scalar_lea.vmem %s286, %s652 [#allocation9]
        %v654 = vld [vmem:[%s653] sm:$0xf]
        %s655 = smul.u32 %s648, 4
        %s656 = scalar_lea.vmem %s286, %s655 [#allocation9]
        %v657 = vld [vmem:[%s656] sm:$0xf]
        %v658 = vsub.f32 %v657, %v654
        %v659 = vstv %s651
        %v660 = vmul.f32 %v659, %v658
        %v661 = vadd.f32 %v654, %v660
        %663 = vset.pattern.permute.xlu0 0
        %664 = vperm.xlu0 %663, %v661
        %v665 = vpop.permute.xlu0 %664
        %v667 = vmul.f32 %v665, %v352
        %668 = vset.pattern.permute.xlu0 1
        %669 = vperm.xlu0 %668, %v661
        %v670 = vpop.permute.xlu0 %669
        %v672 = vmul.f32 %v670, %v361
        %v673 = vadd.f32 %v667, %v672
        %674 = vset.pattern.permute.xlu0 2
        %675 = vperm.xlu0 %674, %v661
        %v676 = vpop.permute.xlu0 %675
        %v678 = vmul.f32 %v676, %v371
        %v679 = vadd.f32 %v673, %v678
        %680 = vset.pattern.permute.xlu0 3
        %681 = vperm.xlu0 %680, %v661
        %v682 = vpop.permute.xlu0 %681
        %v684 = vmul.f32 %v682, %v381
        %v685 = vadd.f32 %v679, %v684
        %686 = vset.pattern.permute.xlu0 4
        %687 = vperm.xlu0 %686, %v661
        %v688 = vpop.permute.xlu0 %687
        %v690 = vmul.f32 %v688, %v391
        %v691 = vadd.f32 %v685, %v690
        %692 = vset.pattern.permute.xlu0 5
        %693 = vperm.xlu0 %692, %v661
        %v694 = vpop.permute.xlu0 %693
        %v696 = vmul.f32 %v694, %v401
        %v697 = vadd.f32 %v691, %v696
        %698 = vset.pattern.permute.xlu0 6
        %699 = vperm.xlu0 %698, %v661
        %v700 = vpop.permute.xlu0 %699
        %v702 = vmul.f32 %v700, %v411
        %v703 = vadd.f32 %v697, %v702
        %704 = vset.pattern.permute.xlu0 7
        %705 = vperm.xlu0 %704, %v661
        %v706 = vpop.permute.xlu0 %705
        %v708 = vmul.f32 %v706, %v421
        %v709 = vadd.f32 %v703, %v708
        %v710 = vld [vmem:[%s277 + $0x2] sm:$0x1]
        %v711 = vld [vmem:[%s277 + $0x12] sm:$0x1]
        %v712 = vld [vmem:[%s277 + $0x22] sm:$0x1]
        %v713 = vld [vmem:[%s277 + $0x32] sm:$0x1]
        %v715 = vrot.slane %v709, 1
        %v716 = vrot.slane %v709, 2
        %v717 = vrot.slane %v709, 3
        %v722 = vmul.f32 %v710, %v709
        %v723 = vmul.f32 %v711, %v715
        %v724 = vmul.f32 %v712, %v716
        %v725 = vmul.f32 %v713, %v717
        %v726 = vlaneseq
        %v727 = vshrl.u32 %v726, 7
        %v728 = vsub.s32 0, %v727
        %v729 = vrot.slane %v722, %v728
        %v730 = vmul.f32 %v443, %v729
        %v731 = vadd.f32 %v326, %v730
        %v732 = vlaneseq
        %v733 = vshrl.u32 %v732, 7
        %v734 = vsub.s32 0, %v733
        %v735 = vrot.slane %v723, %v734
        %v736 = vmul.f32 %v453, %v735
        %v737 = vadd.f32 %v731, %v736
        %v738 = vlaneseq
        %v739 = vshrl.u32 %v738, 7
        %v740 = vsub.s32 0, %v739
        %v741 = vrot.slane %v724, %v740
        %v742 = vmul.f32 %v463, %v741
        %v743 = vadd.f32 %v737, %v742
        %v744 = vlaneseq
        %v745 = vshrl.u32 %v744, 7
        %v746 = vsub.s32 0, %v745
        %v747 = vrot.slane %v725, %v746
        %v748 = vmul.f32 %v473, %v747
        %v749 = vadd.f32 %v743, %v748
        %v752 = vunpack.c.l.s4 1966171168
        %v753 = vunpack.c.0.s8 %v752
        %v754 = vlaneseq
        %v755 = vshrl.u32 %v754, 7
        %v756 = vsub.s32 %v753, %v755
        %v757 = vrot.slane %v749, %v756
        %v758 = vcombine.high %v757, %v757
        %v760 = vunpack.c.l.s4 1966171168
        %v761 = vunpack.c.0.s8 %v760
        %v762 = vlaneseq
        %v763 = vshrl.u32 %v762, 7
        %v764 = vsub.s32 %v761, %v763
        %v765 = vrot.slane %v757, %v764
        %v767 = vunpack.c.l.s4 1966171168
        %v768 = vunpack.c.0.s8 %v767
        %v769 = vlaneseq
        %v770 = vshrl.u32 %v769, 7
        %v771 = vsub.s32 %v768, %v770
        %v772 = vrot.slane %v758, %v771
        %v773 = vcombine.high %v765, %v765
        %777 = vst.msk [vmem:[%s317 + $0x2] sm:$0x1] %vm508, %v765
        %778 = vst.msk [vmem:[%s317 + $0x12] sm:$0x1] %vm508, %v772
        %779 = vst.msk [vmem:[%s317 + $0x22] sm:$0x1] %vm508, %v773
        %s780 = sadd.s32 %s328, 3
        %s781 = sld [smem:[#allocation3 + %s780]]
        %s782 = sld [smem:[#allocation4 + %s780]]
        %s783 = sld [smem:[#allocation5 + %s780]]
        %s784 = scvt.s32.f32 %s783
        %s785 = smul.f32 %s784, 5.9604645e-08
        %s786 = smul.u32 %s781, 4
        %s787 = scalar_lea.vmem %s286, %s786 [#allocation9]
        %v788 = vld [vmem:[%s787] sm:$0xf]
        %s789 = smul.u32 %s782, 4
        %s790 = scalar_lea.vmem %s286, %s789 [#allocation9]
        %v791 = vld [vmem:[%s790] sm:$0xf]
        %v792 = vsub.f32 %v791, %v788
        %v793 = vstv %s785
        %v794 = vmul.f32 %v793, %v792
        %v795 = vadd.f32 %v788, %v794
        %797 = vset.pattern.permute.xlu0 0
        %798 = vperm.xlu0 %797, %v795
        %v799 = vpop.permute.xlu0 %798
        %v801 = vmul.f32 %v799, %v352
        %802 = vset.pattern.permute.xlu0 1
        %803 = vperm.xlu0 %802, %v795
        %v804 = vpop.permute.xlu0 %803
        %v806 = vmul.f32 %v804, %v361
        %v807 = vadd.f32 %v801, %v806
        %808 = vset.pattern.permute.xlu0 2
        %809 = vperm.xlu0 %808, %v795
        %v810 = vpop.permute.xlu0 %809
        %v812 = vmul.f32 %v810, %v371
        %v813 = vadd.f32 %v807, %v812
        %814 = vset.pattern.permute.xlu0 3
        %815 = vperm.xlu0 %814, %v795
        %v816 = vpop.permute.xlu0 %815
        %v818 = vmul.f32 %v816, %v381
        %v819 = vadd.f32 %v813, %v818
        %820 = vset.pattern.permute.xlu0 4
        %821 = vperm.xlu0 %820, %v795
        %v822 = vpop.permute.xlu0 %821
        %v824 = vmul.f32 %v822, %v391
        %v825 = vadd.f32 %v819, %v824
        %826 = vset.pattern.permute.xlu0 5
        %827 = vperm.xlu0 %826, %v795
        %v828 = vpop.permute.xlu0 %827
        %v830 = vmul.f32 %v828, %v401
        %v831 = vadd.f32 %v825, %v830
        %832 = vset.pattern.permute.xlu0 6
        %833 = vperm.xlu0 %832, %v795
        %v834 = vpop.permute.xlu0 %833
        %v836 = vmul.f32 %v834, %v411
        %v837 = vadd.f32 %v831, %v836
        %838 = vset.pattern.permute.xlu0 7
        %839 = vperm.xlu0 %838, %v795
        %v840 = vpop.permute.xlu0 %839
        %v842 = vmul.f32 %v840, %v421
        %v843 = vadd.f32 %v837, %v842
        %v844 = vld [vmem:[%s277 + $0x3] sm:$0x1]
        %v845 = vld [vmem:[%s277 + $0x13] sm:$0x1]
        %v846 = vld [vmem:[%s277 + $0x23] sm:$0x1]
        %v847 = vld [vmem:[%s277 + $0x33] sm:$0x1]
        %v849 = vrot.slane %v843, 1
        %v850 = vrot.slane %v843, 2
        %v851 = vrot.slane %v843, 3
        %v856 = vmul.f32 %v844, %v843
        %v857 = vmul.f32 %v845, %v849
        %v858 = vmul.f32 %v846, %v850
        %v859 = vmul.f32 %v847, %v851
        %v860 = vlaneseq
        %v861 = vshrl.u32 %v860, 7
        %v862 = vsub.s32 0, %v861
        %v863 = vrot.slane %v856, %v862
        %v864 = vmul.f32 %v443, %v863
        %v865 = vadd.f32 %v326, %v864
        %v866 = vlaneseq
        %v867 = vshrl.u32 %v866, 7
        %v868 = vsub.s32 0, %v867
        %v869 = vrot.slane %v857, %v868
        %v870 = vmul.f32 %v453, %v869
        %v871 = vadd.f32 %v865, %v870
        %v872 = vlaneseq
        %v873 = vshrl.u32 %v872, 7
        %v874 = vsub.s32 0, %v873
        %v875 = vrot.slane %v858, %v874
        %v876 = vmul.f32 %v463, %v875
        %v877 = vadd.f32 %v871, %v876
        %v878 = vlaneseq
        %v879 = vshrl.u32 %v878, 7
        %v880 = vsub.s32 0, %v879
        %v881 = vrot.slane %v859, %v880
        %v882 = vmul.f32 %v473, %v881
        %v883 = vadd.f32 %v877, %v882
        %v886 = vunpack.c.l.s4 1966171168
        %v887 = vunpack.c.0.s8 %v886
        %v888 = vlaneseq
        %v889 = vshrl.u32 %v888, 7
        %v890 = vsub.s32 %v887, %v889
        %v891 = vrot.slane %v883, %v890
        %v892 = vcombine.high %v891, %v891
        %v894 = vunpack.c.l.s4 1966171168
        %v895 = vunpack.c.0.s8 %v894
        %v896 = vlaneseq
        %v897 = vshrl.u32 %v896, 7
        %v898 = vsub.s32 %v895, %v897
        %v899 = vrot.slane %v891, %v898
        %v901 = vunpack.c.l.s4 1966171168
        %v902 = vunpack.c.0.s8 %v901
        %v903 = vlaneseq
        %v904 = vshrl.u32 %v903, 7
        %v905 = vsub.s32 %v902, %v904
        %v906 = vrot.slane %v892, %v905
        %v907 = vcombine.high %v899, %v899
        %911 = vst.msk [vmem:[%s317 + $0x3] sm:$0x1] %vm508, %v899
        %912 = vst.msk [vmem:[%s317 + $0x13] sm:$0x1] %vm508, %v906
        %913 = vst.msk [vmem:[%s317 + $0x23] sm:$0x1] %vm508, %v907
        %s914 = sadd.s32 %s328, 4
        %s915 = sld [smem:[#allocation3 + %s914]]
        %s916 = sld [smem:[#allocation4 + %s914]]
        %s917 = sld [smem:[#allocation5 + %s914]]
        %s918 = scvt.s32.f32 %s917
        %s919 = smul.f32 %s918, 5.9604645e-08
        %s920 = smul.u32 %s915, 4
        %s921 = scalar_lea.vmem %s286, %s920 [#allocation9]
        %v922 = vld [vmem:[%s921] sm:$0xf]
        %s923 = smul.u32 %s916, 4
        %s924 = scalar_lea.vmem %s286, %s923 [#allocation9]
        %v925 = vld [vmem:[%s924] sm:$0xf]
        %v926 = vsub.f32 %v925, %v922
        %v927 = vstv %s919
        %v928 = vmul.f32 %v927, %v926
        %v929 = vadd.f32 %v922, %v928
        %931 = vset.pattern.permute.xlu0 0
        %932 = vperm.xlu0 %931, %v929
        %v933 = vpop.permute.xlu0 %932
        %v935 = vmul.f32 %v933, %v352
        %936 = vset.pattern.permute.xlu0 1
        %937 = vperm.xlu0 %936, %v929
        %v938 = vpop.permute.xlu0 %937
        %v940 = vmul.f32 %v938, %v361
        %v941 = vadd.f32 %v935, %v940
        %942 = vset.pattern.permute.xlu0 2
        %943 = vperm.xlu0 %942, %v929
        %v944 = vpop.permute.xlu0 %943
        %v946 = vmul.f32 %v944, %v371
        %v947 = vadd.f32 %v941, %v946
        %948 = vset.pattern.permute.xlu0 3
        %949 = vperm.xlu0 %948, %v929
        %v950 = vpop.permute.xlu0 %949
        %v952 = vmul.f32 %v950, %v381
        %v953 = vadd.f32 %v947, %v952
        %954 = vset.pattern.permute.xlu0 4
        %955 = vperm.xlu0 %954, %v929
        %v956 = vpop.permute.xlu0 %955
        %v958 = vmul.f32 %v956, %v391
        %v959 = vadd.f32 %v953, %v958
        %960 = vset.pattern.permute.xlu0 5
        %961 = vperm.xlu0 %960, %v929
        %v962 = vpop.permute.xlu0 %961
        %v964 = vmul.f32 %v962, %v401
        %v965 = vadd.f32 %v959, %v964
        %966 = vset.pattern.permute.xlu0 6
        %967 = vperm.xlu0 %966, %v929
        %v968 = vpop.permute.xlu0 %967
        %v970 = vmul.f32 %v968, %v411
        %v971 = vadd.f32 %v965, %v970
        %972 = vset.pattern.permute.xlu0 7
        %973 = vperm.xlu0 %972, %v929
        %v974 = vpop.permute.xlu0 %973
        %v976 = vmul.f32 %v974, %v421
        %v977 = vadd.f32 %v971, %v976
        %v978 = vld [vmem:[%s277 + $0x4] sm:$0x1]
        %v979 = vld [vmem:[%s277 + $0x14] sm:$0x1]
        %v980 = vld [vmem:[%s277 + $0x24] sm:$0x1]
        %v981 = vld [vmem:[%s277 + $0x34] sm:$0x1]
        %v983 = vrot.slane %v977, 1
        %v984 = vrot.slane %v977, 2
        %v985 = vrot.slane %v977, 3
        %v990 = vmul.f32 %v978, %v977
        %v991 = vmul.f32 %v979, %v983
        %v992 = vmul.f32 %v980, %v984
        %v993 = vmul.f32 %v981, %v985
        %v994 = vlaneseq
        %v995 = vshrl.u32 %v994, 7
        %v996 = vsub.s32 0, %v995
        %v997 = vrot.slane %v990, %v996
        %v998 = vmul.f32 %v443, %v997
        %v999 = vadd.f32 %v326, %v998
        %v1000 = vlaneseq
        %v1001 = vshrl.u32 %v1000, 7
        %v1002 = vsub.s32 0, %v1001
        %v1003 = vrot.slane %v991, %v1002
        %v1004 = vmul.f32 %v453, %v1003
        %v1005 = vadd.f32 %v999, %v1004
        %v1006 = vlaneseq
        %v1007 = vshrl.u32 %v1006, 7
        %v1008 = vsub.s32 0, %v1007
        %v1009 = vrot.slane %v992, %v1008
        %v1010 = vmul.f32 %v463, %v1009
        %v1011 = vadd.f32 %v1005, %v1010
        %v1012 = vlaneseq
        %v1013 = vshrl.u32 %v1012, 7
        %v1014 = vsub.s32 0, %v1013
        %v1015 = vrot.slane %v993, %v1014
        %v1016 = vmul.f32 %v473, %v1015
        %v1017 = vadd.f32 %v1011, %v1016
        %v1020 = vunpack.c.l.s4 1966171168
        %v1021 = vunpack.c.0.s8 %v1020
        %v1022 = vlaneseq
        %v1023 = vshrl.u32 %v1022, 7
        %v1024 = vsub.s32 %v1021, %v1023
        %v1025 = vrot.slane %v1017, %v1024
        %v1026 = vcombine.high %v1025, %v1025
        %v1028 = vunpack.c.l.s4 1966171168
        %v1029 = vunpack.c.0.s8 %v1028
        %v1030 = vlaneseq
        %v1031 = vshrl.u32 %v1030, 7
        %v1032 = vsub.s32 %v1029, %v1031
        %v1033 = vrot.slane %v1025, %v1032
        %v1035 = vunpack.c.l.s4 1966171168
        %v1036 = vunpack.c.0.s8 %v1035
        %v1037 = vlaneseq
        %v1038 = vshrl.u32 %v1037, 7
        %v1039 = vsub.s32 %v1036, %v1038
        %v1040 = vrot.slane %v1026, %v1039
        %v1041 = vcombine.high %v1033, %v1033
        %1045 = vst.msk [vmem:[%s317 + $0x4] sm:$0x1] %vm508, %v1033
        %1046 = vst.msk [vmem:[%s317 + $0x14] sm:$0x1] %vm508, %v1040
        %1047 = vst.msk [vmem:[%s317 + $0x24] sm:$0x1] %vm508, %v1041
        %s1048 = sadd.s32 %s328, 5
        %s1049 = sld [smem:[#allocation3 + %s1048]]
        %s1050 = sld [smem:[#allocation4 + %s1048]]
        %s1051 = sld [smem:[#allocation5 + %s1048]]
        %s1052 = scvt.s32.f32 %s1051
        %s1053 = smul.f32 %s1052, 5.9604645e-08
        %s1054 = smul.u32 %s1049, 4
        %s1055 = scalar_lea.vmem %s286, %s1054 [#allocation9]
        %v1056 = vld [vmem:[%s1055] sm:$0xf]
        %s1057 = smul.u32 %s1050, 4
        %s1058 = scalar_lea.vmem %s286, %s1057 [#allocation9]
        %v1059 = vld [vmem:[%s1058] sm:$0xf]
        %v1060 = vsub.f32 %v1059, %v1056
        %v1061 = vstv %s1053
        %v1062 = vmul.f32 %v1061, %v1060
        %v1063 = vadd.f32 %v1056, %v1062
        %1065 = vset.pattern.permute.xlu0 0
        %1066 = vperm.xlu0 %1065, %v1063
        %v1067 = vpop.permute.xlu0 %1066
        %v1069 = vmul.f32 %v1067, %v352
        %1070 = vset.pattern.permute.xlu0 1
        %1071 = vperm.xlu0 %1070, %v1063
        %v1072 = vpop.permute.xlu0 %1071
        %v1074 = vmul.f32 %v1072, %v361
        %v1075 = vadd.f32 %v1069, %v1074
        %1076 = vset.pattern.permute.xlu0 2
        %1077 = vperm.xlu0 %1076, %v1063
        %v1078 = vpop.permute.xlu0 %1077
        %v1080 = vmul.f32 %v1078, %v371
        %v1081 = vadd.f32 %v1075, %v1080
        %1082 = vset.pattern.permute.xlu0 3
        %1083 = vperm.xlu0 %1082, %v1063
        %v1084 = vpop.permute.xlu0 %1083
        %v1086 = vmul.f32 %v1084, %v381
        %v1087 = vadd.f32 %v1081, %v1086
        %1088 = vset.pattern.permute.xlu0 4
        %1089 = vperm.xlu0 %1088, %v1063
        %v1090 = vpop.permute.xlu0 %1089
        %v1092 = vmul.f32 %v1090, %v391
        %v1093 = vadd.f32 %v1087, %v1092
        %1094 = vset.pattern.permute.xlu0 5
        %1095 = vperm.xlu0 %1094, %v1063
        %v1096 = vpop.permute.xlu0 %1095
        %v1098 = vmul.f32 %v1096, %v401
        %v1099 = vadd.f32 %v1093, %v1098
        %1100 = vset.pattern.permute.xlu0 6
        %1101 = vperm.xlu0 %1100, %v1063
        %v1102 = vpop.permute.xlu0 %1101
        %v1104 = vmul.f32 %v1102, %v411
        %v1105 = vadd.f32 %v1099, %v1104
        %1106 = vset.pattern.permute.xlu0 7
        %1107 = vperm.xlu0 %1106, %v1063
        %v1108 = vpop.permute.xlu0 %1107
        %v1110 = vmul.f32 %v1108, %v421
        %v1111 = vadd.f32 %v1105, %v1110
        %v1112 = vld [vmem:[%s277 + $0x5] sm:$0x1]
        %v1113 = vld [vmem:[%s277 + $0x15] sm:$0x1]
        %v1114 = vld [vmem:[%s277 + $0x25] sm:$0x1]
        %v1115 = vld [vmem:[%s277 + $0x35] sm:$0x1]
        %v1117 = vrot.slane %v1111, 1
        %v1118 = vrot.slane %v1111, 2
        %v1119 = vrot.slane %v1111, 3
        %v1124 = vmul.f32 %v1112, %v1111
        %v1125 = vmul.f32 %v1113, %v1117
        %v1126 = vmul.f32 %v1114, %v1118
        %v1127 = vmul.f32 %v1115, %v1119
        %v1128 = vlaneseq
        %v1129 = vshrl.u32 %v1128, 7
        %v1130 = vsub.s32 0, %v1129
        %v1131 = vrot.slane %v1124, %v1130
        %v1132 = vmul.f32 %v443, %v1131
        %v1133 = vadd.f32 %v326, %v1132
        %v1134 = vlaneseq
        %v1135 = vshrl.u32 %v1134, 7
        %v1136 = vsub.s32 0, %v1135
        %v1137 = vrot.slane %v1125, %v1136
        %v1138 = vmul.f32 %v453, %v1137
        %v1139 = vadd.f32 %v1133, %v1138
        %v1140 = vlaneseq
        %v1141 = vshrl.u32 %v1140, 7
        %v1142 = vsub.s32 0, %v1141
        %v1143 = vrot.slane %v1126, %v1142
        %v1144 = vmul.f32 %v463, %v1143
        %v1145 = vadd.f32 %v1139, %v1144
        %v1146 = vlaneseq
        %v1147 = vshrl.u32 %v1146, 7
        %v1148 = vsub.s32 0, %v1147
        %v1149 = vrot.slane %v1127, %v1148
        %v1150 = vmul.f32 %v473, %v1149
        %v1151 = vadd.f32 %v1145, %v1150
        %v1154 = vunpack.c.l.s4 1966171168
        %v1155 = vunpack.c.0.s8 %v1154
        %v1156 = vlaneseq
        %v1157 = vshrl.u32 %v1156, 7
        %v1158 = vsub.s32 %v1155, %v1157
        %v1159 = vrot.slane %v1151, %v1158
        %v1160 = vcombine.high %v1159, %v1159
        %v1162 = vunpack.c.l.s4 1966171168
        %v1163 = vunpack.c.0.s8 %v1162
        %v1164 = vlaneseq
        %v1165 = vshrl.u32 %v1164, 7
        %v1166 = vsub.s32 %v1163, %v1165
        %v1167 = vrot.slane %v1159, %v1166
        %v1169 = vunpack.c.l.s4 1966171168
        %v1170 = vunpack.c.0.s8 %v1169
        %v1171 = vlaneseq
        %v1172 = vshrl.u32 %v1171, 7
        %v1173 = vsub.s32 %v1170, %v1172
        %v1174 = vrot.slane %v1160, %v1173
        %v1175 = vcombine.high %v1167, %v1167
        %1179 = vst.msk [vmem:[%s317 + $0x5] sm:$0x1] %vm508, %v1167
        %1180 = vst.msk [vmem:[%s317 + $0x15] sm:$0x1] %vm508, %v1174
        %1181 = vst.msk [vmem:[%s317 + $0x25] sm:$0x1] %vm508, %v1175
        %s1182 = sadd.s32 %s328, 6
        %s1183 = sld [smem:[#allocation3 + %s1182]]
        %s1184 = sld [smem:[#allocation4 + %s1182]]
        %s1185 = sld [smem:[#allocation5 + %s1182]]
        %s1186 = scvt.s32.f32 %s1185
        %s1187 = smul.f32 %s1186, 5.9604645e-08
        %s1188 = smul.u32 %s1183, 4
        %s1189 = scalar_lea.vmem %s286, %s1188 [#allocation9]
        %v1190 = vld [vmem:[%s1189] sm:$0xf]
        %s1191 = smul.u32 %s1184, 4
        %s1192 = scalar_lea.vmem %s286, %s1191 [#allocation9]
        %v1193 = vld [vmem:[%s1192] sm:$0xf]
        %v1194 = vsub.f32 %v1193, %v1190
        %v1195 = vstv %s1187
        %v1196 = vmul.f32 %v1195, %v1194
        %v1197 = vadd.f32 %v1190, %v1196
        %1199 = vset.pattern.permute.xlu0 0
        %1200 = vperm.xlu0 %1199, %v1197
        %v1201 = vpop.permute.xlu0 %1200
        %v1203 = vmul.f32 %v1201, %v352
        %1204 = vset.pattern.permute.xlu0 1
        %1205 = vperm.xlu0 %1204, %v1197
        %v1206 = vpop.permute.xlu0 %1205
        %v1208 = vmul.f32 %v1206, %v361
        %v1209 = vadd.f32 %v1203, %v1208
        %1210 = vset.pattern.permute.xlu0 2
        %1211 = vperm.xlu0 %1210, %v1197
        %v1212 = vpop.permute.xlu0 %1211
        %v1214 = vmul.f32 %v1212, %v371
        %v1215 = vadd.f32 %v1209, %v1214
        %1216 = vset.pattern.permute.xlu0 3
        %1217 = vperm.xlu0 %1216, %v1197
        %v1218 = vpop.permute.xlu0 %1217
        %v1220 = vmul.f32 %v1218, %v381
        %v1221 = vadd.f32 %v1215, %v1220
        %1222 = vset.pattern.permute.xlu0 4
        %1223 = vperm.xlu0 %1222, %v1197
        %v1224 = vpop.permute.xlu0 %1223
        %v1226 = vmul.f32 %v1224, %v391
        %v1227 = vadd.f32 %v1221, %v1226
        %1228 = vset.pattern.permute.xlu0 5
        %1229 = vperm.xlu0 %1228, %v1197
        %v1230 = vpop.permute.xlu0 %1229
        %v1232 = vmul.f32 %v1230, %v401
        %v1233 = vadd.f32 %v1227, %v1232
        %1234 = vset.pattern.permute.xlu0 6
        %1235 = vperm.xlu0 %1234, %v1197
        %v1236 = vpop.permute.xlu0 %1235
        %v1238 = vmul.f32 %v1236, %v411
        %v1239 = vadd.f32 %v1233, %v1238
        %1240 = vset.pattern.permute.xlu0 7
        %1241 = vperm.xlu0 %1240, %v1197
        %v1242 = vpop.permute.xlu0 %1241
        %v1244 = vmul.f32 %v1242, %v421
        %v1245 = vadd.f32 %v1239, %v1244
        %v1246 = vld [vmem:[%s277 + $0x6] sm:$0x1]
        %v1247 = vld [vmem:[%s277 + $0x16] sm:$0x1]
        %v1248 = vld [vmem:[%s277 + $0x26] sm:$0x1]
        %v1249 = vld [vmem:[%s277 + $0x36] sm:$0x1]
        %v1251 = vrot.slane %v1245, 1
        %v1252 = vrot.slane %v1245, 2
        %v1253 = vrot.slane %v1245, 3
        %v1258 = vmul.f32 %v1246, %v1245
        %v1259 = vmul.f32 %v1247, %v1251
        %v1260 = vmul.f32 %v1248, %v1252
        %v1261 = vmul.f32 %v1249, %v1253
        %v1262 = vlaneseq
        %v1263 = vshrl.u32 %v1262, 7
        %v1264 = vsub.s32 0, %v1263
        %v1265 = vrot.slane %v1258, %v1264
        %v1266 = vmul.f32 %v443, %v1265
        %v1267 = vadd.f32 %v326, %v1266
        %v1268 = vlaneseq
        %v1269 = vshrl.u32 %v1268, 7
        %v1270 = vsub.s32 0, %v1269
        %v1271 = vrot.slane %v1259, %v1270
        %v1272 = vmul.f32 %v453, %v1271
        %v1273 = vadd.f32 %v1267, %v1272
        %v1274 = vlaneseq
        %v1275 = vshrl.u32 %v1274, 7
        %v1276 = vsub.s32 0, %v1275
        %v1277 = vrot.slane %v1260, %v1276
        %v1278 = vmul.f32 %v463, %v1277
        %v1279 = vadd.f32 %v1273, %v1278
        %v1280 = vlaneseq
        %v1281 = vshrl.u32 %v1280, 7
        %v1282 = vsub.s32 0, %v1281
        %v1283 = vrot.slane %v1261, %v1282
        %v1284 = vmul.f32 %v473, %v1283
        %v1285 = vadd.f32 %v1279, %v1284
        %v1288 = vunpack.c.l.s4 1966171168
        %v1289 = vunpack.c.0.s8 %v1288
        %v1290 = vlaneseq
        %v1291 = vshrl.u32 %v1290, 7
        %v1292 = vsub.s32 %v1289, %v1291
        %v1293 = vrot.slane %v1285, %v1292
        %v1294 = vcombine.high %v1293, %v1293
        %v1296 = vunpack.c.l.s4 1966171168
        %v1297 = vunpack.c.0.s8 %v1296
        %v1298 = vlaneseq
        %v1299 = vshrl.u32 %v1298, 7
        %v1300 = vsub.s32 %v1297, %v1299
        %v1301 = vrot.slane %v1293, %v1300
        %v1303 = vunpack.c.l.s4 1966171168
        %v1304 = vunpack.c.0.s8 %v1303
        %v1305 = vlaneseq
        %v1306 = vshrl.u32 %v1305, 7
        %v1307 = vsub.s32 %v1304, %v1306
        %v1308 = vrot.slane %v1294, %v1307
        %v1309 = vcombine.high %v1301, %v1301
        %1313 = vst.msk [vmem:[%s317 + $0x6] sm:$0x1] %vm508, %v1301
        %1314 = vst.msk [vmem:[%s317 + $0x16] sm:$0x1] %vm508, %v1308
        %1315 = vst.msk [vmem:[%s317 + $0x26] sm:$0x1] %vm508, %v1309
        %s1316 = sadd.s32 %s328, 7
        %s1317 = sld [smem:[#allocation3 + %s1316]]
        %s1318 = sld [smem:[#allocation4 + %s1316]]
        %s1319 = sld [smem:[#allocation5 + %s1316]]
        %s1320 = scvt.s32.f32 %s1319
        %s1321 = smul.f32 %s1320, 5.9604645e-08
        %s1322 = smul.u32 %s1317, 4
        %s1323 = scalar_lea.vmem %s286, %s1322 [#allocation9]
        %v1324 = vld [vmem:[%s1323] sm:$0xf]
        %s1325 = smul.u32 %s1318, 4
        %s1326 = scalar_lea.vmem %s286, %s1325 [#allocation9]
        %v1327 = vld [vmem:[%s1326] sm:$0xf]
        %v1328 = vsub.f32 %v1327, %v1324
        %v1329 = vstv %s1321
        %v1330 = vmul.f32 %v1329, %v1328
        %v1331 = vadd.f32 %v1324, %v1330
        %1333 = vset.pattern.permute.xlu0 0
        %1334 = vperm.xlu0 %1333, %v1331
        %v1335 = vpop.permute.xlu0 %1334
        %v1337 = vmul.f32 %v1335, %v352
        %1338 = vset.pattern.permute.xlu0 1
        %1339 = vperm.xlu0 %1338, %v1331
        %v1340 = vpop.permute.xlu0 %1339
        %v1342 = vmul.f32 %v1340, %v361
        %v1343 = vadd.f32 %v1337, %v1342
        %1344 = vset.pattern.permute.xlu0 2
        %1345 = vperm.xlu0 %1344, %v1331
        %v1346 = vpop.permute.xlu0 %1345
        %v1348 = vmul.f32 %v1346, %v371
        %v1349 = vadd.f32 %v1343, %v1348
        %1350 = vset.pattern.permute.xlu0 3
        %1351 = vperm.xlu0 %1350, %v1331
        %v1352 = vpop.permute.xlu0 %1351
        %v1354 = vmul.f32 %v1352, %v381
        %v1355 = vadd.f32 %v1349, %v1354
        %1356 = vset.pattern.permute.xlu0 4
        %1357 = vperm.xlu0 %1356, %v1331
        %v1358 = vpop.permute.xlu0 %1357
        %v1360 = vmul.f32 %v1358, %v391
        %v1361 = vadd.f32 %v1355, %v1360
        %1362 = vset.pattern.permute.xlu0 5
        %1363 = vperm.xlu0 %1362, %v1331
        %v1364 = vpop.permute.xlu0 %1363
        %v1366 = vmul.f32 %v1364, %v401
        %v1367 = vadd.f32 %v1361, %v1366
        %1368 = vset.pattern.permute.xlu0 6
        %1369 = vperm.xlu0 %1368, %v1331
        %v1370 = vpop.permute.xlu0 %1369
        %v1372 = vmul.f32 %v1370, %v411
        %v1373 = vadd.f32 %v1367, %v1372
        %1374 = vset.pattern.permute.xlu0 7
        %1375 = vperm.xlu0 %1374, %v1331
        %v1376 = vpop.permute.xlu0 %1375
        %v1378 = vmul.f32 %v1376, %v421
        %v1379 = vadd.f32 %v1373, %v1378
        %v1380 = vld [vmem:[%s277 + $0x7] sm:$0x1]
        %v1381 = vld [vmem:[%s277 + $0x17] sm:$0x1]
        %v1382 = vld [vmem:[%s277 + $0x27] sm:$0x1]
        %v1383 = vld [vmem:[%s277 + $0x37] sm:$0x1]
        %v1385 = vrot.slane %v1379, 1
        %v1386 = vrot.slane %v1379, 2
        %v1387 = vrot.slane %v1379, 3
        %v1392 = vmul.f32 %v1380, %v1379
        %v1393 = vmul.f32 %v1381, %v1385
        %v1394 = vmul.f32 %v1382, %v1386
        %v1395 = vmul.f32 %v1383, %v1387
        %v1396 = vlaneseq
        %v1397 = vshrl.u32 %v1396, 7
        %v1398 = vsub.s32 0, %v1397
        %v1399 = vrot.slane %v1392, %v1398
        %v1400 = vmul.f32 %v443, %v1399
        %v1401 = vadd.f32 %v326, %v1400
        %v1402 = vlaneseq
        %v1403 = vshrl.u32 %v1402, 7
        %v1404 = vsub.s32 0, %v1403
        %v1405 = vrot.slane %v1393, %v1404
        %v1406 = vmul.f32 %v453, %v1405
        %v1407 = vadd.f32 %v1401, %v1406
        %v1408 = vlaneseq
        %v1409 = vshrl.u32 %v1408, 7
        %v1410 = vsub.s32 0, %v1409
        %v1411 = vrot.slane %v1394, %v1410
        %v1412 = vmul.f32 %v463, %v1411
        %v1413 = vadd.f32 %v1407, %v1412
        %v1414 = vlaneseq
        %v1415 = vshrl.u32 %v1414, 7
        %v1416 = vsub.s32 0, %v1415
        %v1417 = vrot.slane %v1395, %v1416
        %v1418 = vmul.f32 %v473, %v1417
        %v1419 = vadd.f32 %v1413, %v1418
        %v1422 = vunpack.c.l.s4 1966171168
        %v1423 = vunpack.c.0.s8 %v1422
        %v1424 = vlaneseq
        %v1425 = vshrl.u32 %v1424, 7
        %v1426 = vsub.s32 %v1423, %v1425
        %v1427 = vrot.slane %v1419, %v1426
        %v1428 = vcombine.high %v1427, %v1427
        %v1430 = vunpack.c.l.s4 1966171168
        %v1431 = vunpack.c.0.s8 %v1430
        %v1432 = vlaneseq
        %v1433 = vshrl.u32 %v1432, 7
        %v1434 = vsub.s32 %v1431, %v1433
        %v1435 = vrot.slane %v1427, %v1434
        %v1437 = vunpack.c.l.s4 1966171168
        %v1438 = vunpack.c.0.s8 %v1437
        %v1439 = vlaneseq
        %v1440 = vshrl.u32 %v1439, 7
        %v1441 = vsub.s32 %v1438, %v1440
        %v1442 = vrot.slane %v1428, %v1441
        %v1443 = vcombine.high %v1435, %v1435
        %1447 = vst.msk [vmem:[%s317 + $0x7] sm:$0x1] %vm508, %v1435
        %1448 = vst.msk [vmem:[%s317 + $0x17] sm:$0x1] %vm508, %v1442
        %1449 = vst.msk [vmem:[%s317 + $0x27] sm:$0x1] %vm508, %v1443
        %s1450 = sadd.s32 %s328, 8
        %s1451 = sld [smem:[#allocation3 + %s1450]]
        %s1452 = sld [smem:[#allocation4 + %s1450]]
        %s1453 = sld [smem:[#allocation5 + %s1450]]
        %s1454 = scvt.s32.f32 %s1453
        %s1455 = smul.f32 %s1454, 5.9604645e-08
        %s1456 = smul.u32 %s1451, 4
        %s1457 = scalar_lea.vmem %s286, %s1456 [#allocation9]
        %v1458 = vld [vmem:[%s1457] sm:$0xf]
        %s1459 = smul.u32 %s1452, 4
        %s1460 = scalar_lea.vmem %s286, %s1459 [#allocation9]
        %v1461 = vld [vmem:[%s1460] sm:$0xf]
        %v1462 = vsub.f32 %v1461, %v1458
        %v1463 = vstv %s1455
        %v1464 = vmul.f32 %v1463, %v1462
        %v1465 = vadd.f32 %v1458, %v1464
        %1467 = vset.pattern.permute.xlu0 0
        %1468 = vperm.xlu0 %1467, %v1465
        %v1469 = vpop.permute.xlu0 %1468
        %v1471 = vmul.f32 %v1469, %v352
        %1472 = vset.pattern.permute.xlu0 1
        %1473 = vperm.xlu0 %1472, %v1465
        %v1474 = vpop.permute.xlu0 %1473
        %v1476 = vmul.f32 %v1474, %v361
        %v1477 = vadd.f32 %v1471, %v1476
        %1478 = vset.pattern.permute.xlu0 2
        %1479 = vperm.xlu0 %1478, %v1465
        %v1480 = vpop.permute.xlu0 %1479
        %v1482 = vmul.f32 %v1480, %v371
        %v1483 = vadd.f32 %v1477, %v1482
        %1484 = vset.pattern.permute.xlu0 3
        %1485 = vperm.xlu0 %1484, %v1465
        %v1486 = vpop.permute.xlu0 %1485
        %v1488 = vmul.f32 %v1486, %v381
        %v1489 = vadd.f32 %v1483, %v1488
        %1490 = vset.pattern.permute.xlu0 4
        %1491 = vperm.xlu0 %1490, %v1465
        %v1492 = vpop.permute.xlu0 %1491
        %v1494 = vmul.f32 %v1492, %v391
        %v1495 = vadd.f32 %v1489, %v1494
        %1496 = vset.pattern.permute.xlu0 5
        %1497 = vperm.xlu0 %1496, %v1465
        %v1498 = vpop.permute.xlu0 %1497
        %v1500 = vmul.f32 %v1498, %v401
        %v1501 = vadd.f32 %v1495, %v1500
        %1502 = vset.pattern.permute.xlu0 6
        %1503 = vperm.xlu0 %1502, %v1465
        %v1504 = vpop.permute.xlu0 %1503
        %v1506 = vmul.f32 %v1504, %v411
        %v1507 = vadd.f32 %v1501, %v1506
        %1508 = vset.pattern.permute.xlu0 7
        %1509 = vperm.xlu0 %1508, %v1465
        %v1510 = vpop.permute.xlu0 %1509
        %v1512 = vmul.f32 %v1510, %v421
        %v1513 = vadd.f32 %v1507, %v1512
        %v1514 = vld [vmem:[%s277 + $0x8] sm:$0x1]
        %v1515 = vld [vmem:[%s277 + $0x18] sm:$0x1]
        %v1516 = vld [vmem:[%s277 + $0x28] sm:$0x1]
        %v1517 = vld [vmem:[%s277 + $0x38] sm:$0x1]
        %v1519 = vrot.slane %v1513, 1
        %v1520 = vrot.slane %v1513, 2
        %v1521 = vrot.slane %v1513, 3
        %v1526 = vmul.f32 %v1514, %v1513
        %v1527 = vmul.f32 %v1515, %v1519
        %v1528 = vmul.f32 %v1516, %v1520
        %v1529 = vmul.f32 %v1517, %v1521
        %v1530 = vlaneseq
        %v1531 = vshrl.u32 %v1530, 7
        %v1532 = vsub.s32 0, %v1531
        %v1533 = vrot.slane %v1526, %v1532
        %v1534 = vmul.f32 %v443, %v1533
        %v1535 = vadd.f32 %v326, %v1534
        %v1536 = vlaneseq
        %v1537 = vshrl.u32 %v1536, 7
        %v1538 = vsub.s32 0, %v1537
        %v1539 = vrot.slane %v1527, %v1538
        %v1540 = vmul.f32 %v453, %v1539
        %v1541 = vadd.f32 %v1535, %v1540
        %v1542 = vlaneseq
        %v1543 = vshrl.u32 %v1542, 7
        %v1544 = vsub.s32 0, %v1543
        %v1545 = vrot.slane %v1528, %v1544
        %v1546 = vmul.f32 %v463, %v1545
        %v1547 = vadd.f32 %v1541, %v1546
        %v1548 = vlaneseq
        %v1549 = vshrl.u32 %v1548, 7
        %v1550 = vsub.s32 0, %v1549
        %v1551 = vrot.slane %v1529, %v1550
        %v1552 = vmul.f32 %v473, %v1551
        %v1553 = vadd.f32 %v1547, %v1552
        %v1556 = vunpack.c.l.s4 1966171168
        %v1557 = vunpack.c.0.s8 %v1556
        %v1558 = vlaneseq
        %v1559 = vshrl.u32 %v1558, 7
        %v1560 = vsub.s32 %v1557, %v1559
        %v1561 = vrot.slane %v1553, %v1560
        %v1562 = vcombine.high %v1561, %v1561
        %v1564 = vunpack.c.l.s4 1966171168
        %v1565 = vunpack.c.0.s8 %v1564
        %v1566 = vlaneseq
        %v1567 = vshrl.u32 %v1566, 7
        %v1568 = vsub.s32 %v1565, %v1567
        %v1569 = vrot.slane %v1561, %v1568
        %v1571 = vunpack.c.l.s4 1966171168
        %v1572 = vunpack.c.0.s8 %v1571
        %v1573 = vlaneseq
        %v1574 = vshrl.u32 %v1573, 7
        %v1575 = vsub.s32 %v1572, %v1574
        %v1576 = vrot.slane %v1562, %v1575
        %v1577 = vcombine.high %v1569, %v1569
        %1581 = vst.msk [vmem:[%s317 + $0x8] sm:$0x1] %vm508, %v1569
        %1582 = vst.msk [vmem:[%s317 + $0x18] sm:$0x1] %vm508, %v1576
        %1583 = vst.msk [vmem:[%s317 + $0x28] sm:$0x1] %vm508, %v1577
        %s1584 = sadd.s32 %s328, 9
        %s1585 = sld [smem:[#allocation3 + %s1584]]
        %s1586 = sld [smem:[#allocation4 + %s1584]]
        %s1587 = sld [smem:[#allocation5 + %s1584]]
        %s1588 = scvt.s32.f32 %s1587
        %s1589 = smul.f32 %s1588, 5.9604645e-08
        %s1590 = smul.u32 %s1585, 4
        %s1591 = scalar_lea.vmem %s286, %s1590 [#allocation9]
        %v1592 = vld [vmem:[%s1591] sm:$0xf]
        %s1593 = smul.u32 %s1586, 4
        %s1594 = scalar_lea.vmem %s286, %s1593 [#allocation9]
        %v1595 = vld [vmem:[%s1594] sm:$0xf]
        %v1596 = vsub.f32 %v1595, %v1592
        %v1597 = vstv %s1589
        %v1598 = vmul.f32 %v1597, %v1596
        %v1599 = vadd.f32 %v1592, %v1598
        %1601 = vset.pattern.permute.xlu0 0
        %1602 = vperm.xlu0 %1601, %v1599
        %v1603 = vpop.permute.xlu0 %1602
        %v1605 = vmul.f32 %v1603, %v352
        %1606 = vset.pattern.permute.xlu0 1
        %1607 = vperm.xlu0 %1606, %v1599
        %v1608 = vpop.permute.xlu0 %1607
        %v1610 = vmul.f32 %v1608, %v361
        %v1611 = vadd.f32 %v1605, %v1610
        %1612 = vset.pattern.permute.xlu0 2
        %1613 = vperm.xlu0 %1612, %v1599
        %v1614 = vpop.permute.xlu0 %1613
        %v1616 = vmul.f32 %v1614, %v371
        %v1617 = vadd.f32 %v1611, %v1616
        %1618 = vset.pattern.permute.xlu0 3
        %1619 = vperm.xlu0 %1618, %v1599
        %v1620 = vpop.permute.xlu0 %1619
        %v1622 = vmul.f32 %v1620, %v381
        %v1623 = vadd.f32 %v1617, %v1622
        %1624 = vset.pattern.permute.xlu0 4
        %1625 = vperm.xlu0 %1624, %v1599
        %v1626 = vpop.permute.xlu0 %1625
        %v1628 = vmul.f32 %v1626, %v391
        %v1629 = vadd.f32 %v1623, %v1628
        %1630 = vset.pattern.permute.xlu0 5
        %1631 = vperm.xlu0 %1630, %v1599
        %v1632 = vpop.permute.xlu0 %1631
        %v1634 = vmul.f32 %v1632, %v401
        %v1635 = vadd.f32 %v1629, %v1634
        %1636 = vset.pattern.permute.xlu0 6
        %1637 = vperm.xlu0 %1636, %v1599
        %v1638 = vpop.permute.xlu0 %1637
        %v1640 = vmul.f32 %v1638, %v411
        %v1641 = vadd.f32 %v1635, %v1640
        %1642 = vset.pattern.permute.xlu0 7
        %1643 = vperm.xlu0 %1642, %v1599
        %v1644 = vpop.permute.xlu0 %1643
        %v1646 = vmul.f32 %v1644, %v421
        %v1647 = vadd.f32 %v1641, %v1646
        %v1648 = vld [vmem:[%s277 + $0x9] sm:$0x1]
        %v1649 = vld [vmem:[%s277 + $0x19] sm:$0x1]
        %v1650 = vld [vmem:[%s277 + $0x29] sm:$0x1]
        %v1651 = vld [vmem:[%s277 + $0x39] sm:$0x1]
        %v1653 = vrot.slane %v1647, 1
        %v1654 = vrot.slane %v1647, 2
        %v1655 = vrot.slane %v1647, 3
        %v1660 = vmul.f32 %v1648, %v1647
        %v1661 = vmul.f32 %v1649, %v1653
        %v1662 = vmul.f32 %v1650, %v1654
        %v1663 = vmul.f32 %v1651, %v1655
        %v1664 = vlaneseq
        %v1665 = vshrl.u32 %v1664, 7
        %v1666 = vsub.s32 0, %v1665
        %v1667 = vrot.slane %v1660, %v1666
        %v1668 = vmul.f32 %v443, %v1667
        %v1669 = vadd.f32 %v326, %v1668
        %v1670 = vlaneseq
        %v1671 = vshrl.u32 %v1670, 7
        %v1672 = vsub.s32 0, %v1671
        %v1673 = vrot.slane %v1661, %v1672
        %v1674 = vmul.f32 %v453, %v1673
        %v1675 = vadd.f32 %v1669, %v1674
        %v1676 = vlaneseq
        %v1677 = vshrl.u32 %v1676, 7
        %v1678 = vsub.s32 0, %v1677
        %v1679 = vrot.slane %v1662, %v1678
        %v1680 = vmul.f32 %v463, %v1679
        %v1681 = vadd.f32 %v1675, %v1680
        %v1682 = vlaneseq
        %v1683 = vshrl.u32 %v1682, 7
        %v1684 = vsub.s32 0, %v1683
        %v1685 = vrot.slane %v1663, %v1684
        %v1686 = vmul.f32 %v473, %v1685
        %v1687 = vadd.f32 %v1681, %v1686
        %v1690 = vunpack.c.l.s4 1966171168
        %v1691 = vunpack.c.0.s8 %v1690
        %v1692 = vlaneseq
        %v1693 = vshrl.u32 %v1692, 7
        %v1694 = vsub.s32 %v1691, %v1693
        %v1695 = vrot.slane %v1687, %v1694
        %v1696 = vcombine.high %v1695, %v1695
        %v1698 = vunpack.c.l.s4 1966171168
        %v1699 = vunpack.c.0.s8 %v1698
        %v1700 = vlaneseq
        %v1701 = vshrl.u32 %v1700, 7
        %v1702 = vsub.s32 %v1699, %v1701
        %v1703 = vrot.slane %v1695, %v1702
        %v1705 = vunpack.c.l.s4 1966171168
        %v1706 = vunpack.c.0.s8 %v1705
        %v1707 = vlaneseq
        %v1708 = vshrl.u32 %v1707, 7
        %v1709 = vsub.s32 %v1706, %v1708
        %v1710 = vrot.slane %v1696, %v1709
        %v1711 = vcombine.high %v1703, %v1703
        %1715 = vst.msk [vmem:[%s317 + $0x9] sm:$0x1] %vm508, %v1703
        %1716 = vst.msk [vmem:[%s317 + $0x19] sm:$0x1] %vm508, %v1710
        %1717 = vst.msk [vmem:[%s317 + $0x29] sm:$0x1] %vm508, %v1711
        %s1718 = sadd.s32 %s328, 10
        %s1719 = sld [smem:[#allocation3 + %s1718]]
        %s1720 = sld [smem:[#allocation4 + %s1718]]
        %s1721 = sld [smem:[#allocation5 + %s1718]]
        %s1722 = scvt.s32.f32 %s1721
        %s1723 = smul.f32 %s1722, 5.9604645e-08
        %s1724 = smul.u32 %s1719, 4
        %s1725 = scalar_lea.vmem %s286, %s1724 [#allocation9]
        %v1726 = vld [vmem:[%s1725] sm:$0xf]
        %s1727 = smul.u32 %s1720, 4
        %s1728 = scalar_lea.vmem %s286, %s1727 [#allocation9]
        %v1729 = vld [vmem:[%s1728] sm:$0xf]
        %v1730 = vsub.f32 %v1729, %v1726
        %v1731 = vstv %s1723
        %v1732 = vmul.f32 %v1731, %v1730
        %v1733 = vadd.f32 %v1726, %v1732
        %1735 = vset.pattern.permute.xlu0 0
        %1736 = vperm.xlu0 %1735, %v1733
        %v1737 = vpop.permute.xlu0 %1736
        %v1739 = vmul.f32 %v1737, %v352
        %1740 = vset.pattern.permute.xlu0 1
        %1741 = vperm.xlu0 %1740, %v1733
        %v1742 = vpop.permute.xlu0 %1741
        %v1744 = vmul.f32 %v1742, %v361
        %v1745 = vadd.f32 %v1739, %v1744
        %1746 = vset.pattern.permute.xlu0 2
        %1747 = vperm.xlu0 %1746, %v1733
        %v1748 = vpop.permute.xlu0 %1747
        %v1750 = vmul.f32 %v1748, %v371
        %v1751 = vadd.f32 %v1745, %v1750
        %1752 = vset.pattern.permute.xlu0 3
        %1753 = vperm.xlu0 %1752, %v1733
        %v1754 = vpop.permute.xlu0 %1753
        %v1756 = vmul.f32 %v1754, %v381
        %v1757 = vadd.f32 %v1751, %v1756
        %1758 = vset.pattern.permute.xlu0 4
        %1759 = vperm.xlu0 %1758, %v1733
        %v1760 = vpop.permute.xlu0 %1759
        %v1762 = vmul.f32 %v1760, %v391
        %v1763 = vadd.f32 %v1757, %v1762
        %1764 = vset.pattern.permute.xlu0 5
        %1765 = vperm.xlu0 %1764, %v1733
        %v1766 = vpop.permute.xlu0 %1765
        %v1768 = vmul.f32 %v1766, %v401
        %v1769 = vadd.f32 %v1763, %v1768
        %1770 = vset.pattern.permute.xlu0 6
        %1771 = vperm.xlu0 %1770, %v1733
        %v1772 = vpop.permute.xlu0 %1771
        %v1774 = vmul.f32 %v1772, %v411
        %v1775 = vadd.f32 %v1769, %v1774
        %1776 = vset.pattern.permute.xlu0 7
        %1777 = vperm.xlu0 %1776, %v1733
        %v1778 = vpop.permute.xlu0 %1777
        %v1780 = vmul.f32 %v1778, %v421
        %v1781 = vadd.f32 %v1775, %v1780
        %v1782 = vld [vmem:[%s277 + $0xa] sm:$0x1]
        %v1783 = vld [vmem:[%s277 + $0x1a] sm:$0x1]
        %v1784 = vld [vmem:[%s277 + $0x2a] sm:$0x1]
        %v1785 = vld [vmem:[%s277 + $0x3a] sm:$0x1]
        %v1787 = vrot.slane %v1781, 1
        %v1788 = vrot.slane %v1781, 2
        %v1789 = vrot.slane %v1781, 3
        %v1794 = vmul.f32 %v1782, %v1781
        %v1795 = vmul.f32 %v1783, %v1787
        %v1796 = vmul.f32 %v1784, %v1788
        %v1797 = vmul.f32 %v1785, %v1789
        %v1798 = vlaneseq
        %v1799 = vshrl.u32 %v1798, 7
        %v1800 = vsub.s32 0, %v1799
        %v1801 = vrot.slane %v1794, %v1800
        %v1802 = vmul.f32 %v443, %v1801
        %v1803 = vadd.f32 %v326, %v1802
        %v1804 = vlaneseq
        %v1805 = vshrl.u32 %v1804, 7
        %v1806 = vsub.s32 0, %v1805
        %v1807 = vrot.slane %v1795, %v1806
        %v1808 = vmul.f32 %v453, %v1807
        %v1809 = vadd.f32 %v1803, %v1808
        %v1810 = vlaneseq
        %v1811 = vshrl.u32 %v1810, 7
        %v1812 = vsub.s32 0, %v1811
        %v1813 = vrot.slane %v1796, %v1812
        %v1814 = vmul.f32 %v463, %v1813
        %v1815 = vadd.f32 %v1809, %v1814
        %v1816 = vlaneseq
        %v1817 = vshrl.u32 %v1816, 7
        %v1818 = vsub.s32 0, %v1817
        %v1819 = vrot.slane %v1797, %v1818
        %v1820 = vmul.f32 %v473, %v1819
        %v1821 = vadd.f32 %v1815, %v1820
        %v1824 = vunpack.c.l.s4 1966171168
        %v1825 = vunpack.c.0.s8 %v1824
        %v1826 = vlaneseq
        %v1827 = vshrl.u32 %v1826, 7
        %v1828 = vsub.s32 %v1825, %v1827
        %v1829 = vrot.slane %v1821, %v1828
        %v1830 = vcombine.high %v1829, %v1829
        %v1832 = vunpack.c.l.s4 1966171168
        %v1833 = vunpack.c.0.s8 %v1832
        %v1834 = vlaneseq
        %v1835 = vshrl.u32 %v1834, 7
        %v1836 = vsub.s32 %v1833, %v1835
        %v1837 = vrot.slane %v1829, %v1836
        %v1839 = vunpack.c.l.s4 1966171168
        %v1840 = vunpack.c.0.s8 %v1839
        %v1841 = vlaneseq
        %v1842 = vshrl.u32 %v1841, 7
        %v1843 = vsub.s32 %v1840, %v1842
        %v1844 = vrot.slane %v1830, %v1843
        %v1845 = vcombine.high %v1837, %v1837
        %1849 = vst.msk [vmem:[%s317 + $0xa] sm:$0x1] %vm508, %v1837
        %1850 = vst.msk [vmem:[%s317 + $0x1a] sm:$0x1] %vm508, %v1844
        %1851 = vst.msk [vmem:[%s317 + $0x2a] sm:$0x1] %vm508, %v1845
        %s1852 = sadd.s32 %s328, 11
        %s1853 = sld [smem:[#allocation3 + %s1852]]
        %s1854 = sld [smem:[#allocation4 + %s1852]]
        %s1855 = sld [smem:[#allocation5 + %s1852]]
        %s1856 = scvt.s32.f32 %s1855
        %s1857 = smul.f32 %s1856, 5.9604645e-08
        %s1858 = smul.u32 %s1853, 4
        %s1859 = scalar_lea.vmem %s286, %s1858 [#allocation9]
        %v1860 = vld [vmem:[%s1859] sm:$0xf]
        %s1861 = smul.u32 %s1854, 4
        %s1862 = scalar_lea.vmem %s286, %s1861 [#allocation9]
        %v1863 = vld [vmem:[%s1862] sm:$0xf]
        %v1864 = vsub.f32 %v1863, %v1860
        %v1865 = vstv %s1857
        %v1866 = vmul.f32 %v1865, %v1864
        %v1867 = vadd.f32 %v1860, %v1866
        %1869 = vset.pattern.permute.xlu0 0
        %1870 = vperm.xlu0 %1869, %v1867
        %v1871 = vpop.permute.xlu0 %1870
        %v1873 = vmul.f32 %v1871, %v352
        %1874 = vset.pattern.permute.xlu0 1
        %1875 = vperm.xlu0 %1874, %v1867
        %v1876 = vpop.permute.xlu0 %1875
        %v1878 = vmul.f32 %v1876, %v361
        %v1879 = vadd.f32 %v1873, %v1878
        %1880 = vset.pattern.permute.xlu0 2
        %1881 = vperm.xlu0 %1880, %v1867
        %v1882 = vpop.permute.xlu0 %1881
        %v1884 = vmul.f32 %v1882, %v371
        %v1885 = vadd.f32 %v1879, %v1884
        %1886 = vset.pattern.permute.xlu0 3
        %1887 = vperm.xlu0 %1886, %v1867
        %v1888 = vpop.permute.xlu0 %1887
        %v1890 = vmul.f32 %v1888, %v381
        %v1891 = vadd.f32 %v1885, %v1890
        %1892 = vset.pattern.permute.xlu0 4
        %1893 = vperm.xlu0 %1892, %v1867
        %v1894 = vpop.permute.xlu0 %1893
        %v1896 = vmul.f32 %v1894, %v391
        %v1897 = vadd.f32 %v1891, %v1896
        %1898 = vset.pattern.permute.xlu0 5
        %1899 = vperm.xlu0 %1898, %v1867
        %v1900 = vpop.permute.xlu0 %1899
        %v1902 = vmul.f32 %v1900, %v401
        %v1903 = vadd.f32 %v1897, %v1902
        %1904 = vset.pattern.permute.xlu0 6
        %1905 = vperm.xlu0 %1904, %v1867
        %v1906 = vpop.permute.xlu0 %1905
        %v1908 = vmul.f32 %v1906, %v411
        %v1909 = vadd.f32 %v1903, %v1908
        %1910 = vset.pattern.permute.xlu0 7
        %1911 = vperm.xlu0 %1910, %v1867
        %v1912 = vpop.permute.xlu0 %1911
        %v1914 = vmul.f32 %v1912, %v421
        %v1915 = vadd.f32 %v1909, %v1914
        %v1916 = vld [vmem:[%s277 + $0xb] sm:$0x1]
        %v1917 = vld [vmem:[%s277 + $0x1b] sm:$0x1]
        %v1918 = vld [vmem:[%s277 + $0x2b] sm:$0x1]
        %v1919 = vld [vmem:[%s277 + $0x3b] sm:$0x1]
        %v1921 = vrot.slane %v1915, 1
        %v1922 = vrot.slane %v1915, 2
        %v1923 = vrot.slane %v1915, 3
        %v1928 = vmul.f32 %v1916, %v1915
        %v1929 = vmul.f32 %v1917, %v1921
        %v1930 = vmul.f32 %v1918, %v1922
        %v1931 = vmul.f32 %v1919, %v1923
        %v1932 = vlaneseq
        %v1933 = vshrl.u32 %v1932, 7
        %v1934 = vsub.s32 0, %v1933
        %v1935 = vrot.slane %v1928, %v1934
        %v1936 = vmul.f32 %v443, %v1935
        %v1937 = vadd.f32 %v326, %v1936
        %v1938 = vlaneseq
        %v1939 = vshrl.u32 %v1938, 7
        %v1940 = vsub.s32 0, %v1939
        %v1941 = vrot.slane %v1929, %v1940
        %v1942 = vmul.f32 %v453, %v1941
        %v1943 = vadd.f32 %v1937, %v1942
        %v1944 = vlaneseq
        %v1945 = vshrl.u32 %v1944, 7
        %v1946 = vsub.s32 0, %v1945
        %v1947 = vrot.slane %v1930, %v1946
        %v1948 = vmul.f32 %v463, %v1947
        %v1949 = vadd.f32 %v1943, %v1948
        %v1950 = vlaneseq
        %v1951 = vshrl.u32 %v1950, 7
        %v1952 = vsub.s32 0, %v1951
        %v1953 = vrot.slane %v1931, %v1952
        %v1954 = vmul.f32 %v473, %v1953
        %v1955 = vadd.f32 %v1949, %v1954
        %v1958 = vunpack.c.l.s4 1966171168
        %v1959 = vunpack.c.0.s8 %v1958
        %v1960 = vlaneseq
        %v1961 = vshrl.u32 %v1960, 7
        %v1962 = vsub.s32 %v1959, %v1961
        %v1963 = vrot.slane %v1955, %v1962
        %v1964 = vcombine.high %v1963, %v1963
        %v1966 = vunpack.c.l.s4 1966171168
        %v1967 = vunpack.c.0.s8 %v1966
        %v1968 = vlaneseq
        %v1969 = vshrl.u32 %v1968, 7
        %v1970 = vsub.s32 %v1967, %v1969
        %v1971 = vrot.slane %v1963, %v1970
        %v1973 = vunpack.c.l.s4 1966171168
        %v1974 = vunpack.c.0.s8 %v1973
        %v1975 = vlaneseq
        %v1976 = vshrl.u32 %v1975, 7
        %v1977 = vsub.s32 %v1974, %v1976
        %v1978 = vrot.slane %v1964, %v1977
        %v1979 = vcombine.high %v1971, %v1971
        %1983 = vst.msk [vmem:[%s317 + $0xb] sm:$0x1] %vm508, %v1971
        %1984 = vst.msk [vmem:[%s317 + $0x1b] sm:$0x1] %vm508, %v1978
        %1985 = vst.msk [vmem:[%s317 + $0x2b] sm:$0x1] %vm508, %v1979
        %s1986 = sadd.s32 %s328, 12
        %s1987 = sld [smem:[#allocation3 + %s1986]]
        %s1988 = sld [smem:[#allocation4 + %s1986]]
        %s1989 = sld [smem:[#allocation5 + %s1986]]
        %s1990 = scvt.s32.f32 %s1989
        %s1991 = smul.f32 %s1990, 5.9604645e-08
        %s1992 = smul.u32 %s1987, 4
        %s1993 = scalar_lea.vmem %s286, %s1992 [#allocation9]
        %v1994 = vld [vmem:[%s1993] sm:$0xf]
        %s1995 = smul.u32 %s1988, 4
        %s1996 = scalar_lea.vmem %s286, %s1995 [#allocation9]
        %v1997 = vld [vmem:[%s1996] sm:$0xf]
        %v1998 = vsub.f32 %v1997, %v1994
        %v1999 = vstv %s1991
        %v2000 = vmul.f32 %v1999, %v1998
        %v2001 = vadd.f32 %v1994, %v2000
        %2003 = vset.pattern.permute.xlu0 0
        %2004 = vperm.xlu0 %2003, %v2001
        %v2005 = vpop.permute.xlu0 %2004
        %v2007 = vmul.f32 %v2005, %v352
        %2008 = vset.pattern.permute.xlu0 1
        %2009 = vperm.xlu0 %2008, %v2001
        %v2010 = vpop.permute.xlu0 %2009
        %v2012 = vmul.f32 %v2010, %v361
        %v2013 = vadd.f32 %v2007, %v2012
        %2014 = vset.pattern.permute.xlu0 2
        %2015 = vperm.xlu0 %2014, %v2001
        %v2016 = vpop.permute.xlu0 %2015
        %v2018 = vmul.f32 %v2016, %v371
        %v2019 = vadd.f32 %v2013, %v2018
        %2020 = vset.pattern.permute.xlu0 3
        %2021 = vperm.xlu0 %2020, %v2001
        %v2022 = vpop.permute.xlu0 %2021
        %v2024 = vmul.f32 %v2022, %v381
        %v2025 = vadd.f32 %v2019, %v2024
        %2026 = vset.pattern.permute.xlu0 4
        %2027 = vperm.xlu0 %2026, %v2001
        %v2028 = vpop.permute.xlu0 %2027
        %v2030 = vmul.f32 %v2028, %v391
        %v2031 = vadd.f32 %v2025, %v2030
        %2032 = vset.pattern.permute.xlu0 5
        %2033 = vperm.xlu0 %2032, %v2001
        %v2034 = vpop.permute.xlu0 %2033
        %v2036 = vmul.f32 %v2034, %v401
        %v2037 = vadd.f32 %v2031, %v2036
        %2038 = vset.pattern.permute.xlu0 6
        %2039 = vperm.xlu0 %2038, %v2001
        %v2040 = vpop.permute.xlu0 %2039
        %v2042 = vmul.f32 %v2040, %v411
        %v2043 = vadd.f32 %v2037, %v2042
        %2044 = vset.pattern.permute.xlu0 7
        %2045 = vperm.xlu0 %2044, %v2001
        %v2046 = vpop.permute.xlu0 %2045
        %v2048 = vmul.f32 %v2046, %v421
        %v2049 = vadd.f32 %v2043, %v2048
        %v2050 = vld [vmem:[%s277 + $0xc] sm:$0x1]
        %v2051 = vld [vmem:[%s277 + $0x1c] sm:$0x1]
        %v2052 = vld [vmem:[%s277 + $0x2c] sm:$0x1]
        %v2053 = vld [vmem:[%s277 + $0x3c] sm:$0x1]
        %v2055 = vrot.slane %v2049, 1
        %v2056 = vrot.slane %v2049, 2
        %v2057 = vrot.slane %v2049, 3
        %v2062 = vmul.f32 %v2050, %v2049
        %v2063 = vmul.f32 %v2051, %v2055
        %v2064 = vmul.f32 %v2052, %v2056
        %v2065 = vmul.f32 %v2053, %v2057
        %v2066 = vlaneseq
        %v2067 = vshrl.u32 %v2066, 7
        %v2068 = vsub.s32 0, %v2067
        %v2069 = vrot.slane %v2062, %v2068
        %v2070 = vmul.f32 %v443, %v2069
        %v2071 = vadd.f32 %v326, %v2070
        %v2072 = vlaneseq
        %v2073 = vshrl.u32 %v2072, 7
        %v2074 = vsub.s32 0, %v2073
        %v2075 = vrot.slane %v2063, %v2074
        %v2076 = vmul.f32 %v453, %v2075
        %v2077 = vadd.f32 %v2071, %v2076
        %v2078 = vlaneseq
        %v2079 = vshrl.u32 %v2078, 7
        %v2080 = vsub.s32 0, %v2079
        %v2081 = vrot.slane %v2064, %v2080
        %v2082 = vmul.f32 %v463, %v2081
        %v2083 = vadd.f32 %v2077, %v2082
        %v2084 = vlaneseq
        %v2085 = vshrl.u32 %v2084, 7
        %v2086 = vsub.s32 0, %v2085
        %v2087 = vrot.slane %v2065, %v2086
        %v2088 = vmul.f32 %v473, %v2087
        %v2089 = vadd.f32 %v2083, %v2088
        %v2092 = vunpack.c.l.s4 1966171168
        %v2093 = vunpack.c.0.s8 %v2092
        %v2094 = vlaneseq
        %v2095 = vshrl.u32 %v2094, 7
        %v2096 = vsub.s32 %v2093, %v2095
        %v2097 = vrot.slane %v2089, %v2096
        %v2098 = vcombine.high %v2097, %v2097
        %v2100 = vunpack.c.l.s4 1966171168
        %v2101 = vunpack.c.0.s8 %v2100
        %v2102 = vlaneseq
        %v2103 = vshrl.u32 %v2102, 7
        %v2104 = vsub.s32 %v2101, %v2103
        %v2105 = vrot.slane %v2097, %v2104
        %v2107 = vunpack.c.l.s4 1966171168
        %v2108 = vunpack.c.0.s8 %v2107
        %v2109 = vlaneseq
        %v2110 = vshrl.u32 %v2109, 7
        %v2111 = vsub.s32 %v2108, %v2110
        %v2112 = vrot.slane %v2098, %v2111
        %v2113 = vcombine.high %v2105, %v2105
        %2117 = vst.msk [vmem:[%s317 + $0xc] sm:$0x1] %vm508, %v2105
        %2118 = vst.msk [vmem:[%s317 + $0x1c] sm:$0x1] %vm508, %v2112
        %2119 = vst.msk [vmem:[%s317 + $0x2c] sm:$0x1] %vm508, %v2113
        %s2120 = sadd.s32 %s328, 13
        %s2121 = sld [smem:[#allocation3 + %s2120]]
        %s2122 = sld [smem:[#allocation4 + %s2120]]
        %s2123 = sld [smem:[#allocation5 + %s2120]]
        %s2124 = scvt.s32.f32 %s2123
        %s2125 = smul.f32 %s2124, 5.9604645e-08
        %s2126 = smul.u32 %s2121, 4
        %s2127 = scalar_lea.vmem %s286, %s2126 [#allocation9]
        %v2128 = vld [vmem:[%s2127] sm:$0xf]
        %s2129 = smul.u32 %s2122, 4
        %s2130 = scalar_lea.vmem %s286, %s2129 [#allocation9]
        %v2131 = vld [vmem:[%s2130] sm:$0xf]
        %v2132 = vsub.f32 %v2131, %v2128
        %v2133 = vstv %s2125
        %v2134 = vmul.f32 %v2133, %v2132
        %v2135 = vadd.f32 %v2128, %v2134
        %2137 = vset.pattern.permute.xlu0 0
        %2138 = vperm.xlu0 %2137, %v2135
        %v2139 = vpop.permute.xlu0 %2138
        %v2141 = vmul.f32 %v2139, %v352
        %2142 = vset.pattern.permute.xlu0 1
        %2143 = vperm.xlu0 %2142, %v2135
        %v2144 = vpop.permute.xlu0 %2143
        %v2146 = vmul.f32 %v2144, %v361
        %v2147 = vadd.f32 %v2141, %v2146
        %2148 = vset.pattern.permute.xlu0 2
        %2149 = vperm.xlu0 %2148, %v2135
        %v2150 = vpop.permute.xlu0 %2149
        %v2152 = vmul.f32 %v2150, %v371
        %v2153 = vadd.f32 %v2147, %v2152
        %2154 = vset.pattern.permute.xlu0 3
        %2155 = vperm.xlu0 %2154, %v2135
        %v2156 = vpop.permute.xlu0 %2155
        %v2158 = vmul.f32 %v2156, %v381
        %v2159 = vadd.f32 %v2153, %v2158
        %2160 = vset.pattern.permute.xlu0 4
        %2161 = vperm.xlu0 %2160, %v2135
        %v2162 = vpop.permute.xlu0 %2161
        %v2164 = vmul.f32 %v2162, %v391
        %v2165 = vadd.f32 %v2159, %v2164
        %2166 = vset.pattern.permute.xlu0 5
        %2167 = vperm.xlu0 %2166, %v2135
        %v2168 = vpop.permute.xlu0 %2167
        %v2170 = vmul.f32 %v2168, %v401
        %v2171 = vadd.f32 %v2165, %v2170
        %2172 = vset.pattern.permute.xlu0 6
        %2173 = vperm.xlu0 %2172, %v2135
        %v2174 = vpop.permute.xlu0 %2173
        %v2176 = vmul.f32 %v2174, %v411
        %v2177 = vadd.f32 %v2171, %v2176
        %2178 = vset.pattern.permute.xlu0 7
        %2179 = vperm.xlu0 %2178, %v2135
        %v2180 = vpop.permute.xlu0 %2179
        %v2182 = vmul.f32 %v2180, %v421
        %v2183 = vadd.f32 %v2177, %v2182
        %v2184 = vld [vmem:[%s277 + $0xd] sm:$0x1]
        %v2185 = vld [vmem:[%s277 + $0x1d] sm:$0x1]
        %v2186 = vld [vmem:[%s277 + $0x2d] sm:$0x1]
        %v2187 = vld [vmem:[%s277 + $0x3d] sm:$0x1]
        %v2189 = vrot.slane %v2183, 1
        %v2190 = vrot.slane %v2183, 2
        %v2191 = vrot.slane %v2183, 3
        %v2196 = vmul.f32 %v2184, %v2183
        %v2197 = vmul.f32 %v2185, %v2189
        %v2198 = vmul.f32 %v2186, %v2190
        %v2199 = vmul.f32 %v2187, %v2191
        %v2200 = vlaneseq
        %v2201 = vshrl.u32 %v2200, 7
        %v2202 = vsub.s32 0, %v2201
        %v2203 = vrot.slane %v2196, %v2202
        %v2204 = vmul.f32 %v443, %v2203
        %v2205 = vadd.f32 %v326, %v2204
        %v2206 = vlaneseq
        %v2207 = vshrl.u32 %v2206, 7
        %v2208 = vsub.s32 0, %v2207
        %v2209 = vrot.slane %v2197, %v2208
        %v2210 = vmul.f32 %v453, %v2209
        %v2211 = vadd.f32 %v2205, %v2210
        %v2212 = vlaneseq
        %v2213 = vshrl.u32 %v2212, 7
        %v2214 = vsub.s32 0, %v2213
        %v2215 = vrot.slane %v2198, %v2214
        %v2216 = vmul.f32 %v463, %v2215
        %v2217 = vadd.f32 %v2211, %v2216
        %v2218 = vlaneseq
        %v2219 = vshrl.u32 %v2218, 7
        %v2220 = vsub.s32 0, %v2219
        %v2221 = vrot.slane %v2199, %v2220
        %v2222 = vmul.f32 %v473, %v2221
        %v2223 = vadd.f32 %v2217, %v2222
        %v2226 = vunpack.c.l.s4 1966171168
        %v2227 = vunpack.c.0.s8 %v2226
        %v2228 = vlaneseq
        %v2229 = vshrl.u32 %v2228, 7
        %v2230 = vsub.s32 %v2227, %v2229
        %v2231 = vrot.slane %v2223, %v2230
        %v2232 = vcombine.high %v2231, %v2231
        %v2234 = vunpack.c.l.s4 1966171168
        %v2235 = vunpack.c.0.s8 %v2234
        %v2236 = vlaneseq
        %v2237 = vshrl.u32 %v2236, 7
        %v2238 = vsub.s32 %v2235, %v2237
        %v2239 = vrot.slane %v2231, %v2238
        %v2241 = vunpack.c.l.s4 1966171168
        %v2242 = vunpack.c.0.s8 %v2241
        %v2243 = vlaneseq
        %v2244 = vshrl.u32 %v2243, 7
        %v2245 = vsub.s32 %v2242, %v2244
        %v2246 = vrot.slane %v2232, %v2245
        %v2247 = vcombine.high %v2239, %v2239
        %2251 = vst.msk [vmem:[%s317 + $0xd] sm:$0x1] %vm508, %v2239
        %2252 = vst.msk [vmem:[%s317 + $0x1d] sm:$0x1] %vm508, %v2246
        %2253 = vst.msk [vmem:[%s317 + $0x2d] sm:$0x1] %vm508, %v2247
        %s2254 = sadd.s32 %s328, 14
        %s2255 = sld [smem:[#allocation3 + %s2254]]
        %s2256 = sld [smem:[#allocation4 + %s2254]]
        %s2257 = sld [smem:[#allocation5 + %s2254]]
        %s2258 = scvt.s32.f32 %s2257
        %s2259 = smul.f32 %s2258, 5.9604645e-08
        %s2260 = smul.u32 %s2255, 4
        %s2261 = scalar_lea.vmem %s286, %s2260 [#allocation9]
        %v2262 = vld [vmem:[%s2261] sm:$0xf]
        %s2263 = smul.u32 %s2256, 4
        %s2264 = scalar_lea.vmem %s286, %s2263 [#allocation9]
        %v2265 = vld [vmem:[%s2264] sm:$0xf]
        %v2266 = vsub.f32 %v2265, %v2262
        %v2267 = vstv %s2259
        %v2268 = vmul.f32 %v2267, %v2266
        %v2269 = vadd.f32 %v2262, %v2268
        %2271 = vset.pattern.permute.xlu0 0
        %2272 = vperm.xlu0 %2271, %v2269
        %v2273 = vpop.permute.xlu0 %2272
        %v2275 = vmul.f32 %v2273, %v352
        %2276 = vset.pattern.permute.xlu0 1
        %2277 = vperm.xlu0 %2276, %v2269
        %v2278 = vpop.permute.xlu0 %2277
        %v2280 = vmul.f32 %v2278, %v361
        %v2281 = vadd.f32 %v2275, %v2280
        %2282 = vset.pattern.permute.xlu0 2
        %2283 = vperm.xlu0 %2282, %v2269
        %v2284 = vpop.permute.xlu0 %2283
        %v2286 = vmul.f32 %v2284, %v371
        %v2287 = vadd.f32 %v2281, %v2286
        %2288 = vset.pattern.permute.xlu0 3
        %2289 = vperm.xlu0 %2288, %v2269
        %v2290 = vpop.permute.xlu0 %2289
        %v2292 = vmul.f32 %v2290, %v381
        %v2293 = vadd.f32 %v2287, %v2292
        %2294 = vset.pattern.permute.xlu0 4
        %2295 = vperm.xlu0 %2294, %v2269
        %v2296 = vpop.permute.xlu0 %2295
        %v2298 = vmul.f32 %v2296, %v391
        %v2299 = vadd.f32 %v2293, %v2298
        %2300 = vset.pattern.permute.xlu0 5
        %2301 = vperm.xlu0 %2300, %v2269
        %v2302 = vpop.permute.xlu0 %2301
        %v2304 = vmul.f32 %v2302, %v401
        %v2305 = vadd.f32 %v2299, %v2304
        %2306 = vset.pattern.permute.xlu0 6
        %2307 = vperm.xlu0 %2306, %v2269
        %v2308 = vpop.permute.xlu0 %2307
        %v2310 = vmul.f32 %v2308, %v411
        %v2311 = vadd.f32 %v2305, %v2310
        %2312 = vset.pattern.permute.xlu0 7
        %2313 = vperm.xlu0 %2312, %v2269
        %v2314 = vpop.permute.xlu0 %2313
        %v2316 = vmul.f32 %v2314, %v421
        %v2317 = vadd.f32 %v2311, %v2316
        %v2318 = vld [vmem:[%s277 + $0xe] sm:$0x1]
        %v2319 = vld [vmem:[%s277 + $0x1e] sm:$0x1]
        %v2320 = vld [vmem:[%s277 + $0x2e] sm:$0x1]
        %v2321 = vld [vmem:[%s277 + $0x3e] sm:$0x1]
        %v2323 = vrot.slane %v2317, 1
        %v2324 = vrot.slane %v2317, 2
        %v2325 = vrot.slane %v2317, 3
        %v2330 = vmul.f32 %v2318, %v2317
        %v2331 = vmul.f32 %v2319, %v2323
        %v2332 = vmul.f32 %v2320, %v2324
        %v2333 = vmul.f32 %v2321, %v2325
        %v2334 = vlaneseq
        %v2335 = vshrl.u32 %v2334, 7
        %v2336 = vsub.s32 0, %v2335
        %v2337 = vrot.slane %v2330, %v2336
        %v2338 = vmul.f32 %v443, %v2337
        %v2339 = vadd.f32 %v326, %v2338
        %v2340 = vlaneseq
        %v2341 = vshrl.u32 %v2340, 7
        %v2342 = vsub.s32 0, %v2341
        %v2343 = vrot.slane %v2331, %v2342
        %v2344 = vmul.f32 %v453, %v2343
        %v2345 = vadd.f32 %v2339, %v2344
        %v2346 = vlaneseq
        %v2347 = vshrl.u32 %v2346, 7
        %v2348 = vsub.s32 0, %v2347
        %v2349 = vrot.slane %v2332, %v2348
        %v2350 = vmul.f32 %v463, %v2349
        %v2351 = vadd.f32 %v2345, %v2350
        %v2352 = vlaneseq
        %v2353 = vshrl.u32 %v2352, 7
        %v2354 = vsub.s32 0, %v2353
        %v2355 = vrot.slane %v2333, %v2354
        %v2356 = vmul.f32 %v473, %v2355
        %v2357 = vadd.f32 %v2351, %v2356
        %v2360 = vunpack.c.l.s4 1966171168
        %v2361 = vunpack.c.0.s8 %v2360
        %v2362 = vlaneseq
        %v2363 = vshrl.u32 %v2362, 7
        %v2364 = vsub.s32 %v2361, %v2363
        %v2365 = vrot.slane %v2357, %v2364
        %v2366 = vcombine.high %v2365, %v2365
        %v2368 = vunpack.c.l.s4 1966171168
        %v2369 = vunpack.c.0.s8 %v2368
        %v2370 = vlaneseq
        %v2371 = vshrl.u32 %v2370, 7
        %v2372 = vsub.s32 %v2369, %v2371
        %v2373 = vrot.slane %v2365, %v2372
        %v2375 = vunpack.c.l.s4 1966171168
        %v2376 = vunpack.c.0.s8 %v2375
        %v2377 = vlaneseq
        %v2378 = vshrl.u32 %v2377, 7
        %v2379 = vsub.s32 %v2376, %v2378
        %v2380 = vrot.slane %v2366, %v2379
        %v2381 = vcombine.high %v2373, %v2373
        %2385 = vst.msk [vmem:[%s317 + $0xe] sm:$0x1] %vm508, %v2373
        %2386 = vst.msk [vmem:[%s317 + $0x1e] sm:$0x1] %vm508, %v2380
        %2387 = vst.msk [vmem:[%s317 + $0x2e] sm:$0x1] %vm508, %v2381
        %s2388 = sadd.s32 %s328, 15
        %s2389 = sld [smem:[#allocation3 + %s2388]]
        %s2390 = sld [smem:[#allocation4 + %s2388]]
        %s2391 = sld [smem:[#allocation5 + %s2388]]
        %s2392 = scvt.s32.f32 %s2391
        %s2393 = smul.f32 %s2392, 5.9604645e-08
        %s2394 = smul.u32 %s2389, 4
        %s2395 = scalar_lea.vmem %s286, %s2394 [#allocation9]
        %v2396 = vld [vmem:[%s2395] sm:$0xf]
        %s2397 = smul.u32 %s2390, 4
        %s2398 = scalar_lea.vmem %s286, %s2397 [#allocation9]
        %v2399 = vld [vmem:[%s2398] sm:$0xf]
        %v2400 = vsub.f32 %v2399, %v2396
        %v2401 = vstv %s2393
        %v2402 = vmul.f32 %v2401, %v2400
        %v2403 = vadd.f32 %v2396, %v2402
        %2405 = vset.pattern.permute.xlu0 0
        %2406 = vperm.xlu0 %2405, %v2403
        %v2407 = vpop.permute.xlu0 %2406
        %v2409 = vmul.f32 %v2407, %v352
        %2410 = vset.pattern.permute.xlu0 1
        %2411 = vperm.xlu0 %2410, %v2403
        %v2412 = vpop.permute.xlu0 %2411
        %v2414 = vmul.f32 %v2412, %v361
        %v2415 = vadd.f32 %v2409, %v2414
        %2416 = vset.pattern.permute.xlu0 2
        %2417 = vperm.xlu0 %2416, %v2403
        %v2418 = vpop.permute.xlu0 %2417
        %v2420 = vmul.f32 %v2418, %v371
        %v2421 = vadd.f32 %v2415, %v2420
        %2422 = vset.pattern.permute.xlu0 3
        %2423 = vperm.xlu0 %2422, %v2403
        %v2424 = vpop.permute.xlu0 %2423
        %v2426 = vmul.f32 %v2424, %v381
        %v2427 = vadd.f32 %v2421, %v2426
        %2428 = vset.pattern.permute.xlu0 4
        %2429 = vperm.xlu0 %2428, %v2403
        %v2430 = vpop.permute.xlu0 %2429
        %v2432 = vmul.f32 %v2430, %v391
        %v2433 = vadd.f32 %v2427, %v2432
        %2434 = vset.pattern.permute.xlu0 5
        %2435 = vperm.xlu0 %2434, %v2403
        %v2436 = vpop.permute.xlu0 %2435
        %v2438 = vmul.f32 %v2436, %v401
        %v2439 = vadd.f32 %v2433, %v2438
        %2440 = vset.pattern.permute.xlu0 6
        %2441 = vperm.xlu0 %2440, %v2403
        %v2442 = vpop.permute.xlu0 %2441
        %v2444 = vmul.f32 %v2442, %v411
        %v2445 = vadd.f32 %v2439, %v2444
        %2446 = vset.pattern.permute.xlu0 7
        %2447 = vperm.xlu0 %2446, %v2403
        %v2448 = vpop.permute.xlu0 %2447
        %v2450 = vmul.f32 %v2448, %v421
        %v2451 = vadd.f32 %v2445, %v2450
        %v2452 = vld [vmem:[%s277 + $0xf] sm:$0x1]
        %v2453 = vld [vmem:[%s277 + $0x1f] sm:$0x1]
        %v2454 = vld [vmem:[%s277 + $0x2f] sm:$0x1]
        %v2455 = vld [vmem:[%s277 + $0x3f] sm:$0x1]
        %v2457 = vrot.slane %v2451, 1
        %v2458 = vrot.slane %v2451, 2
        %v2459 = vrot.slane %v2451, 3
        %v2464 = vmul.f32 %v2452, %v2451
        %v2465 = vmul.f32 %v2453, %v2457
        %v2466 = vmul.f32 %v2454, %v2458
        %v2467 = vmul.f32 %v2455, %v2459
        %v2468 = vlaneseq
        %v2469 = vshrl.u32 %v2468, 7
        %v2470 = vsub.s32 0, %v2469
        %v2471 = vrot.slane %v2464, %v2470
        %v2472 = vmul.f32 %v443, %v2471
        %v2473 = vadd.f32 %v326, %v2472
        %v2474 = vlaneseq
        %v2475 = vshrl.u32 %v2474, 7
        %v2476 = vsub.s32 0, %v2475
        %v2477 = vrot.slane %v2465, %v2476
        %v2478 = vmul.f32 %v453, %v2477
        %v2479 = vadd.f32 %v2473, %v2478
        %v2480 = vlaneseq
        %v2481 = vshrl.u32 %v2480, 7
        %v2482 = vsub.s32 0, %v2481
        %v2483 = vrot.slane %v2466, %v2482
        %v2484 = vmul.f32 %v463, %v2483
        %v2485 = vadd.f32 %v2479, %v2484
        %v2486 = vlaneseq
        %v2487 = vshrl.u32 %v2486, 7
        %v2488 = vsub.s32 0, %v2487
        %v2489 = vrot.slane %v2467, %v2488
        %v2490 = vmul.f32 %v473, %v2489
        %v2491 = vadd.f32 %v2485, %v2490
        %v2494 = vunpack.c.l.s4 1966171168
        %v2495 = vunpack.c.0.s8 %v2494
        %v2496 = vlaneseq
        %v2497 = vshrl.u32 %v2496, 7
        %v2498 = vsub.s32 %v2495, %v2497
        %v2499 = vrot.slane %v2491, %v2498
        %v2500 = vcombine.high %v2499, %v2499
        %v2502 = vunpack.c.l.s4 1966171168
        %v2503 = vunpack.c.0.s8 %v2502
        %v2504 = vlaneseq
        %v2505 = vshrl.u32 %v2504, 7
        %v2506 = vsub.s32 %v2503, %v2505
        %v2507 = vrot.slane %v2499, %v2506
        %v2509 = vunpack.c.l.s4 1966171168
        %v2510 = vunpack.c.0.s8 %v2509
        %v2511 = vlaneseq
        %v2512 = vshrl.u32 %v2511, 7
        %v2513 = vsub.s32 %v2510, %v2512
        %v2514 = vrot.slane %v2500, %v2513
        %v2515 = vcombine.high %v2507, %v2507
        %2519 = vst.msk [vmem:[%s317 + $0xf] sm:$0x1] %vm508, %v2507
        %2520 = vst.msk [vmem:[%s317 + $0x1f] sm:$0x1] %vm508, %v2514
        %2521 = vst.msk [vmem:[%s317 + $0x2f] sm:$0x1] %vm508, %v2515
        %s2522 = sand.u32 %s181, 1
        %s2523 = scalar_lea.sflag [#allocation8], %s2522
        %s2524 = sand.u32 %s181, 1
        %s2525 = smul.addr %s2524, 48
        %s2526 = scalar_lea.vmem [#allocation11], %s2525
        // Predicated region
        $region49: #{tpu_custom_call.1} parent=39 // pred_check
          %p2527 = pneg %p191
        $region50: #{tpu_custom_call.1} parent=39 // pred_check_branch
          %2529 = sbr.rel (%p2527) target = $region52
        $region51: #{tpu_custom_call.1} parent=39 // pred_region
          %s2530 = smul.u32 2, %s47
          %s2532 = ssub.s32 768, 768
          %2533 = vsyncadd %s2523, %s2532
          %s2534 = smul.addr %s46, 6
          %s2535 = sadd.s32 %s2530, %s2534
          %s2536 = smul.addr %s2535, 128
          %s2537 = scalar_lea.hbm %s8, %s2536
          %s2538 = sshll.u32 %s2526, 4
          %s2539 = int_to_ptr.vmem [resolvable:$true] %s2538
          %2544 = dma.vmem_to_hbm [thread:$0]  %s2539, 768, %s2537, %s2523, 128, 128, 8
        $region52: #{tpu_custom_call.1} parent=39 // pred_fallthru
          _
      $region40: #{tpu_custom_call.1} parent=5 // pred_fallthru
        _
      %p2545 = scmp.le.s32.totalorder 2, %s37
      // Predicated region
      $region53: #{tpu_custom_call.1} parent=5 // pred_check
        %p2546 = pneg %p2545
      $region54: #{tpu_custom_call.1} parent=5 // pred_check_branch
        %2548 = sbr.rel (%p2546) target = $region56
      $region55: #{tpu_custom_call.1} parent=5 // pred_region
        %s2549 = ssub.s32 %s37, 2
        // Predicated region
        $region57: #{tpu_custom_call.1} parent=55 // pred_check
          %p2550 = pneg %p197
        $region58: #{tpu_custom_call.1} parent=55 // pred_check_branch
          %2552 = sbr.rel (%p2550) target = $region60
        $region59: #{tpu_custom_call.1} parent=55 // pred_region
          %s2553 = sand.u32 %s182, 1
          %s2554 = scalar_lea.sflag [#allocation8], %s2553
          %s2555 = sand.u32 %s182, 1
          %s2556 = smul.addr %s2555, 48
          %s2557 = scalar_lea.vmem [#allocation11], %s2556
          %2558 = dma.done %s2554, 768
        $region60: #{tpu_custom_call.1} parent=55 // pred_fallthru
          _
      $region56: #{tpu_custom_call.1} parent=5 // pred_fallthru
        _
    $region6: #{tpu_custom_call.1} parent=1 // loop_footer
      %s41 = sadd.s32 1, %s37
    $region7: #{tpu_custom_call.1} parent=1 // loop_footer_branch
      %36 = sbr.rel target = $region3
    $region8: #{tpu_custom_call.1} parent=1 // loop_exit
      _
    %2559 = vsyncpa [#allocation7], 1
    %s2560 = scalar_lea.sflag [#allocation7], 1
    %2561 = vsyncpa %s2560, 1
    %2562 = vsyncpa [#allocation10], 1
    %s2563 = scalar_lea.sflag [#allocation10], 1
    %2564 = vsyncpa %s2563, 1
    %2565 = vsyncpa [#allocation8], 1
    %s2566 = scalar_lea.sflag [#allocation8], 1
    %2567 = vsyncpa %s2566, 1

</llo_original>
